<compile_context>
chip_gen: v7x
topology: tpu7x:2x2x1
jax: 0.10.0
libtpu: 0.0.40
codegen_flags: <defaults>
</compile_context>

<pallas_src>
import jax
import jax.numpy as jnp
from jax import lax
from jax.experimental import pallas as pl
from jax.experimental.pallas import tpu as pltpu


# ------------------------------ fused kernel -------------------------------

def _lenet_kernel(x_ref, w1_ref, b1_ref, w2_ref, b2_ref,
                  wf1_ref, bf1_ref, wf2_ref, bf2_ref,
                  out_ref,
                  p1row, y1s, p1s, p2row, y2s, p2s, feat):
    # ---- conv1: 5x5, 3->6, valid, + ReLU (row-by-row im2col in VMEM) ----
    @pl.loop(0, 28)
    def _conv1_row(i):
        for kh in range(5):
            for kw in range(5):
                c0 = (kh * 5 + kw) * 3
                p1row[:, c0:c0 + 3] = x_ref[0, i + kh, pl.ds(kw, 28), :]
        acc = jnp.dot(p1row[...], w1_ref[...], preferred_element_type=jnp.float32)
        y1s[i] = jnp.maximum(acc + b1_ref[...], 0.0)

    # ---- maxpool 2x2 stride 2: (28,28,6) -> (14,14,6) ----
    @pl.loop(0, 14)
    def _pool1_row(pi):
        r0 = jnp.maximum(y1s[2 * pi, pl.ds(0, 14, 2), :],
                         y1s[2 * pi, pl.ds(1, 14, 2), :])
        r1 = jnp.maximum(y1s[2 * pi + 1, pl.ds(0, 14, 2), :],
                         y1s[2 * pi + 1, pl.ds(1, 14, 2), :])
        p1s[pi] = jnp.maximum(r0, r1)

    # ---- conv2: 5x5, 6->16, valid, + ReLU ----
    @pl.loop(0, 10)
    def _conv2_row(i):
        for kh in range(5):
            for kw in range(5):
                c0 = (kh * 5 + kw) * 6
                p2row[:, c0:c0 + 6] = p1s[i + kh, pl.ds(kw, 10), :]
        acc = jnp.dot(p2row[...], w2_ref[...], preferred_element_type=jnp.float32)
        y2s[i] = jnp.maximum(acc + b2_ref[...], 0.0)

    # ---- maxpool 2x2 stride 2: (10,10,16) -> (5,5,16) ----
    @pl.loop(0, 5)
    def _pool2_row(pi):
        r0 = jnp.maximum(y2s[2 * pi, pl.ds(0, 5, 2), :],
                         y2s[2 * pi, pl.ds(1, 5, 2), :])
        r1 = jnp.maximum(y2s[2 * pi + 1, pl.ds(0, 5, 2), :],
                         y2s[2 * pi + 1, pl.ds(1, 5, 2), :])
        p2s[pi] = jnp.maximum(r0, r1)

    # ---- flatten in (h, w, c) order -> (1, 400); fc1 weight rows are pre-permuted ----
    for h in range(5):
        for w in range(5):
            c0 = (h * 5 + w) * 16
            feat[0:1, c0:c0 + 16] = p2s[h, w:w + 1, :]

    # ---- fc1 (400 -> 128-padded) + ReLU ; fc2 (128 -> 128-padded) + ReLU ----
    h1 = jnp.maximum(
        jnp.dot(feat[...], wf1_ref[...], preferred_element_type=jnp.float32)
        + bf1_ref[...], 0.0)
    h2 = jnp.maximum(
        jnp.dot(h1, wf2_ref[...], preferred_element_type=jnp.float32)
        + bf2_ref[...], 0.0)
    out_ref[0] = h2


# --------------------------- parameter repacking ----------------------------

def prepare_params(params):
    """One-time repack of PyTorch-layout params into MXU-friendly, lane-padded matrices."""
    w1, b1, w2, b2, fw1, fb1, fw2, fb2 = params
    # conv weights: OIHW -> (kh, kw, ci, co) row order matching the in-kernel im2col.
    w1m = jnp.transpose(w1, (2, 3, 1, 0)).reshape(25 * 3, 6)
    w2m = jnp.transpose(w2, (2, 3, 1, 0)).reshape(25 * 6, 16)
    # fc1: torch flatten order is (c,h,w); kernel flatten order is (h,w,c) -> permute rows.
    wf1 = jnp.transpose(fw1.reshape(120, 16, 5, 5), (2, 3, 1, 0)).reshape(400, 120)
    wf1 = jnp.pad(wf1, ((0, 0), (0, 8)))            # N: 120 -> 128 (lane dense)
    bf1 = jnp.pad(fb1, (0, 8)).reshape(1, 128)
    wf2 = jnp.pad(fw2.T, ((0, 8), (0, 44)))         # (120,84) -> (128,128), zero padded
    bf2 = jnp.pad(fb2, (0, 44)).reshape(1, 128)
    return (w1m, b1.reshape(1, 6), w2m, b2.reshape(1, 16), wf1, bf1, wf2, bf2)


# ------------------------------ jitted forward ------------------------------

@jax.jit
def classifier_forward(x_nchw, prepared):
    w1m, b1r, w2m, b2r, wf1, bf1, wf2, bf2 = prepared
    B = x_nchw.shape[0]
    x = jnp.transpose(x_nchw, (0, 2, 3, 1))          # NCHW -> NHWC (12 KB / image)
    out = pl.pallas_call(
        _lenet_kernel,
        out_shape=jax.ShapeDtypeStruct((B, 1, 128), jnp.float32),
        grid=(B,),
        in_specs=[
            pl.BlockSpec((1, 32, 32, 3), lambda b: (b, 0, 0, 0)),   # per-image tile
            pl.BlockSpec((75, 6),    lambda b: (0, 0)),             # VMEM-resident weights
            pl.BlockSpec((1, 6),     lambda b: (0, 0)),
            pl.BlockSpec((150, 16),  lambda b: (0, 0)),
            pl.BlockSpec((1, 16),    lambda b: (0, 0)),
            pl.BlockSpec((400, 128), lambda b: (0, 0)),
            pl.BlockSpec((1, 128),   lambda b: (0, 0)),
            pl.BlockSpec((128, 128), lambda b: (0, 0)),
            pl.BlockSpec((1, 128),   lambda b: (0, 0)),
        ],
        out_specs=pl.BlockSpec((1, 1, 128), lambda b: (b, 0, 0)),   # lane-dense store
        scratch_shapes=[
            pltpu.VMEM((28, 75), jnp.float32),       # conv1 im2col row
            pltpu.VMEM((28, 28, 6), jnp.float32),    # conv1 output (relu'd)
            pltpu.VMEM((14, 14, 6), jnp.float32),    # pooled conv1
            pltpu.VMEM((10, 150), jnp.float32),      # conv2 im2col row
            pltpu.VMEM((10, 10, 16), jnp.float32),   # conv2 output (relu'd)
            pltpu.VMEM((5, 5, 16), jnp.float32),     # pooled conv2
            pltpu.VMEM((1, 400), jnp.float32),       # flattened features
        ],
        compiler_params=pltpu.CompilerParams(
            dimension_semantics=("parallel",)),
    )(x, w1m, b1r, w2m, b2r, wf1, bf1, wf2, bf2)
    return out.reshape(B, 128)[:, :84]


# --------------------------- pure-JAX reference ----------------------------

def reference_forward(x, params):
    w1, b1, w2, b2, fw1, fb1, fw2, fb2 = params
    dn = ('NCHW', 'OIHW', 'NCHW')
    y = lax.conv_general_dilated(x, w1, (1, 1), 'VALID', dimension_numbers=dn)
    y = jnp.maximum(y + b1[None, :, None, None], 0.0)
    B, C, H, W = y.shape
    y = y.reshape(B, C, H // 2, 2, W // 2, 2).max(axis=(3, 5))
    y = lax.conv_general_dilated(y, w2, (1, 1), 'VALID', dimension_numbers=dn)
    y = jnp.maximum(y + b2[None, :, None, None], 0.0)
    B, C, H, W = y.shape
    y = y.reshape(B, C, H // 2, 2, W // 2, 2).max(axis=(3, 5))
    f = y.reshape(B, -1)
    h = jnp.maximum(f @ fw1.T + fb1, 0.0)
    return jnp.maximum(h @ fw2.T + fb2, 0.0)


# ---------------------------------- main -----------------------------------

if __name__ == "__main__":
    key = jax.random.PRNGKey(0)
    ks = jax.random.split(key, 9)
    B = 4
    x = jax.random.normal(ks[0], (B, 3, 32, 32), jnp.float32)

    # Deterministic synthetic parameters (PyTorch layouts: OIHW convs, (out,in) linears).
    w1 = jax.random.normal(ks[1], (6, 3, 5, 5), jnp.float32) * 0.1
    b1 = jax.random.normal(ks[2], (6,), jnp.float32) * 0.1
    w2 = jax.random.normal(ks[3], (16, 6, 5, 5), jnp.float32) * 0.1
    b2 = jax.random.normal(ks[4], (16,), jnp.float32) * 0.1
    fw1 = jax.random.normal(ks[5], (120, 400), jnp.float32) * 0.05
    fb1 = jax.random.normal(ks[6], (120,), jnp.float32) * 0.05
    fw2 = jax.random.normal(ks[7], (84, 120), jnp.float32) * 0.05
    fb2 = jax.random.normal(ks[8], (84,), jnp.float32) * 0.05
    params = (w1, b1, w2, b2, fw1, fb1, fw2, fb2)

    prepared = prepare_params(params)       # one-time repack, outside the jitted forward

    out = jax.block_until_ready(classifier_forward(x, prepared))
    ref = reference_forward(x, params)

    assert out.shape == (B, 84), out.shape
    err = float(jnp.max(jnp.abs(out - ref)))
    assert jnp.allclose(out, ref, atol=2e-3, rtol=2e-3), err
    print("KERNEL_OK")
</pallas_src>

<mosaic_0001>
module attributes {stable_mosaic.version = 11 : i64} {
  func.func @_lenet_kernel(%arg0: i32, %arg1: memref<1x32x32x3xf32, #tpu.memory_space<vmem>>, %arg2: memref<75x6xf32, #tpu.memory_space<vmem>>, %arg3: memref<1x6xf32, #tpu.memory_space<vmem>>, %arg4: memref<150x16xf32, #tpu.memory_space<vmem>>, %arg5: memref<1x16xf32, #tpu.memory_space<vmem>>, %arg6: memref<400x128xf32, #tpu.memory_space<vmem>>, %arg7: memref<1x128xf32, #tpu.memory_space<vmem>>, %arg8: memref<128x128xf32, #tpu.memory_space<vmem>>, %arg9: memref<1x128xf32, #tpu.memory_space<vmem>>, %arg10: memref<1x1x128xf32, #tpu.memory_space<vmem>>, %arg11: memref<28x75xf32, #tpu.memory_space<vmem>>, %arg12: memref<28x28x6xf32, #tpu.memory_space<vmem>>, %arg13: memref<14x14x6xf32, #tpu.memory_space<vmem>>, %arg14: memref<10x150xf32, #tpu.memory_space<vmem>>, %arg15: memref<10x10x16xf32, #tpu.memory_space<vmem>>, %arg16: memref<5x5x16xf32, #tpu.memory_space<vmem>>, %arg17: memref<1x400xf32, #tpu.memory_space<vmem>>) attributes {dimension_semantics = [#tpu.dimension_semantics<parallel>], iteration_bounds = array<i64: 4>, scalar_prefetch = 0 : i64, scratch_operands = 7 : i64, tpu.core_type = #tpu.core_type<tc>, window_params = [{transform_indices = @transform_0, window_bounds = array<i64: 1, 32, 32, 3>}, {pipeline_mode = #tpu.pipeline_mode<synchronous>, transform_indices = @transform_1, window_bounds = array<i64: 75, 6>}, {pipeline_mode = #tpu.pipeline_mode<synchronous>, transform_indices = @transform_2, window_bounds = array<i64: 1, 6>}, {pipeline_mode = #tpu.pipeline_mode<synchronous>, transform_indices = @transform_3, window_bounds = array<i64: 150, 16>}, {pipeline_mode = #tpu.pipeline_mode<synchronous>, transform_indices = @transform_4, window_bounds = array<i64: 1, 16>}, {pipeline_mode = #tpu.pipeline_mode<synchronous>, transform_indices = @transform_5, window_bounds = array<i64: 400, 128>}, {pipeline_mode = #tpu.pipeline_mode<synchronous>, transform_indices = @transform_6, window_bounds = array<i64: 1, 128>}, {pipeline_mode = #tpu.pipeline_mode<synchronous>, transform_indices = @transform_7, window_bounds = array<i64: 128, 128>}, {pipeline_mode = #tpu.pipeline_mode<synchronous>, transform_indices = @transform_8, window_bounds = array<i64: 1, 128>}, {transform_indices = @transform_9, window_bounds = array<i64: 1, 1, 128>}]} {
    %c0_i32 = arith.constant 0 : i32
    %c28_i32 = arith.constant 28 : i32
    %0 = arith.addi %c0_i32, %c28_i32 : i32
    %c1_i32 = arith.constant 1 : i32
    scf.for %arg18 = %c0_i32 to %0 step %c1_i32  : i32 {
      %c1_i32_122 = arith.constant 1 : i32
      %95 = arith.muli %arg18, %c1_i32_122 : i32
      %c0_i32_123 = arith.constant 0 : i32
      %96 = arith.addi %c0_i32_123, %95 : i32
      %c0_i32_124 = arith.constant 0 : i32
      %97 = arith.addi %96, %c0_i32_124 : i32
      %c0_125 = arith.constant 0 : index
      %98 = arith.index_cast %97 : i32 to index
      %c0_126 = arith.constant 0 : index
      %c0_127 = arith.constant 0 : index
      %99 = vector.load %arg1[%c0_125, %98, %c0_126, %c0_127] : memref<1x32x32x3xf32, #tpu.memory_space<vmem>>, vector<1x1x28x3xf32>
      %100 = vector.shape_cast %99 : vector<1x1x28x3xf32> to vector<28x3xf32>
      %c0_128 = arith.constant 0 : index
      %c0_129 = arith.constant 0 : index
      %101 = vector.load %arg11[%c0_128, %c0_129] : memref<28x75xf32, #tpu.memory_space<vmem>>, vector<28x3xf32>
      tpu.vector_store %arg11[%c0_128, %c0_129], %100 {strides = array<i32>} : memref<28x75xf32, #tpu.memory_space<vmem>>, vector<28x3xf32>,
      %c0_i32_130 = arith.constant 0 : i32
      %102 = arith.addi %96, %c0_i32_130 : i32
      %c0_131 = arith.constant 0 : index
      %103 = arith.index_cast %102 : i32 to index
      %c1_132 = arith.constant 1 : index
      %c0_133 = arith.constant 0 : index
      %104 = vector.load %arg1[%c0_131, %103, %c1_132, %c0_133] : memref<1x32x32x3xf32, #tpu.memory_space<vmem>>, vector<1x1x28x3xf32>
      %105 = vector.shape_cast %104 : vector<1x1x28x3xf32> to vector<28x3xf32>
      %c0_134 = arith.constant 0 : index
      %c3_135 = arith.constant 3 : index
      %106 = vector.load %arg11[%c0_134, %c3_135] : memref<28x75xf32, #tpu.memory_space<vmem>>, vector<28x3xf32>
      tpu.vector_store %arg11[%c0_134, %c3_135], %105 {strides = array<i32>} : memref<28x75xf32, #tpu.memory_space<vmem>>, vector<28x3xf32>,
      %c0_i32_136 = arith.constant 0 : i32
      %107 = arith.addi %96, %c0_i32_136 : i32
      %c0_137 = arith.constant 0 : index
      %108 = arith.index_cast %107 : i32 to index
      %c2_138 = arith.constant 2 : index
      %c0_139 = arith.constant 0 : index
      %109 = vector.load %arg1[%c0_137, %108, %c2_138, %c0_139] : memref<1x32x32x3xf32, #tpu.memory_space<vmem>>, vector<1x1x28x3xf32>
      %110 = vector.shape_cast %109 : vector<1x1x28x3xf32> to vector<28x3xf32>
      %c0_140 = arith.constant 0 : index
      %c6 = arith.constant 6 : index
      %111 = vector.load %arg11[%c0_140, %c6] : memref<28x75xf32, #tpu.memory_space<vmem>>, vector<28x3xf32>
      tpu.vector_store %arg11[%c0_140, %c6], %110 {strides = array<i32>} : memref<28x75xf32, #tpu.memory_space<vmem>>, vector<28x3xf32>,
      %c0_i32_141 = arith.constant 0 : i32
      %112 = arith.addi %96, %c0_i32_141 : i32
      %c0_142 = arith.constant 0 : index
      %113 = arith.index_cast %112 : i32 to index
      %c3_143 = arith.constant 3 : index
      %c0_144 = arith.constant 0 : index
      %114 = vector.load %arg1[%c0_142, %113, %c3_143, %c0_144] : memref<1x32x32x3xf32, #tpu.memory_space<vmem>>, vector<1x1x28x3xf32>
      %115 = vector.shape_cast %114 : vector<1x1x28x3xf32> to vector<28x3xf32>
      %c0_145 = arith.constant 0 : index
      %c9 = arith.constant 9 : index
      %116 = vector.load %arg11[%c0_145, %c9] : memref<28x75xf32, #tpu.memory_space<vmem>>, vector<28x3xf32>
      tpu.vector_store %arg11[%c0_145, %c9], %115 {strides = array<i32>} : memref<28x75xf32, #tpu.memory_space<vmem>>, vector<28x3xf32>,
      %c0_i32_146 = arith.constant 0 : i32
      %117 = arith.addi %96, %c0_i32_146 : i32
      %c0_147 = arith.constant 0 : index
      %118 = arith.index_cast %117 : i32 to index
      %c4_148 = arith.constant 4 : index
      %c0_149 = arith.constant 0 : index
      %119 = vector.load %arg1[%c0_147, %118, %c4_148, %c0_149] : memref<1x32x32x3xf32, #tpu.memory_space<vmem>>, vector<1x1x28x3xf32>
      %120 = vector.shape_cast %119 : vector<1x1x28x3xf32> to vector<28x3xf32>
      %c0_150 = arith.constant 0 : index
      %c12 = arith.constant 12 : index
      %121 = vector.load %arg11[%c0_150, %c12] : memref<28x75xf32, #tpu.memory_space<vmem>>, vector<28x3xf32>
      tpu.vector_store %arg11[%c0_150, %c12], %120 {strides = array<i32>} : memref<28x75xf32, #tpu.memory_space<vmem>>, vector<28x3xf32>,
      %c1_i32_151 = arith.constant 1 : i32
      %122 = arith.addi %96, %c1_i32_151 : i32
      %c0_152 = arith.constant 0 : index
      %123 = arith.index_cast %122 : i32 to index
      %c0_153 = arith.constant 0 : index
      %c0_154 = arith.constant 0 : index
      %124 = vector.load %arg1[%c0_152, %123, %c0_153, %c0_154] : memref<1x32x32x3xf32, #tpu.memory_space<vmem>>, vector<1x1x28x3xf32>
      %125 = vector.shape_cast %124 : vector<1x1x28x3xf32> to vector<28x3xf32>
      %c0_155 = arith.constant 0 : index
      %c15 = arith.constant 15 : index
      %126 = vector.load %arg11[%c0_155, %c15] : memref<28x75xf32, #tpu.memory_space<vmem>>, vector<28x3xf32>
      tpu.vector_store %arg11[%c0_155, %c15], %125 {strides = array<i32>} : memref<28x75xf32, #tpu.memory_space<vmem>>, vector<28x3xf32>,
      %c1_i32_156 = arith.constant 1 : i32
      %127 = arith.addi %96, %c1_i32_156 : i32
      %c0_157 = arith.constant 0 : index
      %128 = arith.index_cast %127 : i32 to index
      %c1_158 = arith.constant 1 : index
      %c0_159 = arith.constant 0 : index
      %129 = vector.load %arg1[%c0_157, %128, %c1_158, %c0_159] : memref<1x32x32x3xf32, #tpu.memory_space<vmem>>, vector<1x1x28x3xf32>
      %130 = vector.shape_cast %129 : vector<1x1x28x3xf32> to vector<28x3xf32>
      %c0_160 = arith.constant 0 : index
      %c18 = arith.constant 18 : index
      %131 = vector.load %arg11[%c0_160, %c18] : memref<28x75xf32, #tpu.memory_space<vmem>>, vector<28x3xf32>
      tpu.vector_store %arg11[%c0_160, %c18], %130 {strides = array<i32>} : memref<28x75xf32, #tpu.memory_space<vmem>>, vector<28x3xf32>,
      %c1_i32_161 = arith.constant 1 : i32
      %132 = arith.addi %96, %c1_i32_161 : i32
      %c0_162 = arith.constant 0 : index
      %133 = arith.index_cast %132 : i32 to index
      %c2_163 = arith.constant 2 : index
      %c0_164 = arith.constant 0 : index
      %134 = vector.load %arg1[%c0_162, %133, %c2_163, %c0_164] : memref<1x32x32x3xf32, #tpu.memory_space<vmem>>, vector<1x1x28x3xf32>
      %135 = vector.shape_cast %134 : vector<1x1x28x3xf32> to vector<28x3xf32>
      %c0_165 = arith.constant 0 : index
      %c21 = arith.constant 21 : index
      %136 = vector.load %arg11[%c0_165, %c21] : memref<28x75xf32, #tpu.memory_space<vmem>>, vector<28x3xf32>
      tpu.vector_store %arg11[%c0_165, %c21], %135 {strides = array<i32>} : memref<28x75xf32, #tpu.memory_space<vmem>>, vector<28x3xf32>,
      %c1_i32_166 = arith.constant 1 : i32
      %137 = arith.addi %96, %c1_i32_166 : i32
      %c0_167 = arith.constant 0 : index
      %138 = arith.index_cast %137 : i32 to index
      %c3_168 = arith.constant 3 : index
      %c0_169 = arith.constant 0 : index
      %139 = vector.load %arg1[%c0_167, %138, %c3_168, %c0_169] : memref<1x32x32x3xf32, #tpu.memory_space<vmem>>, vector<1x1x28x3xf32>
      %140 = vector.shape_cast %139 : vector<1x1x28x3xf32> to vector<28x3xf32>
      %c0_170 = arith.constant 0 : index
      %c24 = arith.constant 24 : index
      %141 = vector.load %arg11[%c0_170, %c24] : memref<28x75xf32, #tpu.memory_space<vmem>>, vector<28x3xf32>
      tpu.vector_store %arg11[%c0_170, %c24], %140 {strides = array<i32>} : memref<28x75xf32, #tpu.memory_space<vmem>>, vector<28x3xf32>,
      %c1_i32_171 = arith.constant 1 : i32
      %142 = arith.addi %96, %c1_i32_171 : i32
      %c0_172 = arith.constant 0 : index
      %143 = arith.index_cast %142 : i32 to index
      %c4_173 = arith.constant 4 : index
      %c0_174 = arith.constant 0 : index
      %144 = vector.load %arg1[%c0_172, %143, %c4_173, %c0_174] : memref<1x32x32x3xf32, #tpu.memory_space<vmem>>, vector<1x1x28x3xf32>
      %145 = vector.shape_cast %144 : vector<1x1x28x3xf32> to vector<28x3xf32>
      %c0_175 = arith.constant 0 : index
      %c27 = arith.constant 27 : index
      %146 = vector.load %arg11[%c0_175, %c27] : memref<28x75xf32, #tpu.memory_space<vmem>>, vector<28x3xf32>
      tpu.vector_store %arg11[%c0_175, %c27], %145 {strides = array<i32>} : memref<28x75xf32, #tpu.memory_space<vmem>>, vector<28x3xf32>,
      %c2_i32 = arith.constant 2 : i32
      %147 = arith.addi %96, %c2_i32 : i32
      %c0_176 = arith.constant 0 : index
      %148 = arith.index_cast %147 : i32 to index
      %c0_177 = arith.constant 0 : index
      %c0_178 = arith.constant 0 : index
      %149 = vector.load %arg1[%c0_176, %148, %c0_177, %c0_178] : memref<1x32x32x3xf32, #tpu.memory_space<vmem>>, vector<1x1x28x3xf32>
      %150 = vector.shape_cast %149 : vector<1x1x28x3xf32> to vector<28x3xf32>
      %c0_179 = arith.constant 0 : index
      %c30 = arith.constant 30 : index
      %151 = vector.load %arg11[%c0_179, %c30] : memref<28x75xf32, #tpu.memory_space<vmem>>, vector<28x3xf32>
      tpu.vector_store %arg11[%c0_179, %c30], %150 {strides = array<i32>} : memref<28x75xf32, #tpu.memory_space<vmem>>, vector<28x3xf32>,
      %c2_i32_180 = arith.constant 2 : i32
      %152 = arith.addi %96, %c2_i32_180 : i32
      %c0_181 = arith.constant 0 : index
      %153 = arith.index_cast %152 : i32 to index
      %c1_182 = arith.constant 1 : index
      %c0_183 = arith.constant 0 : index
      %154 = vector.load %arg1[%c0_181, %153, %c1_182, %c0_183] : memref<1x32x32x3xf32, #tpu.memory_space<vmem>>, vector<1x1x28x3xf32>
      %155 = vector.shape_cast %154 : vector<1x1x28x3xf32> to vector<28x3xf32>
      %c0_184 = arith.constant 0 : index
      %c33 = arith.constant 33 : index
      %156 = vector.load %arg11[%c0_184, %c33] : memref<28x75xf32, #tpu.memory_space<vmem>>, vector<28x3xf32>
      tpu.vector_store %arg11[%c0_184, %c33], %155 {strides = array<i32>} : memref<28x75xf32, #tpu.memory_space<vmem>>, vector<28x3xf32>,
      %c2_i32_185 = arith.constant 2 : i32
      %157 = arith.addi %96, %c2_i32_185 : i32
      %c0_186 = arith.constant 0 : index
      %158 = arith.index_cast %157 : i32 to index
      %c2_187 = arith.constant 2 : index
      %c0_188 = arith.constant 0 : index
      %159 = vector.load %arg1[%c0_186, %158, %c2_187, %c0_188] : memref<1x32x32x3xf32, #tpu.memory_space<vmem>>, vector<1x1x28x3xf32>
      %160 = vector.shape_cast %159 : vector<1x1x28x3xf32> to vector<28x3xf32>
      %c0_189 = arith.constant 0 : index
      %c36 = arith.constant 36 : index
      %161 = vector.load %arg11[%c0_189, %c36] : memref<28x75xf32, #tpu.memory_space<vmem>>, vector<28x3xf32>
      tpu.vector_store %arg11[%c0_189, %c36], %160 {strides = array<i32>} : memref<28x75xf32, #tpu.memory_space<vmem>>, vector<28x3xf32>,
      %c2_i32_190 = arith.constant 2 : i32
      %162 = arith.addi %96, %c2_i32_190 : i32
      %c0_191 = arith.constant 0 : index
      %163 = arith.index_cast %162 : i32 to index
      %c3_192 = arith.constant 3 : index
      %c0_193 = arith.constant 0 : index
      %164 = vector.load %arg1[%c0_191, %163, %c3_192, %c0_193] : memref<1x32x32x3xf32, #tpu.memory_space<vmem>>, vector<1x1x28x3xf32>
      %165 = vector.shape_cast %164 : vector<1x1x28x3xf32> to vector<28x3xf32>
      %c0_194 = arith.constant 0 : index
      %c39 = arith.constant 39 : index
      %166 = vector.load %arg11[%c0_194, %c39] : memref<28x75xf32, #tpu.memory_space<vmem>>, vector<28x3xf32>
      tpu.vector_store %arg11[%c0_194, %c39], %165 {strides = array<i32>} : memref<28x75xf32, #tpu.memory_space<vmem>>, vector<28x3xf32>,
      %c2_i32_195 = arith.constant 2 : i32
      %167 = arith.addi %96, %c2_i32_195 : i32
      %c0_196 = arith.constant 0 : index
      %168 = arith.index_cast %167 : i32 to index
      %c4_197 = arith.constant 4 : index
      %c0_198 = arith.constant 0 : index
      %169 = vector.load %arg1[%c0_196, %168, %c4_197, %c0_198] : memref<1x32x32x3xf32, #tpu.memory_space<vmem>>, vector<1x1x28x3xf32>
      %170 = vector.shape_cast %169 : vector<1x1x28x3xf32> to vector<28x3xf32>
      %c0_199 = arith.constant 0 : index
      %c42 = arith.constant 42 : index
      %171 = vector.load %arg11[%c0_199, %c42] : memref<28x75xf32, #tpu.memory_space<vmem>>, vector<28x3xf32>
      tpu.vector_store %arg11[%c0_199, %c42], %170 {strides = array<i32>} : memref<28x75xf32, #tpu.memory_space<vmem>>, vector<28x3xf32>,
      %c3_i32 = arith.constant 3 : i32
      %172 = arith.addi %96, %c3_i32 : i32
      %c0_200 = arith.constant 0 : index
      %173 = arith.index_cast %172 : i32 to index
      %c0_201 = arith.constant 0 : index
      %c0_202 = arith.constant 0 : index
      %174 = vector.load %arg1[%c0_200, %173, %c0_201, %c0_202] : memref<1x32x32x3xf32, #tpu.memory_space<vmem>>, vector<1x1x28x3xf32>
      %175 = vector.shape_cast %174 : vector<1x1x28x3xf32> to vector<28x3xf32>
      %c0_203 = arith.constant 0 : index
      %c45 = arith.constant 45 : index
      %176 = vector.load %arg11[%c0_203, %c45] : memref<28x75xf32, #tpu.memory_space<vmem>>, vector<28x3xf32>
      tpu.vector_store %arg11[%c0_203, %c45], %175 {strides = array<i32>} : memref<28x75xf32, #tpu.memory_space<vmem>>, vector<28x3xf32>,
      %c3_i32_204 = arith.constant 3 : i32
      %177 = arith.addi %96, %c3_i32_204 : i32
      %c0_205 = arith.constant 0 : index
      %178 = arith.index_cast %177 : i32 to index
      %c1_206 = arith.constant 1 : index
      %c0_207 = arith.constant 0 : index
      %179 = vector.load %arg1[%c0_205, %178, %c1_206, %c0_207] : memref<1x32x32x3xf32, #tpu.memory_space<vmem>>, vector<1x1x28x3xf32>
      %180 = vector.shape_cast %179 : vector<1x1x28x3xf32> to vector<28x3xf32>
      %c0_208 = arith.constant 0 : index
      %c48_209 = arith.constant 48 : index
      %181 = vector.load %arg11[%c0_208, %c48_209] : memref<28x75xf32, #tpu.memory_space<vmem>>, vector<28x3xf32>
      tpu.vector_store %arg11[%c0_208, %c48_209], %180 {strides = array<i32>} : memref<28x75xf32, #tpu.memory_space<vmem>>, vector<28x3xf32>,
      %c3_i32_210 = arith.constant 3 : i32
      %182 = arith.addi %96, %c3_i32_210 : i32
      %c0_211 = arith.constant 0 : index
      %183 = arith.index_cast %182 : i32 to index
      %c2_212 = arith.constant 2 : index
      %c0_213 = arith.constant 0 : index
      %184 = vector.load %arg1[%c0_211, %183, %c2_212, %c0_213] : memref<1x32x32x3xf32, #tpu.memory_space<vmem>>, vector<1x1x28x3xf32>
      %185 = vector.shape_cast %184 : vector<1x1x28x3xf32> to vector<28x3xf32>
      %c0_214 = arith.constant 0 : index
      %c51 = arith.constant 51 : index
      %186 = vector.load %arg11[%c0_214, %c51] : memref<28x75xf32, #tpu.memory_space<vmem>>, vector<28x3xf32>
      tpu.vector_store %arg11[%c0_214, %c51], %185 {strides = array<i32>} : memref<28x75xf32, #tpu.memory_space<vmem>>, vector<28x3xf32>,
      %c3_i32_215 = arith.constant 3 : i32
      %187 = arith.addi %96, %c3_i32_215 : i32
      %c0_216 = arith.constant 0 : index
      %188 = arith.index_cast %187 : i32 to index
      %c3_217 = arith.constant 3 : index
      %c0_218 = arith.constant 0 : index
      %189 = vector.load %arg1[%c0_216, %188, %c3_217, %c0_218] : memref<1x32x32x3xf32, #tpu.memory_space<vmem>>, vector<1x1x28x3xf32>
      %190 = vector.shape_cast %189 : vector<1x1x28x3xf32> to vector<28x3xf32>
      %c0_219 = arith.constant 0 : index
      %c54 = arith.constant 54 : index
      %191 = vector.load %arg11[%c0_219, %c54] : memref<28x75xf32, #tpu.memory_space<vmem>>, vector<28x3xf32>
      tpu.vector_store %arg11[%c0_219, %c54], %190 {strides = array<i32>} : memref<28x75xf32, #tpu.memory_space<vmem>>, vector<28x3xf32>,
      %c3_i32_220 = arith.constant 3 : i32
      %192 = arith.addi %96, %c3_i32_220 : i32
      %c0_221 = arith.constant 0 : index
      %193 = arith.index_cast %192 : i32 to index
      %c4_222 = arith.constant 4 : index
      %c0_223 = arith.constant 0 : index
      %194 = vector.load %arg1[%c0_221, %193, %c4_222, %c0_223] : memref<1x32x32x3xf32, #tpu.memory_space<vmem>>, vector<1x1x28x3xf32>
      %195 = vector.shape_cast %194 : vector<1x1x28x3xf32> to vector<28x3xf32>
      %c0_224 = arith.constant 0 : index
      %c57 = arith.constant 57 : index
      %196 = vector.load %arg11[%c0_224, %c57] : memref<28x75xf32, #tpu.memory_space<vmem>>, vector<28x3xf32>
      tpu.vector_store %arg11[%c0_224, %c57], %195 {strides = array<i32>} : memref<28x75xf32, #tpu.memory_space<vmem>>, vector<28x3xf32>,
      %c4_i32 = arith.constant 4 : i32
      %197 = arith.addi %96, %c4_i32 : i32
      %c0_225 = arith.constant 0 : index
      %198 = arith.index_cast %197 : i32 to index
      %c0_226 = arith.constant 0 : index
      %c0_227 = arith.constant 0 : index
      %199 = vector.load %arg1[%c0_225, %198, %c0_226, %c0_227] : memref<1x32x32x3xf32, #tpu.memory_space<vmem>>, vector<1x1x28x3xf32>
      %200 = vector.shape_cast %199 : vector<1x1x28x3xf32> to vector<28x3xf32>
      %c0_228 = arith.constant 0 : index
      %c60 = arith.constant 60 : index
      %201 = vector.load %arg11[%c0_228, %c60] : memref<28x75xf32, #tpu.memory_space<vmem>>, vector<28x3xf32>
      tpu.vector_store %arg11[%c0_228, %c60], %200 {strides = array<i32>} : memref<28x75xf32, #tpu.memory_space<vmem>>, vector<28x3xf32>,
      %c4_i32_229 = arith.constant 4 : i32
      %202 = arith.addi %96, %c4_i32_229 : i32
      %c0_230 = arith.constant 0 : index
      %203 = arith.index_cast %202 : i32 to index
      %c1_231 = arith.constant 1 : index
      %c0_232 = arith.constant 0 : index
      %204 = vector.load %arg1[%c0_230, %203, %c1_231, %c0_232] : memref<1x32x32x3xf32, #tpu.memory_space<vmem>>, vector<1x1x28x3xf32>
      %205 = vector.shape_cast %204 : vector<1x1x28x3xf32> to vector<28x3xf32>
      %c0_233 = arith.constant 0 : index
      %c63 = arith.constant 63 : index
      %206 = vector.load %arg11[%c0_233, %c63] : memref<28x75xf32, #tpu.memory_space<vmem>>, vector<28x3xf32>
      tpu.vector_store %arg11[%c0_233, %c63], %205 {strides = array<i32>} : memref<28x75xf32, #tpu.memory_space<vmem>>, vector<28x3xf32>,
      %c4_i32_234 = arith.constant 4 : i32
      %207 = arith.addi %96, %c4_i32_234 : i32
      %c0_235 = arith.constant 0 : index
      %208 = arith.index_cast %207 : i32 to index
      %c2_236 = arith.constant 2 : index
      %c0_237 = arith.constant 0 : index
      %209 = vector.load %arg1[%c0_235, %208, %c2_236, %c0_237] : memref<1x32x32x3xf32, #tpu.memory_space<vmem>>, vector<1x1x28x3xf32>
      %210 = vector.shape_cast %209 : vector<1x1x28x3xf32> to vector<28x3xf32>
      %c0_238 = arith.constant 0 : index
      %c66 = arith.constant 66 : index
      %211 = vector.load %arg11[%c0_238, %c66] : memref<28x75xf32, #tpu.memory_space<vmem>>, vector<28x3xf32>
      tpu.vector_store %arg11[%c0_238, %c66], %210 {strides = array<i32>} : memref<28x75xf32, #tpu.memory_space<vmem>>, vector<28x3xf32>,
      %c4_i32_239 = arith.constant 4 : i32
      %212 = arith.addi %96, %c4_i32_239 : i32
      %c0_240 = arith.constant 0 : index
      %213 = arith.index_cast %212 : i32 to index
      %c3_241 = arith.constant 3 : index
      %c0_242 = arith.constant 0 : index
      %214 = vector.load %arg1[%c0_240, %213, %c3_241, %c0_242] : memref<1x32x32x3xf32, #tpu.memory_space<vmem>>, vector<1x1x28x3xf32>
      %215 = vector.shape_cast %214 : vector<1x1x28x3xf32> to vector<28x3xf32>
      %c0_243 = arith.constant 0 : index
      %c69 = arith.constant 69 : index
      %216 = vector.load %arg11[%c0_243, %c69] : memref<28x75xf32, #tpu.memory_space<vmem>>, vector<28x3xf32>
      tpu.vector_store %arg11[%c0_243, %c69], %215 {strides = array<i32>} : memref<28x75xf32, #tpu.memory_space<vmem>>, vector<28x3xf32>,
      %c4_i32_244 = arith.constant 4 : i32
      %217 = arith.addi %96, %c4_i32_244 : i32
      %c0_245 = arith.constant 0 : index
      %218 = arith.index_cast %217 : i32 to index
      %c4_246 = arith.constant 4 : index
      %c0_247 = arith.constant 0 : index
      %219 = vector.load %arg1[%c0_245, %218, %c4_246, %c0_247] : memref<1x32x32x3xf32, #tpu.memory_space<vmem>>, vector<1x1x28x3xf32>
      %220 = vector.shape_cast %219 : vector<1x1x28x3xf32> to vector<28x3xf32>
      %c0_248 = arith.constant 0 : index
      %c72 = arith.constant 72 : index
      %221 = vector.load %arg11[%c0_248, %c72] : memref<28x75xf32, #tpu.memory_space<vmem>>, vector<28x3xf32>
      tpu.vector_store %arg11[%c0_248, %c72], %220 {strides = array<i32>} : memref<28x75xf32, #tpu.memory_space<vmem>>, vector<28x3xf32>,
      %c0_249 = arith.constant 0 : index
      %c0_250 = arith.constant 0 : index
      %222 = vector.load %arg11[%c0_249, %c0_250] : memref<28x75xf32, #tpu.memory_space<vmem>>, vector<28x75xf32>
      %c0_251 = arith.constant 0 : index
      %c0_252 = arith.constant 0 : index
      %223 = vector.load %arg2[%c0_251, %c0_252] : memref<75x6xf32, #tpu.memory_space<vmem>>, vector<75x6xf32>
      %cst_253 = arith.constant dense<0.000000e+00> : vector<28x6xf32>
      %224 = tpu.matmul %222, %223, %cst_253 {dimension_numbers = #tpu.dot_dimension_numbers<[1], [0], [0], [1], [0, 0, 1, 1], [], []>} : vector<28x75xf32>, vector<75x6xf32>, vector<28x6xf32> -> vector<28x6xf32>
      %c0_254 = arith.constant 0 : index
      %c0_255 = arith.constant 0 : index
      %225 = vector.load %arg3[%c0_254, %c0_255] : memref<1x6xf32, #tpu.memory_space<vmem>>, vector<1x6xf32>
      %226 = vector.broadcast %225 : vector<1x6xf32> to vector<28x6xf32>
      %227 = arith.addf %224, %226 : vector<28x6xf32>
      %cst_256 = arith.constant 0.000000e+00 : f32
      %228 = vector.broadcast %cst_256 : f32 to vector<28x6xf32>
      %229 = arith.maximumf %227, %228 : vector<28x6xf32>
      %230 = arith.index_cast %96 : i32 to index
      %c0_257 = arith.constant 0 : index
      %c0_258 = arith.constant 0 : index
      %231 = vector.load %arg12[%230, %c0_257, %c0_258] : memref<28x28x6xf32, #tpu.memory_space<vmem>>, vector<1x28x6xf32>
      %232 = vector.shape_cast %231 : vector<1x28x6xf32> to vector<28x6xf32>
      %233 = vector.shape_cast %229 : vector<28x6xf32> to vector<1x28x6xf32>
      tpu.vector_store %arg12[%230, %c0_257, %c0_258], %233 {strides = array<i32>} : memref<28x28x6xf32, #tpu.memory_space<vmem>>, vector<1x28x6xf32>,
    }
    %c28_i32_0 = arith.constant 28 : i32
    %c0_i32_1 = arith.constant 0 : i32
    %c14_i32 = arith.constant 14 : i32
    %1 = arith.addi %c0_i32_1, %c14_i32 : i32
    %c1_i32_2 = arith.constant 1 : i32
    scf.for %arg18 = %c0_i32_1 to %1 step %c1_i32_2  : i32 {
      %c1_i32_122 = arith.constant 1 : i32
      %95 = arith.muli %arg18, %c1_i32_122 : i32
      %c0_i32_123 = arith.constant 0 : i32
      %96 = arith.addi %c0_i32_123, %95 : i32
      %c2_i32 = arith.constant 2 : i32
      %97 = arith.muli %c2_i32, %96 : i32
      %98 = arith.index_cast %97 : i32 to index
      %c0_124 = arith.constant 0 : index
      %c0_125 = arith.constant 0 : index
      %99 = tpu.strided_load %arg12[%98, %c0_124, %c0_125] {strides = array<i32: 1, 2, 1>} : memref<28x28x6xf32, #tpu.memory_space<vmem>>, vector<1x14x6xf32>
      %100 = vector.shape_cast %99 : vector<1x14x6xf32> to vector<14x6xf32>
      %c2_i32_126 = arith.constant 2 : i32
      %101 = arith.muli %c2_i32_126, %96 : i32
      %102 = arith.index_cast %101 : i32 to index
      %c1_127 = arith.constant 1 : index
      %c0_128 = arith.constant 0 : index
      %103 = tpu.strided_load %arg12[%102, %c1_127, %c0_128] {strides = array<i32: 1, 2, 1>} : memref<28x28x6xf32, #tpu.memory_space<vmem>>, vector<1x14x6xf32>
      %104 = vector.shape_cast %103 : vector<1x14x6xf32> to vector<14x6xf32>
      %105 = arith.maximumf %100, %104 : vector<14x6xf32>
      %c2_i32_129 = arith.constant 2 : i32
      %106 = arith.muli %c2_i32_129, %96 : i32
      %c1_i32_130 = arith.constant 1 : i32
      %107 = arith.addi %106, %c1_i32_130 : i32
      %108 = arith.index_cast %107 : i32 to index
      %c0_131 = arith.constant 0 : index
      %c0_132 = arith.constant 0 : index
      %109 = tpu.strided_load %arg12[%108, %c0_131, %c0_132] {strides = array<i32: 1, 2, 1>} : memref<28x28x6xf32, #tpu.memory_space<vmem>>, vector<1x14x6xf32>
      %110 = vector.shape_cast %109 : vector<1x14x6xf32> to vector<14x6xf32>
      %c2_i32_133 = arith.constant 2 : i32
      %111 = arith.muli %c2_i32_133, %96 : i32
      %c1_i32_134 = arith.constant 1 : i32
      %112 = arith.addi %111, %c1_i32_134 : i32
      %113 = arith.index_cast %112 : i32 to index
      %c1_135 = arith.constant 1 : index
      %c0_136 = arith.constant 0 : index
      %114 = tpu.strided_load %arg12[%113, %c1_135, %c0_136] {strides = array<i32: 1, 2, 1>} : memref<28x28x6xf32, #tpu.memory_space<vmem>>, vector<1x14x6xf32>
      %115 = vector.shape_cast %114 : vector<1x14x6xf32> to vector<14x6xf32>
      %116 = arith.maximumf %110, %115 : vector<14x6xf32>
      %117 = arith.maximumf %105, %116 : vector<14x6xf32>
      %118 = arith.index_cast %96 : i32 to index
      %c0_137 = arith.constant 0 : index
      %c0_138 = arith.constant 0 : index
      %119 = vector.load %arg13[%118, %c0_137, %c0_138] : memref<14x14x6xf32, #tpu.memory_space<vmem>>, vector<1x14x6xf32>
      %120 = vector.shape_cast %119 : vector<1x14x6xf32> to vector<14x6xf32>
      %121 = vector.shape_cast %117 : vector<14x6xf32> to vector<1x14x6xf32>
      tpu.vector_store %arg13[%118, %c0_137, %c0_138], %121 {strides = array<i32>} : memref<14x14x6xf32, #tpu.memory_space<vmem>>, vector<1x14x6xf32>,
    }
    %c14_i32_3 = arith.constant 14 : i32
    %c0_i32_4 = arith.constant 0 : i32
    %c10_i32 = arith.constant 10 : i32
    %2 = arith.addi %c0_i32_4, %c10_i32 : i32
    %c1_i32_5 = arith.constant 1 : i32
    scf.for %arg18 = %c0_i32_4 to %2 step %c1_i32_5  : i32 {
      %c1_i32_122 = arith.constant 1 : i32
      %95 = arith.muli %arg18, %c1_i32_122 : i32
      %c0_i32_123 = arith.constant 0 : i32
      %96 = arith.addi %c0_i32_123, %95 : i32
      %c0_i32_124 = arith.constant 0 : i32
      %97 = arith.addi %96, %c0_i32_124 : i32
      %98 = arith.index_cast %97 : i32 to index
      %c0_125 = arith.constant 0 : index
      %c0_126 = arith.constant 0 : index
      %99 = vector.load %arg13[%98, %c0_125, %c0_126] : memref<14x14x6xf32, #tpu.memory_space<vmem>>, vector<1x10x6xf32>
      %100 = vector.shape_cast %99 : vector<1x10x6xf32> to vector<10x6xf32>
      %c0_127 = arith.constant 0 : index
      %c0_128 = arith.constant 0 : index
      %101 = vector.load %arg14[%c0_127, %c0_128] : memref<10x150xf32, #tpu.memory_space<vmem>>, vector<10x6xf32>
      tpu.vector_store %arg14[%c0_127, %c0_128], %100 {strides = array<i32>} : memref<10x150xf32, #tpu.memory_space<vmem>>, vector<10x6xf32>,
      %c0_i32_129 = arith.constant 0 : i32
      %102 = arith.addi %96, %c0_i32_129 : i32
      %103 = arith.index_cast %102 : i32 to index
      %c1_130 = arith.constant 1 : index
      %c0_131 = arith.constant 0 : index
      %104 = vector.load %arg13[%103, %c1_130, %c0_131] : memref<14x14x6xf32, #tpu.memory_space<vmem>>, vector<1x10x6xf32>
      %105 = vector.shape_cast %104 : vector<1x10x6xf32> to vector<10x6xf32>
      %c0_132 = arith.constant 0 : index
      %c6 = arith.constant 6 : index
      %106 = vector.load %arg14[%c0_132, %c6] : memref<10x150xf32, #tpu.memory_space<vmem>>, vector<10x6xf32>
      tpu.vector_store %arg14[%c0_132, %c6], %105 {strides = array<i32>} : memref<10x150xf32, #tpu.memory_space<vmem>>, vector<10x6xf32>,
      %c0_i32_133 = arith.constant 0 : i32
      %107 = arith.addi %96, %c0_i32_133 : i32
      %108 = arith.index_cast %107 : i32 to index
      %c2_134 = arith.constant 2 : index
      %c0_135 = arith.constant 0 : index
      %109 = vector.load %arg13[%108, %c2_134, %c0_135] : memref<14x14x6xf32, #tpu.memory_space<vmem>>, vector<1x10x6xf32>
      %110 = vector.shape_cast %109 : vector<1x10x6xf32> to vector<10x6xf32>
      %c0_136 = arith.constant 0 : index
      %c12 = arith.constant 12 : index
      %111 = vector.load %arg14[%c0_136, %c12] : memref<10x150xf32, #tpu.memory_space<vmem>>, vector<10x6xf32>
      tpu.vector_store %arg14[%c0_136, %c12], %110 {strides = array<i32>} : memref<10x150xf32, #tpu.memory_space<vmem>>, vector<10x6xf32>,
      %c0_i32_137 = arith.constant 0 : i32
      %112 = arith.addi %96, %c0_i32_137 : i32
      %113 = arith.index_cast %112 : i32 to index
      %c3_138 = arith.constant 3 : index
      %c0_139 = arith.constant 0 : index
      %114 = vector.load %arg13[%113, %c3_138, %c0_139] : memref<14x14x6xf32, #tpu.memory_space<vmem>>, vector<1x10x6xf32>
      %115 = vector.shape_cast %114 : vector<1x10x6xf32> to vector<10x6xf32>
      %c0_140 = arith.constant 0 : index
      %c18 = arith.constant 18 : index
      %116 = vector.load %arg14[%c0_140, %c18] : memref<10x150xf32, #tpu.memory_space<vmem>>, vector<10x6xf32>
      tpu.vector_store %arg14[%c0_140, %c18], %115 {strides = array<i32>} : memref<10x150xf32, #tpu.memory_space<vmem>>, vector<10x6xf32>,
      %c0_i32_141 = arith.constant 0 : i32
      %117 = arith.addi %96, %c0_i32_141 : i32
      %118 = arith.index_cast %117 : i32 to index
      %c4_142 = arith.constant 4 : index
      %c0_143 = arith.constant 0 : index
      %119 = vector.load %arg13[%118, %c4_142, %c0_143] : memref<14x14x6xf32, #tpu.memory_space<vmem>>, vector<1x10x6xf32>
      %120 = vector.shape_cast %119 : vector<1x10x6xf32> to vector<10x6xf32>
      %c0_144 = arith.constant 0 : index
      %c24 = arith.constant 24 : index
      %121 = vector.load %arg14[%c0_144, %c24] : memref<10x150xf32, #tpu.memory_space<vmem>>, vector<10x6xf32>
      tpu.vector_store %arg14[%c0_144, %c24], %120 {strides = array<i32>} : memref<10x150xf32, #tpu.memory_space<vmem>>, vector<10x6xf32>,
      %c1_i32_145 = arith.constant 1 : i32
      %122 = arith.addi %96, %c1_i32_145 : i32
      %123 = arith.index_cast %122 : i32 to index
      %c0_146 = arith.constant 0 : index
      %c0_147 = arith.constant 0 : index
      %124 = vector.load %arg13[%123, %c0_146, %c0_147] : memref<14x14x6xf32, #tpu.memory_space<vmem>>, vector<1x10x6xf32>
      %125 = vector.shape_cast %124 : vector<1x10x6xf32> to vector<10x6xf32>
      %c0_148 = arith.constant 0 : index
      %c30 = arith.constant 30 : index
      %126 = vector.load %arg14[%c0_148, %c30] : memref<10x150xf32, #tpu.memory_space<vmem>>, vector<10x6xf32>
      tpu.vector_store %arg14[%c0_148, %c30], %125 {strides = array<i32>} : memref<10x150xf32, #tpu.memory_space<vmem>>, vector<10x6xf32>,
      %c1_i32_149 = arith.constant 1 : i32
      %127 = arith.addi %96, %c1_i32_149 : i32
      %128 = arith.index_cast %127 : i32 to index
      %c1_150 = arith.constant 1 : index
      %c0_151 = arith.constant 0 : index
      %129 = vector.load %arg13[%128, %c1_150, %c0_151] : memref<14x14x6xf32, #tpu.memory_space<vmem>>, vector<1x10x6xf32>
      %130 = vector.shape_cast %129 : vector<1x10x6xf32> to vector<10x6xf32>
      %c0_152 = arith.constant 0 : index
      %c36 = arith.constant 36 : index
      %131 = vector.load %arg14[%c0_152, %c36] : memref<10x150xf32, #tpu.memory_space<vmem>>, vector<10x6xf32>
      tpu.vector_store %arg14[%c0_152, %c36], %130 {strides = array<i32>} : memref<10x150xf32, #tpu.memory_space<vmem>>, vector<10x6xf32>,
      %c1_i32_153 = arith.constant 1 : i32
      %132 = arith.addi %96, %c1_i32_153 : i32
      %133 = arith.index_cast %132 : i32 to index
      %c2_154 = arith.constant 2 : index
      %c0_155 = arith.constant 0 : index
      %134 = vector.load %arg13[%133, %c2_154, %c0_155] : memref<14x14x6xf32, #tpu.memory_space<vmem>>, vector<1x10x6xf32>
      %135 = vector.shape_cast %134 : vector<1x10x6xf32> to vector<10x6xf32>
      %c0_156 = arith.constant 0 : index
      %c42 = arith.constant 42 : index
      %136 = vector.load %arg14[%c0_156, %c42] : memref<10x150xf32, #tpu.memory_space<vmem>>, vector<10x6xf32>
      tpu.vector_store %arg14[%c0_156, %c42], %135 {strides = array<i32>} : memref<10x150xf32, #tpu.memory_space<vmem>>, vector<10x6xf32>,
      %c1_i32_157 = arith.constant 1 : i32
      %137 = arith.addi %96, %c1_i32_157 : i32
      %138 = arith.index_cast %137 : i32 to index
      %c3_158 = arith.constant 3 : index
      %c0_159 = arith.constant 0 : index
      %139 = vector.load %arg13[%138, %c3_158, %c0_159] : memref<14x14x6xf32, #tpu.memory_space<vmem>>, vector<1x10x6xf32>
      %140 = vector.shape_cast %139 : vector<1x10x6xf32> to vector<10x6xf32>
      %c0_160 = arith.constant 0 : index
      %c48_161 = arith.constant 48 : index
      %141 = vector.load %arg14[%c0_160, %c48_161] : memref<10x150xf32, #tpu.memory_space<vmem>>, vector<10x6xf32>
      tpu.vector_store %arg14[%c0_160, %c48_161], %140 {strides = array<i32>} : memref<10x150xf32, #tpu.memory_space<vmem>>, vector<10x6xf32>,
      %c1_i32_162 = arith.constant 1 : i32
      %142 = arith.addi %96, %c1_i32_162 : i32
      %143 = arith.index_cast %142 : i32 to index
      %c4_163 = arith.constant 4 : index
      %c0_164 = arith.constant 0 : index
      %144 = vector.load %arg13[%143, %c4_163, %c0_164] : memref<14x14x6xf32, #tpu.memory_space<vmem>>, vector<1x10x6xf32>
      %145 = vector.shape_cast %144 : vector<1x10x6xf32> to vector<10x6xf32>
      %c0_165 = arith.constant 0 : index
      %c54 = arith.constant 54 : index
      %146 = vector.load %arg14[%c0_165, %c54] : memref<10x150xf32, #tpu.memory_space<vmem>>, vector<10x6xf32>
      tpu.vector_store %arg14[%c0_165, %c54], %145 {strides = array<i32>} : memref<10x150xf32, #tpu.memory_space<vmem>>, vector<10x6xf32>,
      %c2_i32 = arith.constant 2 : i32
      %147 = arith.addi %96, %c2_i32 : i32
      %148 = arith.index_cast %147 : i32 to index
      %c0_166 = arith.constant 0 : index
      %c0_167 = arith.constant 0 : index
      %149 = vector.load %arg13[%148, %c0_166, %c0_167] : memref<14x14x6xf32, #tpu.memory_space<vmem>>, vector<1x10x6xf32>
      %150 = vector.shape_cast %149 : vector<1x10x6xf32> to vector<10x6xf32>
      %c0_168 = arith.constant 0 : index
      %c60 = arith.constant 60 : index
      %151 = vector.load %arg14[%c0_168, %c60] : memref<10x150xf32, #tpu.memory_space<vmem>>, vector<10x6xf32>
      tpu.vector_store %arg14[%c0_168, %c60], %150 {strides = array<i32>} : memref<10x150xf32, #tpu.memory_space<vmem>>, vector<10x6xf32>,
      %c2_i32_169 = arith.constant 2 : i32
      %152 = arith.addi %96, %c2_i32_169 : i32
      %153 = arith.index_cast %152 : i32 to index
      %c1_170 = arith.constant 1 : index
      %c0_171 = arith.constant 0 : index
      %154 = vector.load %arg13[%153, %c1_170, %c0_171] : memref<14x14x6xf32, #tpu.memory_space<vmem>>, vector<1x10x6xf32>
      %155 = vector.shape_cast %154 : vector<1x10x6xf32> to vector<10x6xf32>
      %c0_172 = arith.constant 0 : index
      %c66 = arith.constant 66 : index
      %156 = vector.load %arg14[%c0_172, %c66] : memref<10x150xf32, #tpu.memory_space<vmem>>, vector<10x6xf32>
      tpu.vector_store %arg14[%c0_172, %c66], %155 {strides = array<i32>} : memref<10x150xf32, #tpu.memory_space<vmem>>, vector<10x6xf32>,
      %c2_i32_173 = arith.constant 2 : i32
      %157 = arith.addi %96, %c2_i32_173 : i32
      %158 = arith.index_cast %157 : i32 to index
      %c2_174 = arith.constant 2 : index
      %c0_175 = arith.constant 0 : index
      %159 = vector.load %arg13[%158, %c2_174, %c0_175] : memref<14x14x6xf32, #tpu.memory_space<vmem>>, vector<1x10x6xf32>
      %160 = vector.shape_cast %159 : vector<1x10x6xf32> to vector<10x6xf32>
      %c0_176 = arith.constant 0 : index
      %c72 = arith.constant 72 : index
      %161 = vector.load %arg14[%c0_176, %c72] : memref<10x150xf32, #tpu.memory_space<vmem>>, vector<10x6xf32>
      tpu.vector_store %arg14[%c0_176, %c72], %160 {strides = array<i32>} : memref<10x150xf32, #tpu.memory_space<vmem>>, vector<10x6xf32>,
      %c2_i32_177 = arith.constant 2 : i32
      %162 = arith.addi %96, %c2_i32_177 : i32
      %163 = arith.index_cast %162 : i32 to index
      %c3_178 = arith.constant 3 : index
      %c0_179 = arith.constant 0 : index
      %164 = vector.load %arg13[%163, %c3_178, %c0_179] : memref<14x14x6xf32, #tpu.memory_space<vmem>>, vector<1x10x6xf32>
      %165 = vector.shape_cast %164 : vector<1x10x6xf32> to vector<10x6xf32>
      %c0_180 = arith.constant 0 : index
      %c78 = arith.constant 78 : index
      %166 = vector.load %arg14[%c0_180, %c78] : memref<10x150xf32, #tpu.memory_space<vmem>>, vector<10x6xf32>
      tpu.vector_store %arg14[%c0_180, %c78], %165 {strides = array<i32>} : memref<10x150xf32, #tpu.memory_space<vmem>>, vector<10x6xf32>,
      %c2_i32_181 = arith.constant 2 : i32
      %167 = arith.addi %96, %c2_i32_181 : i32
      %168 = arith.index_cast %167 : i32 to index
      %c4_182 = arith.constant 4 : index
      %c0_183 = arith.constant 0 : index
      %169 = vector.load %arg13[%168, %c4_182, %c0_183] : memref<14x14x6xf32, #tpu.memory_space<vmem>>, vector<1x10x6xf32>
      %170 = vector.shape_cast %169 : vector<1x10x6xf32> to vector<10x6xf32>
      %c0_184 = arith.constant 0 : index
      %c84 = arith.constant 84 : index
      %171 = vector.load %arg14[%c0_184, %c84] : memref<10x150xf32, #tpu.memory_space<vmem>>, vector<10x6xf32>
      tpu.vector_store %arg14[%c0_184, %c84], %170 {strides = array<i32>} : memref<10x150xf32, #tpu.memory_space<vmem>>, vector<10x6xf32>,
      %c3_i32 = arith.constant 3 : i32
      %172 = arith.addi %96, %c3_i32 : i32
      %173 = arith.index_cast %172 : i32 to index
      %c0_185 = arith.constant 0 : index
      %c0_186 = arith.constant 0 : index
      %174 = vector.load %arg13[%173, %c0_185, %c0_186] : memref<14x14x6xf32, #tpu.memory_space<vmem>>, vector<1x10x6xf32>
      %175 = vector.shape_cast %174 : vector<1x10x6xf32> to vector<10x6xf32>
      %c0_187 = arith.constant 0 : index
      %c90 = arith.constant 90 : index
      %176 = vector.load %arg14[%c0_187, %c90] : memref<10x150xf32, #tpu.memory_space<vmem>>, vector<10x6xf32>
      tpu.vector_store %arg14[%c0_187, %c90], %175 {strides = array<i32>} : memref<10x150xf32, #tpu.memory_space<vmem>>, vector<10x6xf32>,
      %c3_i32_188 = arith.constant 3 : i32
      %177 = arith.addi %96, %c3_i32_188 : i32
      %178 = arith.index_cast %177 : i32 to index
      %c1_189 = arith.constant 1 : index
      %c0_190 = arith.constant 0 : index
      %179 = vector.load %arg13[%178, %c1_189, %c0_190] : memref<14x14x6xf32, #tpu.memory_space<vmem>>, vector<1x10x6xf32>
      %180 = vector.shape_cast %179 : vector<1x10x6xf32> to vector<10x6xf32>
      %c0_191 = arith.constant 0 : index
      %c96_192 = arith.constant 96 : index
      %181 = vector.load %arg14[%c0_191, %c96_192] : memref<10x150xf32, #tpu.memory_space<vmem>>, vector<10x6xf32>
      tpu.vector_store %arg14[%c0_191, %c96_192], %180 {strides = array<i32>} : memref<10x150xf32, #tpu.memory_space<vmem>>, vector<10x6xf32>,
      %c3_i32_193 = arith.constant 3 : i32
      %182 = arith.addi %96, %c3_i32_193 : i32
      %183 = arith.index_cast %182 : i32 to index
      %c2_194 = arith.constant 2 : index
      %c0_195 = arith.constant 0 : index
      %184 = vector.load %arg13[%183, %c2_194, %c0_195] : memref<14x14x6xf32, #tpu.memory_space<vmem>>, vector<1x10x6xf32>
      %185 = vector.shape_cast %184 : vector<1x10x6xf32> to vector<10x6xf32>
      %c0_196 = arith.constant 0 : index
      %c102 = arith.constant 102 : index
      %186 = vector.load %arg14[%c0_196, %c102] : memref<10x150xf32, #tpu.memory_space<vmem>>, vector<10x6xf32>
      tpu.vector_store %arg14[%c0_196, %c102], %185 {strides = array<i32>} : memref<10x150xf32, #tpu.memory_space<vmem>>, vector<10x6xf32>,
      %c3_i32_197 = arith.constant 3 : i32
      %187 = arith.addi %96, %c3_i32_197 : i32
      %188 = arith.index_cast %187 : i32 to index
      %c3_198 = arith.constant 3 : index
      %c0_199 = arith.constant 0 : index
      %189 = vector.load %arg13[%188, %c3_198, %c0_199] : memref<14x14x6xf32, #tpu.memory_space<vmem>>, vector<1x10x6xf32>
      %190 = vector.shape_cast %189 : vector<1x10x6xf32> to vector<10x6xf32>
      %c0_200 = arith.constant 0 : index
      %c108 = arith.constant 108 : index
      %191 = vector.load %arg14[%c0_200, %c108] : memref<10x150xf32, #tpu.memory_space<vmem>>, vector<10x6xf32>
      tpu.vector_store %arg14[%c0_200, %c108], %190 {strides = array<i32>} : memref<10x150xf32, #tpu.memory_space<vmem>>, vector<10x6xf32>,
      %c3_i32_201 = arith.constant 3 : i32
      %192 = arith.addi %96, %c3_i32_201 : i32
      %193 = arith.index_cast %192 : i32 to index
      %c4_202 = arith.constant 4 : index
      %c0_203 = arith.constant 0 : index
      %194 = vector.load %arg13[%193, %c4_202, %c0_203] : memref<14x14x6xf32, #tpu.memory_space<vmem>>, vector<1x10x6xf32>
      %195 = vector.shape_cast %194 : vector<1x10x6xf32> to vector<10x6xf32>
      %c0_204 = arith.constant 0 : index
      %c114 = arith.constant 114 : index
      %196 = vector.load %arg14[%c0_204, %c114] : memref<10x150xf32, #tpu.memory_space<vmem>>, vector<10x6xf32>
      tpu.vector_store %arg14[%c0_204, %c114], %195 {strides = array<i32>} : memref<10x150xf32, #tpu.memory_space<vmem>>, vector<10x6xf32>,
      %c4_i32 = arith.constant 4 : i32
      %197 = arith.addi %96, %c4_i32 : i32
      %198 = arith.index_cast %197 : i32 to index
      %c0_205 = arith.constant 0 : index
      %c0_206 = arith.constant 0 : index
      %199 = vector.load %arg13[%198, %c0_205, %c0_206] : memref<14x14x6xf32, #tpu.memory_space<vmem>>, vector<1x10x6xf32>
      %200 = vector.shape_cast %199 : vector<1x10x6xf32> to vector<10x6xf32>
      %c0_207 = arith.constant 0 : index
      %c120 = arith.constant 120 : index
      %201 = vector.load %arg14[%c0_207, %c120] : memref<10x150xf32, #tpu.memory_space<vmem>>, vector<10x6xf32>
      tpu.vector_store %arg14[%c0_207, %c120], %200 {strides = array<i32>} : memref<10x150xf32, #tpu.memory_space<vmem>>, vector<10x6xf32>,
      %c4_i32_208 = arith.constant 4 : i32
      %202 = arith.addi %96, %c4_i32_208 : i32
      %203 = arith.index_cast %202 : i32 to index
      %c1_209 = arith.constant 1 : index
      %c0_210 = arith.constant 0 : index
      %204 = vector.load %arg13[%203, %c1_209, %c0_210] : memref<14x14x6xf32, #tpu.memory_space<vmem>>, vector<1x10x6xf32>
      %205 = vector.shape_cast %204 : vector<1x10x6xf32> to vector<10x6xf32>
      %c0_211 = arith.constant 0 : index
      %c126 = arith.constant 126 : index
      %206 = vector.load %arg14[%c0_211, %c126] : memref<10x150xf32, #tpu.memory_space<vmem>>, vector<10x6xf32>
      tpu.vector_store %arg14[%c0_211, %c126], %205 {strides = array<i32>} : memref<10x150xf32, #tpu.memory_space<vmem>>, vector<10x6xf32>,
      %c4_i32_212 = arith.constant 4 : i32
      %207 = arith.addi %96, %c4_i32_212 : i32
      %208 = arith.index_cast %207 : i32 to index
      %c2_213 = arith.constant 2 : index
      %c0_214 = arith.constant 0 : index
      %209 = vector.load %arg13[%208, %c2_213, %c0_214] : memref<14x14x6xf32, #tpu.memory_space<vmem>>, vector<1x10x6xf32>
      %210 = vector.shape_cast %209 : vector<1x10x6xf32> to vector<10x6xf32>
      %c0_215 = arith.constant 0 : index
      %c132 = arith.constant 132 : index
      %211 = vector.load %arg14[%c0_215, %c132] : memref<10x150xf32, #tpu.memory_space<vmem>>, vector<10x6xf32>
      tpu.vector_store %arg14[%c0_215, %c132], %210 {strides = array<i32>} : memref<10x150xf32, #tpu.memory_space<vmem>>, vector<10x6xf32>,
      %c4_i32_216 = arith.constant 4 : i32
      %212 = arith.addi %96, %c4_i32_216 : i32
      %213 = arith.index_cast %212 : i32 to index
      %c3_217 = arith.constant 3 : index
      %c0_218 = arith.constant 0 : index
      %214 = vector.load %arg13[%213, %c3_217, %c0_218] : memref<14x14x6xf32, #tpu.memory_space<vmem>>, vector<1x10x6xf32>
      %215 = vector.shape_cast %214 : vector<1x10x6xf32> to vector<10x6xf32>
      %c0_219 = arith.constant 0 : index
      %c138 = arith.constant 138 : index
      %216 = vector.load %arg14[%c0_219, %c138] : memref<10x150xf32, #tpu.memory_space<vmem>>, vector<10x6xf32>
      tpu.vector_store %arg14[%c0_219, %c138], %215 {strides = array<i32>} : memref<10x150xf32, #tpu.memory_space<vmem>>, vector<10x6xf32>,
      %c4_i32_220 = arith.constant 4 : i32
      %217 = arith.addi %96, %c4_i32_220 : i32
      %218 = arith.index_cast %217 : i32 to index
      %c4_221 = arith.constant 4 : index
      %c0_222 = arith.constant 0 : index
      %219 = vector.load %arg13[%218, %c4_221, %c0_222] : memref<14x14x6xf32, #tpu.memory_space<vmem>>, vector<1x10x6xf32>
      %220 = vector.shape_cast %219 : vector<1x10x6xf32> to vector<10x6xf32>
      %c0_223 = arith.constant 0 : index
      %c144_224 = arith.constant 144 : index
      %221 = vector.load %arg14[%c0_223, %c144_224] : memref<10x150xf32, #tpu.memory_space<vmem>>, vector<10x6xf32>
      tpu.vector_store %arg14[%c0_223, %c144_224], %220 {strides = array<i32>} : memref<10x150xf32, #tpu.memory_space<vmem>>, vector<10x6xf32>,
      %c0_225 = arith.constant 0 : index
      %c0_226 = arith.constant 0 : index
      %222 = vector.load %arg14[%c0_225, %c0_226] : memref<10x150xf32, #tpu.memory_space<vmem>>, vector<10x150xf32>
      %c0_227 = arith.constant 0 : index
      %c0_228 = arith.constant 0 : index
      %223 = vector.load %arg4[%c0_227, %c0_228] : memref<150x16xf32, #tpu.memory_space<vmem>>, vector<150x16xf32>
      %cst_229 = arith.constant dense<0.000000e+00> : vector<10x16xf32>
      %224 = tpu.matmul %222, %223, %cst_229 {dimension_numbers = #tpu.dot_dimension_numbers<[1], [0], [0], [1], [0, 0, 1, 1], [], []>} : vector<10x150xf32>, vector<150x16xf32>, vector<10x16xf32> -> vector<10x16xf32>
      %c0_230 = arith.constant 0 : index
      %c0_231 = arith.constant 0 : index
      %225 = vector.load %arg5[%c0_230, %c0_231] : memref<1x16xf32, #tpu.memory_space<vmem>>, vector<1x16xf32>
      %226 = vector.broadcast %225 : vector<1x16xf32> to vector<10x16xf32>
      %227 = arith.addf %224, %226 : vector<10x16xf32>
      %cst_232 = arith.constant 0.000000e+00 : f32
      %228 = vector.broadcast %cst_232 : f32 to vector<10x16xf32>
      %229 = arith.maximumf %227, %228 : vector<10x16xf32>
      %230 = arith.index_cast %96 : i32 to index
      %c0_233 = arith.constant 0 : index
      %c0_234 = arith.constant 0 : index
      %231 = vector.load %arg15[%230, %c0_233, %c0_234] : memref<10x10x16xf32, #tpu.memory_space<vmem>>, vector<1x10x16xf32>
      %232 = vector.shape_cast %231 : vector<1x10x16xf32> to vector<10x16xf32>
      %233 = vector.shape_cast %229 : vector<10x16xf32> to vector<1x10x16xf32>
      tpu.vector_store %arg15[%230, %c0_233, %c0_234], %233 {strides = array<i32>} : memref<10x10x16xf32, #tpu.memory_space<vmem>>, vector<1x10x16xf32>,
    }
    %c10_i32_6 = arith.constant 10 : i32
    %c0_i32_7 = arith.constant 0 : i32
    %c5_i32 = arith.constant 5 : i32
    %3 = arith.addi %c0_i32_7, %c5_i32 : i32
    %c1_i32_8 = arith.constant 1 : i32
    scf.for %arg18 = %c0_i32_7 to %3 step %c1_i32_8  : i32 {
      %c1_i32_122 = arith.constant 1 : i32
      %95 = arith.muli %arg18, %c1_i32_122 : i32
      %c0_i32_123 = arith.constant 0 : i32
      %96 = arith.addi %c0_i32_123, %95 : i32
      %c2_i32 = arith.constant 2 : i32
      %97 = arith.muli %c2_i32, %96 : i32
      %98 = arith.index_cast %97 : i32 to index
      %c0_124 = arith.constant 0 : index
      %c0_125 = arith.constant 0 : index
      %99 = tpu.strided_load %arg15[%98, %c0_124, %c0_125] {strides = array<i32: 1, 2, 1>} : memref<10x10x16xf32, #tpu.memory_space<vmem>>, vector<1x5x16xf32>
      %100 = vector.shape_cast %99 : vector<1x5x16xf32> to vector<5x16xf32>
      %c2_i32_126 = arith.constant 2 : i32
      %101 = arith.muli %c2_i32_126, %96 : i32
      %102 = arith.index_cast %101 : i32 to index
      %c1_127 = arith.constant 1 : index
      %c0_128 = arith.constant 0 : index
      %103 = tpu.strided_load %arg15[%102, %c1_127, %c0_128] {strides = array<i32: 1, 2, 1>} : memref<10x10x16xf32, #tpu.memory_space<vmem>>, vector<1x5x16xf32>
      %104 = vector.shape_cast %103 : vector<1x5x16xf32> to vector<5x16xf32>
      %105 = arith.maximumf %100, %104 : vector<5x16xf32>
      %c2_i32_129 = arith.constant 2 : i32
      %106 = arith.muli %c2_i32_129, %96 : i32
      %c1_i32_130 = arith.constant 1 : i32
      %107 = arith.addi %106, %c1_i32_130 : i32
      %108 = arith.index_cast %107 : i32 to index
      %c0_131 = arith.constant 0 : index
      %c0_132 = arith.constant 0 : index
      %109 = tpu.strided_load %arg15[%108, %c0_131, %c0_132] {strides = array<i32: 1, 2, 1>} : memref<10x10x16xf32, #tpu.memory_space<vmem>>, vector<1x5x16xf32>
      %110 = vector.shape_cast %109 : vector<1x5x16xf32> to vector<5x16xf32>
      %c2_i32_133 = arith.constant 2 : i32
      %111 = arith.muli %c2_i32_133, %96 : i32
      %c1_i32_134 = arith.constant 1 : i32
      %112 = arith.addi %111, %c1_i32_134 : i32
      %113 = arith.index_cast %112 : i32 to index
      %c1_135 = arith.constant 1 : index
      %c0_136 = arith.constant 0 : index
      %114 = tpu.strided_load %arg15[%113, %c1_135, %c0_136] {strides = array<i32: 1, 2, 1>} : memref<10x10x16xf32, #tpu.memory_space<vmem>>, vector<1x5x16xf32>
      %115 = vector.shape_cast %114 : vector<1x5x16xf32> to vector<5x16xf32>
      %116 = arith.maximumf %110, %115 : vector<5x16xf32>
      %117 = arith.maximumf %105, %116 : vector<5x16xf32>
      %118 = arith.index_cast %96 : i32 to index
      %c0_137 = arith.constant 0 : index
      %c0_138 = arith.constant 0 : index
      %119 = vector.load %arg16[%118, %c0_137, %c0_138] : memref<5x5x16xf32, #tpu.memory_space<vmem>>, vector<1x5x16xf32>
      %120 = vector.shape_cast %119 : vector<1x5x16xf32> to vector<5x16xf32>
      %121 = vector.shape_cast %117 : vector<5x16xf32> to vector<1x5x16xf32>
      tpu.vector_store %arg16[%118, %c0_137, %c0_138], %121 {strides = array<i32>} : memref<5x5x16xf32, #tpu.memory_space<vmem>>, vector<1x5x16xf32>,
    }
    %c5_i32_9 = arith.constant 5 : i32
    %c0 = arith.constant 0 : index
    %c0_10 = arith.constant 0 : index
    %c0_11 = arith.constant 0 : index
    %4 = vector.load %arg16[%c0, %c0_10, %c0_11] : memref<5x5x16xf32, #tpu.memory_space<vmem>>, vector<1x1x16xf32>
    %5 = vector.shape_cast %4 : vector<1x1x16xf32> to vector<1x16xf32>
    %c0_12 = arith.constant 0 : index
    %c0_13 = arith.constant 0 : index
    %6 = vector.load %arg17[%c0_12, %c0_13] : memref<1x400xf32, #tpu.memory_space<vmem>>, vector<1x16xf32>
    tpu.vector_store %arg17[%c0_12, %c0_13], %5 {strides = array<i32>} : memref<1x400xf32, #tpu.memory_space<vmem>>, vector<1x16xf32>,
    %c0_14 = arith.constant 0 : index
    %c1 = arith.constant 1 : index
    %c0_15 = arith.constant 0 : index
    %7 = vector.load %arg16[%c0_14, %c1, %c0_15] : memref<5x5x16xf32, #tpu.memory_space<vmem>>, vector<1x1x16xf32>
    %8 = vector.shape_cast %7 : vector<1x1x16xf32> to vector<1x16xf32>
    %c0_16 = arith.constant 0 : index
    %c16 = arith.constant 16 : index
    %9 = vector.load %arg17[%c0_16, %c16] : memref<1x400xf32, #tpu.memory_space<vmem>>, vector<1x16xf32>
    tpu.vector_store %arg17[%c0_16, %c16], %8 {strides = array<i32>} : memref<1x400xf32, #tpu.memory_space<vmem>>, vector<1x16xf32>,
    %c0_17 = arith.constant 0 : index
    %c2 = arith.constant 2 : index
    %c0_18 = arith.constant 0 : index
    %10 = vector.load %arg16[%c0_17, %c2, %c0_18] : memref<5x5x16xf32, #tpu.memory_space<vmem>>, vector<1x1x16xf32>
    %11 = vector.shape_cast %10 : vector<1x1x16xf32> to vector<1x16xf32>
    %c0_19 = arith.constant 0 : index
    %c32 = arith.constant 32 : index
    %12 = vector.load %arg17[%c0_19, %c32] : memref<1x400xf32, #tpu.memory_space<vmem>>, vector<1x16xf32>
    tpu.vector_store %arg17[%c0_19, %c32], %11 {strides = array<i32>} : memref<1x400xf32, #tpu.memory_space<vmem>>, vector<1x16xf32>,
    %c0_20 = arith.constant 0 : index
    %c3 = arith.constant 3 : index
    %c0_21 = arith.constant 0 : index
    %13 = vector.load %arg16[%c0_20, %c3, %c0_21] : memref<5x5x16xf32, #tpu.memory_space<vmem>>, vector<1x1x16xf32>
    %14 = vector.shape_cast %13 : vector<1x1x16xf32> to vector<1x16xf32>
    %c0_22 = arith.constant 0 : index
    %c48 = arith.constant 48 : index
    %15 = vector.load %arg17[%c0_22, %c48] : memref<1x400xf32, #tpu.memory_space<vmem>>, vector<1x16xf32>
    tpu.vector_store %arg17[%c0_22, %c48], %14 {strides = array<i32>} : memref<1x400xf32, #tpu.memory_space<vmem>>, vector<1x16xf32>,
    %c0_23 = arith.constant 0 : index
    %c4 = arith.constant 4 : index
    %c0_24 = arith.constant 0 : index
    %16 = vector.load %arg16[%c0_23, %c4, %c0_24] : memref<5x5x16xf32, #tpu.memory_space<vmem>>, vector<1x1x16xf32>
    %17 = vector.shape_cast %16 : vector<1x1x16xf32> to vector<1x16xf32>
    %c0_25 = arith.constant 0 : index
    %c64 = arith.constant 64 : index
    %18 = vector.load %arg17[%c0_25, %c64] : memref<1x400xf32, #tpu.memory_space<vmem>>, vector<1x16xf32>
    tpu.vector_store %arg17[%c0_25, %c64], %17 {strides = array<i32>} : memref<1x400xf32, #tpu.memory_space<vmem>>, vector<1x16xf32>,
    %c1_26 = arith.constant 1 : index
    %c0_27 = arith.constant 0 : index
    %c0_28 = arith.constant 0 : index
    %19 = vector.load %arg16[%c1_26, %c0_27, %c0_28] : memref<5x5x16xf32, #tpu.memory_space<vmem>>, vector<1x1x16xf32>
    %20 = vector.shape_cast %19 : vector<1x1x16xf32> to vector<1x16xf32>
    %c0_29 = arith.constant 0 : index
    %c80 = arith.constant 80 : index
    %21 = vector.load %arg17[%c0_29, %c80] : memref<1x400xf32, #tpu.memory_space<vmem>>, vector<1x16xf32>
    tpu.vector_store %arg17[%c0_29, %c80], %20 {strides = array<i32>} : memref<1x400xf32, #tpu.memory_space<vmem>>, vector<1x16xf32>,
    %c1_30 = arith.constant 1 : index
    %c1_31 = arith.constant 1 : index
    %c0_32 = arith.constant 0 : index
    %22 = vector.load %arg16[%c1_30, %c1_31, %c0_32] : memref<5x5x16xf32, #tpu.memory_space<vmem>>, vector<1x1x16xf32>
    %23 = vector.shape_cast %22 : vector<1x1x16xf32> to vector<1x16xf32>
    %c0_33 = arith.constant 0 : index
    %c96 = arith.constant 96 : index
    %24 = vector.load %arg17[%c0_33, %c96] : memref<1x400xf32, #tpu.memory_space<vmem>>, vector<1x16xf32>
    tpu.vector_store %arg17[%c0_33, %c96], %23 {strides = array<i32>} : memref<1x400xf32, #tpu.memory_space<vmem>>, vector<1x16xf32>,
    %c1_34 = arith.constant 1 : index
    %c2_35 = arith.constant 2 : index
    %c0_36 = arith.constant 0 : index
    %25 = vector.load %arg16[%c1_34, %c2_35, %c0_36] : memref<5x5x16xf32, #tpu.memory_space<vmem>>, vector<1x1x16xf32>
    %26 = vector.shape_cast %25 : vector<1x1x16xf32> to vector<1x16xf32>
    %c0_37 = arith.constant 0 : index
    %c112 = arith.constant 112 : index
    %27 = vector.load %arg17[%c0_37, %c112] : memref<1x400xf32, #tpu.memory_space<vmem>>, vector<1x16xf32>
    tpu.vector_store %arg17[%c0_37, %c112], %26 {strides = array<i32>} : memref<1x400xf32, #tpu.memory_space<vmem>>, vector<1x16xf32>,
    %c1_38 = arith.constant 1 : index
    %c3_39 = arith.constant 3 : index
    %c0_40 = arith.constant 0 : index
    %28 = vector.load %arg16[%c1_38, %c3_39, %c0_40] : memref<5x5x16xf32, #tpu.memory_space<vmem>>, vector<1x1x16xf32>
    %29 = vector.shape_cast %28 : vector<1x1x16xf32> to vector<1x16xf32>
    %c0_41 = arith.constant 0 : index
    %c128 = arith.constant 128 : index
    %30 = vector.load %arg17[%c0_41, %c128] : memref<1x400xf32, #tpu.memory_space<vmem>>, vector<1x16xf32>
    tpu.vector_store %arg17[%c0_41, %c128], %29 {strides = array<i32>} : memref<1x400xf32, #tpu.memory_space<vmem>>, vector<1x16xf32>,
    %c1_42 = arith.constant 1 : index
    %c4_43 = arith.constant 4 : index
    %c0_44 = arith.constant 0 : index
    %31 = vector.load %arg16[%c1_42, %c4_43, %c0_44] : memref<5x5x16xf32, #tpu.memory_space<vmem>>, vector<1x1x16xf32>
    %32 = vector.shape_cast %31 : vector<1x1x16xf32> to vector<1x16xf32>
    %c0_45 = arith.constant 0 : index
    %c144 = arith.constant 144 : index
    %33 = vector.load %arg17[%c0_45, %c144] : memref<1x400xf32, #tpu.memory_space<vmem>>, vector<1x16xf32>
    tpu.vector_store %arg17[%c0_45, %c144], %32 {strides = array<i32>} : memref<1x400xf32, #tpu.memory_space<vmem>>, vector<1x16xf32>,
    %c2_46 = arith.constant 2 : index
    %c0_47 = arith.constant 0 : index
    %c0_48 = arith.constant 0 : index
    %34 = vector.load %arg16[%c2_46, %c0_47, %c0_48] : memref<5x5x16xf32, #tpu.memory_space<vmem>>, vector<1x1x16xf32>
    %35 = vector.shape_cast %34 : vector<1x1x16xf32> to vector<1x16xf32>
    %c0_49 = arith.constant 0 : index
    %c160 = arith.constant 160 : index
    %36 = vector.load %arg17[%c0_49, %c160] : memref<1x400xf32, #tpu.memory_space<vmem>>, vector<1x16xf32>
    tpu.vector_store %arg17[%c0_49, %c160], %35 {strides = array<i32>} : memref<1x400xf32, #tpu.memory_space<vmem>>, vector<1x16xf32>,
    %c2_50 = arith.constant 2 : index
    %c1_51 = arith.constant 1 : index
    %c0_52 = arith.constant 0 : index
    %37 = vector.load %arg16[%c2_50, %c1_51, %c0_52] : memref<5x5x16xf32, #tpu.memory_space<vmem>>, vector<1x1x16xf32>
    %38 = vector.shape_cast %37 : vector<1x1x16xf32> to vector<1x16xf32>
    %c0_53 = arith.constant 0 : index
    %c176 = arith.constant 176 : index
    %39 = vector.load %arg17[%c0_53, %c176] : memref<1x400xf32, #tpu.memory_space<vmem>>, vector<1x16xf32>
    tpu.vector_store %arg17[%c0_53, %c176], %38 {strides = array<i32>} : memref<1x400xf32, #tpu.memory_space<vmem>>, vector<1x16xf32>,
    %c2_54 = arith.constant 2 : index
    %c2_55 = arith.constant 2 : index
    %c0_56 = arith.constant 0 : index
    %40 = vector.load %arg16[%c2_54, %c2_55, %c0_56] : memref<5x5x16xf32, #tpu.memory_space<vmem>>, vector<1x1x16xf32>
    %41 = vector.shape_cast %40 : vector<1x1x16xf32> to vector<1x16xf32>
    %c0_57 = arith.constant 0 : index
    %c192 = arith.constant 192 : index
    %42 = vector.load %arg17[%c0_57, %c192] : memref<1x400xf32, #tpu.memory_space<vmem>>, vector<1x16xf32>
    tpu.vector_store %arg17[%c0_57, %c192], %41 {strides = array<i32>} : memref<1x400xf32, #tpu.memory_space<vmem>>, vector<1x16xf32>,
    %c2_58 = arith.constant 2 : index
    %c3_59 = arith.constant 3 : index
    %c0_60 = arith.constant 0 : index
    %43 = vector.load %arg16[%c2_58, %c3_59, %c0_60] : memref<5x5x16xf32, #tpu.memory_space<vmem>>, vector<1x1x16xf32>
    %44 = vector.shape_cast %43 : vector<1x1x16xf32> to vector<1x16xf32>
    %c0_61 = arith.constant 0 : index
    %c208 = arith.constant 208 : index
    %45 = vector.load %arg17[%c0_61, %c208] : memref<1x400xf32, #tpu.memory_space<vmem>>, vector<1x16xf32>
    tpu.vector_store %arg17[%c0_61, %c208], %44 {strides = array<i32>} : memref<1x400xf32, #tpu.memory_space<vmem>>, vector<1x16xf32>,
    %c2_62 = arith.constant 2 : index
    %c4_63 = arith.constant 4 : index
    %c0_64 = arith.constant 0 : index
    %46 = vector.load %arg16[%c2_62, %c4_63, %c0_64] : memref<5x5x16xf32, #tpu.memory_space<vmem>>, vector<1x1x16xf32>
    %47 = vector.shape_cast %46 : vector<1x1x16xf32> to vector<1x16xf32>
    %c0_65 = arith.constant 0 : index
    %c224 = arith.constant 224 : index
    %48 = vector.load %arg17[%c0_65, %c224] : memref<1x400xf32, #tpu.memory_space<vmem>>, vector<1x16xf32>
    tpu.vector_store %arg17[%c0_65, %c224], %47 {strides = array<i32>} : memref<1x400xf32, #tpu.memory_space<vmem>>, vector<1x16xf32>,
    %c3_66 = arith.constant 3 : index
    %c0_67 = arith.constant 0 : index
    %c0_68 = arith.constant 0 : index
    %49 = vector.load %arg16[%c3_66, %c0_67, %c0_68] : memref<5x5x16xf32, #tpu.memory_space<vmem>>, vector<1x1x16xf32>
    %50 = vector.shape_cast %49 : vector<1x1x16xf32> to vector<1x16xf32>
    %c0_69 = arith.constant 0 : index
    %c240 = arith.constant 240 : index
    %51 = vector.load %arg17[%c0_69, %c240] : memref<1x400xf32, #tpu.memory_space<vmem>>, vector<1x16xf32>
    tpu.vector_store %arg17[%c0_69, %c240], %50 {strides = array<i32>} : memref<1x400xf32, #tpu.memory_space<vmem>>, vector<1x16xf32>,
    %c3_70 = arith.constant 3 : index
    %c1_71 = arith.constant 1 : index
    %c0_72 = arith.constant 0 : index
    %52 = vector.load %arg16[%c3_70, %c1_71, %c0_72] : memref<5x5x16xf32, #tpu.memory_space<vmem>>, vector<1x1x16xf32>
    %53 = vector.shape_cast %52 : vector<1x1x16xf32> to vector<1x16xf32>
    %c0_73 = arith.constant 0 : index
    %c256 = arith.constant 256 : index
    %54 = vector.load %arg17[%c0_73, %c256] : memref<1x400xf32, #tpu.memory_space<vmem>>, vector<1x16xf32>
    tpu.vector_store %arg17[%c0_73, %c256], %53 {strides = array<i32>} : memref<1x400xf32, #tpu.memory_space<vmem>>, vector<1x16xf32>,
    %c3_74 = arith.constant 3 : index
    %c2_75 = arith.constant 2 : index
    %c0_76 = arith.constant 0 : index
    %55 = vector.load %arg16[%c3_74, %c2_75, %c0_76] : memref<5x5x16xf32, #tpu.memory_space<vmem>>, vector<1x1x16xf32>
    %56 = vector.shape_cast %55 : vector<1x1x16xf32> to vector<1x16xf32>
    %c0_77 = arith.constant 0 : index
    %c272 = arith.constant 272 : index
    %57 = vector.load %arg17[%c0_77, %c272] : memref<1x400xf32, #tpu.memory_space<vmem>>, vector<1x16xf32>
    tpu.vector_store %arg17[%c0_77, %c272], %56 {strides = array<i32>} : memref<1x400xf32, #tpu.memory_space<vmem>>, vector<1x16xf32>,
    %c3_78 = arith.constant 3 : index
    %c3_79 = arith.constant 3 : index
    %c0_80 = arith.constant 0 : index
    %58 = vector.load %arg16[%c3_78, %c3_79, %c0_80] : memref<5x5x16xf32, #tpu.memory_space<vmem>>, vector<1x1x16xf32>
    %59 = vector.shape_cast %58 : vector<1x1x16xf32> to vector<1x16xf32>
    %c0_81 = arith.constant 0 : index
    %c288 = arith.constant 288 : index
    %60 = vector.load %arg17[%c0_81, %c288] : memref<1x400xf32, #tpu.memory_space<vmem>>, vector<1x16xf32>
    tpu.vector_store %arg17[%c0_81, %c288], %59 {strides = array<i32>} : memref<1x400xf32, #tpu.memory_space<vmem>>, vector<1x16xf32>,
    %c3_82 = arith.constant 3 : index
    %c4_83 = arith.constant 4 : index
    %c0_84 = arith.constant 0 : index
    %61 = vector.load %arg16[%c3_82, %c4_83, %c0_84] : memref<5x5x16xf32, #tpu.memory_space<vmem>>, vector<1x1x16xf32>
    %62 = vector.shape_cast %61 : vector<1x1x16xf32> to vector<1x16xf32>
    %c0_85 = arith.constant 0 : index
    %c304 = arith.constant 304 : index
    %63 = vector.load %arg17[%c0_85, %c304] : memref<1x400xf32, #tpu.memory_space<vmem>>, vector<1x16xf32>
    tpu.vector_store %arg17[%c0_85, %c304], %62 {strides = array<i32>} : memref<1x400xf32, #tpu.memory_space<vmem>>, vector<1x16xf32>,
    %c4_86 = arith.constant 4 : index
    %c0_87 = arith.constant 0 : index
    %c0_88 = arith.constant 0 : index
    %64 = vector.load %arg16[%c4_86, %c0_87, %c0_88] : memref<5x5x16xf32, #tpu.memory_space<vmem>>, vector<1x1x16xf32>
    %65 = vector.shape_cast %64 : vector<1x1x16xf32> to vector<1x16xf32>
    %c0_89 = arith.constant 0 : index
    %c320 = arith.constant 320 : index
    %66 = vector.load %arg17[%c0_89, %c320] : memref<1x400xf32, #tpu.memory_space<vmem>>, vector<1x16xf32>
    tpu.vector_store %arg17[%c0_89, %c320], %65 {strides = array<i32>} : memref<1x400xf32, #tpu.memory_space<vmem>>, vector<1x16xf32>,
    %c4_90 = arith.constant 4 : index
    %c1_91 = arith.constant 1 : index
    %c0_92 = arith.constant 0 : index
    %67 = vector.load %arg16[%c4_90, %c1_91, %c0_92] : memref<5x5x16xf32, #tpu.memory_space<vmem>>, vector<1x1x16xf32>
    %68 = vector.shape_cast %67 : vector<1x1x16xf32> to vector<1x16xf32>
    %c0_93 = arith.constant 0 : index
    %c336 = arith.constant 336 : index
    %69 = vector.load %arg17[%c0_93, %c336] : memref<1x400xf32, #tpu.memory_space<vmem>>, vector<1x16xf32>
    tpu.vector_store %arg17[%c0_93, %c336], %68 {strides = array<i32>} : memref<1x400xf32, #tpu.memory_space<vmem>>, vector<1x16xf32>,
    %c4_94 = arith.constant 4 : index
    %c2_95 = arith.constant 2 : index
    %c0_96 = arith.constant 0 : index
    %70 = vector.load %arg16[%c4_94, %c2_95, %c0_96] : memref<5x5x16xf32, #tpu.memory_space<vmem>>, vector<1x1x16xf32>
    %71 = vector.shape_cast %70 : vector<1x1x16xf32> to vector<1x16xf32>
    %c0_97 = arith.constant 0 : index
    %c352 = arith.constant 352 : index
    %72 = vector.load %arg17[%c0_97, %c352] : memref<1x400xf32, #tpu.memory_space<vmem>>, vector<1x16xf32>
    tpu.vector_store %arg17[%c0_97, %c352], %71 {strides = array<i32>} : memref<1x400xf32, #tpu.memory_space<vmem>>, vector<1x16xf32>,
    %c4_98 = arith.constant 4 : index
    %c3_99 = arith.constant 3 : index
    %c0_100 = arith.constant 0 : index
    %73 = vector.load %arg16[%c4_98, %c3_99, %c0_100] : memref<5x5x16xf32, #tpu.memory_space<vmem>>, vector<1x1x16xf32>
    %74 = vector.shape_cast %73 : vector<1x1x16xf32> to vector<1x16xf32>
    %c0_101 = arith.constant 0 : index
    %c368 = arith.constant 368 : index
    %75 = vector.load %arg17[%c0_101, %c368] : memref<1x400xf32, #tpu.memory_space<vmem>>, vector<1x16xf32>
    tpu.vector_store %arg17[%c0_101, %c368], %74 {strides = array<i32>} : memref<1x400xf32, #tpu.memory_space<vmem>>, vector<1x16xf32>,
    %c4_102 = arith.constant 4 : index
    %c4_103 = arith.constant 4 : index
    %c0_104 = arith.constant 0 : index
    %76 = vector.load %arg16[%c4_102, %c4_103, %c0_104] : memref<5x5x16xf32, #tpu.memory_space<vmem>>, vector<1x1x16xf32>
    %77 = vector.shape_cast %76 : vector<1x1x16xf32> to vector<1x16xf32>
    %c0_105 = arith.constant 0 : index
    %c384 = arith.constant 384 : index
    %78 = vector.load %arg17[%c0_105, %c384] : memref<1x400xf32, #tpu.memory_space<vmem>>, vector<1x16xf32>
    tpu.vector_store %arg17[%c0_105, %c384], %77 {strides = array<i32>} : memref<1x400xf32, #tpu.memory_space<vmem>>, vector<1x16xf32>,
    %c0_106 = arith.constant 0 : index
    %c0_107 = arith.constant 0 : index
    %79 = vector.load %arg17[%c0_106, %c0_107] : memref<1x400xf32, #tpu.memory_space<vmem>>, vector<1x400xf32>
    %c0_108 = arith.constant 0 : index
    %c0_109 = arith.constant 0 : index
    %80 = vector.load %arg6[%c0_108, %c0_109] : memref<400x128xf32, #tpu.memory_space<vmem>>, vector<400x128xf32>
    %cst = arith.constant dense<0.000000e+00> : vector<1x128xf32>
    %81 = tpu.matmul %79, %80, %cst {dimension_numbers = #tpu.dot_dimension_numbers<[1], [0], [0], [1], [0, 0, 1, 1], [], []>} : vector<1x400xf32>, vector<400x128xf32>, vector<1x128xf32> -> vector<1x128xf32>
    %c0_110 = arith.constant 0 : index
    %c0_111 = arith.constant 0 : index
    %82 = vector.load %arg7[%c0_110, %c0_111] : memref<1x128xf32, #tpu.memory_space<vmem>>, vector<1x128xf32>
    %83 = arith.addf %81, %82 : vector<1x128xf32>
    %cst_112 = arith.constant 0.000000e+00 : f32
    %84 = vector.broadcast %cst_112 : f32 to vector<1x128xf32>
    %85 = arith.maximumf %83, %84 : vector<1x128xf32>
    %c0_113 = arith.constant 0 : index
    %c0_114 = arith.constant 0 : index
    %86 = vector.load %arg8[%c0_113, %c0_114] : memref<128x128xf32, #tpu.memory_space<vmem>>, vector<128x128xf32>
    %cst_115 = arith.constant dense<0.000000e+00> : vector<1x128xf32>
    %87 = tpu.matmul %85, %86, %cst_115 {dimension_numbers = #tpu.dot_dimension_numbers<[1], [0], [0], [1], [0, 0, 1, 1], [], []>} : vector<1x128xf32>, vector<128x128xf32>, vector<1x128xf32> -> vector<1x128xf32>
    %c0_116 = arith.constant 0 : index
    %c0_117 = arith.constant 0 : index
    %88 = vector.load %arg9[%c0_116, %c0_117] : memref<1x128xf32, #tpu.memory_space<vmem>>, vector<1x128xf32>
    %89 = arith.addf %87, %88 : vector<1x128xf32>
    %cst_118 = arith.constant 0.000000e+00 : f32
    %90 = vector.broadcast %cst_118 : f32 to vector<1x128xf32>
    %91 = arith.maximumf %89, %90 : vector<1x128xf32>
    %c0_119 = arith.constant 0 : index
    %c0_120 = arith.constant 0 : index
    %c0_121 = arith.constant 0 : index
    %92 = vector.load %arg10[%c0_119, %c0_120, %c0_121] : memref<1x1x128xf32, #tpu.memory_space<vmem>>, vector<1x1x128xf32>
    %93 = vector.shape_cast %92 : vector<1x1x128xf32> to vector<1x128xf32>
    %94 = vector.shape_cast %91 : vector<1x128xf32> to vector<1x1x128xf32>
    tpu.vector_store %arg10[%c0_119, %c0_120, %c0_121], %94 {strides = array<i32>} : memref<1x1x128xf32, #tpu.memory_space<vmem>>, vector<1x1x128xf32>,
    return
  }
  func.func @transform_0(%arg0: i32) -> (i32, i32, i32, i32) {
    %c0_i32 = arith.constant 0 : i32
    %c0_i32_0 = arith.constant 0 : i32
    %c0_i32_1 = arith.constant 0 : i32
    %c0_i32_2 = arith.constant 0 : i32
    return %arg0, %c0_i32, %c0_i32_0, %c0_i32_1 : i32, i32, i32, i32
  }
  func.func @transform_1(%arg0: i32) -> (i32, i32) {
    %c0_i32 = arith.constant 0 : i32
    %c0_i32_0 = arith.constant 0 : i32
    %c0_i32_1 = arith.constant 0 : i32
    return %c0_i32, %c0_i32_0 : i32, i32
  }
  func.func @transform_2(%arg0: i32) -> (i32, i32) {
    %c0_i32 = arith.constant 0 : i32
    %c0_i32_0 = arith.constant 0 : i32
    %c0_i32_1 = arith.constant 0 : i32
    return %c0_i32, %c0_i32_0 : i32, i32
  }
  func.func @transform_3(%arg0: i32) -> (i32, i32) {
    %c0_i32 = arith.constant 0 : i32
    %c0_i32_0 = arith.constant 0 : i32
    %c0_i32_1 = arith.constant 0 : i32
    return %c0_i32, %c0_i32_0 : i32, i32
  }
  func.func @transform_4(%arg0: i32) -> (i32, i32) {
    %c0_i32 = arith.constant 0 : i32
    %c0_i32_0 = arith.constant 0 : i32
    %c0_i32_1 = arith.constant 0 : i32
    return %c0_i32, %c0_i32_0 : i32, i32
  }
  func.func @transform_5(%arg0: i32) -> (i32, i32) {
    %c0_i32 = arith.constant 0 : i32
    %c0_i32_0 = arith.constant 0 : i32
    %c0_i32_1 = arith.constant 0 : i32
    return %c0_i32, %c0_i32_0 : i32, i32
  }
  func.func @transform_6(%arg0: i32) -> (i32, i32) {
    %c0_i32 = arith.constant 0 : i32
    %c0_i32_0 = arith.constant 0 : i32
    %c0_i32_1 = arith.constant 0 : i32
    return %c0_i32, %c0_i32_0 : i32, i32
  }
  func.func @transform_7(%arg0: i32) -> (i32, i32) {
    %c0_i32 = arith.constant 0 : i32
    %c0_i32_0 = arith.constant 0 : i32
    %c0_i32_1 = arith.constant 0 : i32
    return %c0_i32, %c0_i32_0 : i32, i32
  }
  func.func @transform_8(%arg0: i32) -> (i32, i32) {
    %c0_i32 = arith.constant 0 : i32
    %c0_i32_0 = arith.constant 0 : i32
    %c0_i32_1 = arith.constant 0 : i32
    return %c0_i32, %c0_i32_0 : i32, i32
  }
  func.func @transform_9(%arg0: i32) -> (i32, i32, i32) {
    %c0_i32 = arith.constant 0 : i32
    %c0_i32_0 = arith.constant 0 : i32
    %c0_i32_1 = arith.constant 0 : i32
    return %arg0, %c0_i32, %c0_i32_0 : i32, i32, i32
  }
}

</mosaic_0001>

<llo_original>
// kernel: classifier_forward.1
$region0: #{classifier_forward.1}
  #allocation0 [shape = 'u32[]', space=smem, size = 0x4, offset = 0x4, fixed_abs, tag = 'smem constant byte address 0x4 - core index']
  #allocation1 [shape = 'u32[144,128]{1,0:T(1,128)}', space=vmem, size = 0x12000, scoped, tag = 'internal scratch']
  #allocation2 [shape = 'f32[28,75]{1,0:T(8,128)}', space=vmem, size = 0x4000, scoped, tag = 'scratch operand']
  #allocation3 [shape = 'f32[28,28,6]{2,1,0:T(8,128)}', space=vmem, size = 0x70000, scoped, tag = 'scratch operand']
  #allocation4 [shape = 'f32[14,14,6]{2,1,0:T(8,128)}', space=vmem, size = 0x1c000, scoped, tag = 'scratch operand']
  #allocation5 [shape = 'f32[10,150]{1,0:T(8,128)}', space=vmem, size = 0x4000, scoped, tag = 'scratch operand']
  #allocation6 [shape = 'f32[10,10,16]{2,1,0:T(8,128)}', space=vmem, size = 0x14000, scoped, tag = 'scratch operand']
  #allocation7 [shape = 'f32[5,5,16]{2,1,0:T(8,128)}', space=vmem, size = 0x5000, scoped, tag = 'scratch operand']
  #allocation8 [shape = 'f32[1,400]{1,0:T(1,128)}', space=vmem, size = 0x800, scoped, tag = 'scratch operand']
  %s0 = inlined_call_operand.vmem [shape: f32[4,32,32,3], index: 0, kind: input, shape index: {}]
  %s1 = inlined_call_operand.vmem [shape: f32[75,6], index: 1, kind: input, shape index: {}]
  %s2 = inlined_call_operand.vmem [shape: f32[1,6], index: 2, kind: input, shape index: {}]
  %s3 = inlined_call_operand.vmem [shape: f32[150,16], index: 3, kind: input, shape index: {}]
  %s4 = inlined_call_operand.vmem [shape: f32[1,16], index: 4, kind: input, shape index: {}]
  %s5 = inlined_call_operand.vmem [shape: f32[400,128], index: 5, kind: input, shape index: {}]
  %s6 = inlined_call_operand.vmem [shape: f32[1,128], index: 6, kind: input, shape index: {}]
  %s7 = inlined_call_operand.vmem [shape: f32[128,128], index: 7, kind: input, shape index: {}]
  %s8 = inlined_call_operand.vmem [shape: f32[1,128], index: 8, kind: input, shape index: {}]
  %s9 = inlined_call_operand.hbm [shape: f32[4,1,128], index: 9, kind: output, shape index: {}]
  %s10 = sld [smem:[#allocation0]]
  $region97: #{classifier_forward.1} parent=0
    _
  %s12 = ssub.s32 1, %s10
  %s13 = scalar_select 0, %s12, %s10
  $region1: #{classifier_forward.1} parent=0
    #allocation9 [shape = 'u8[1024]{0}', space=vmem, size = 0x400, scoped, tag = 'output window, operand 0']
    #allocation10 [shape = 's32[2]{0}', space=sflag, size = 0x8, scoped, tag = 'scoped memory for classifier_forward.1']
    %14 = vsyncpa [#allocation10], 0
    %s15 = scalar_lea.sflag [#allocation10], 1
    %16 = vsyncpa %s15, 0
    loop: start=0, step=1, limit=6
    $region2: #{classifier_forward.1} parent=1 // loop_pre_header
      _
    $region3: #{classifier_forward.1} parent=1 // loop_header
      %s18 = sphi 0, %s22
      %p19 = scmp.ge.s32.totalorder %s18, 6
      %s28 = sphi 0, %s30
      %s31 = sphi 0, %s28
      %s32 = sphi 0, %s31
      %s48 = sphi 0, %s32
      %s52 = sphi 0, %s52
      %s54 = sphi 0, %s52
      %s55 = sphi 0, %s54
      %s69 = sphi 0, %s55
      %s73 = sphi 0, %s73
      %s75 = sphi 0, %s73
      %s76 = sphi 0, %s75
      %s90 = sphi 0, %s76
      %s94 = sphi 0, %s94
      %s96 = sphi 0, %s94
      %s97 = sphi 0, %s96
      %s111 = sphi 0, %s97
      %s115 = sphi 0, %s115
      %s117 = sphi 0, %s115
      %s118 = sphi 0, %s117
      %s132 = sphi 0, %s118
      %s136 = sphi 0, %s136
      %s138 = sphi 0, %s136
      %s139 = sphi 0, %s138
      %s153 = sphi 0, %s139
      %s157 = sphi 0, %s157
      %s159 = sphi 0, %s157
      %s160 = sphi 0, %s159
      %s174 = sphi 0, %s160
      %s178 = sphi 0, %s178
      %s180 = sphi 0, %s178
      %s181 = sphi 0, %s180
      %s195 = sphi 0, %s181
      %s199 = sphi 0, %s199
      %s201 = sphi 0, %s199
      %s202 = sphi 0, %s201
      %s216 = sphi 0, %s202
      %s222 = sphi 0, %s224
      %s225 = sphi 0, %s222
      %s226 = sphi 0, %s225
      %s242 = sphi 0, %s226
    $region4: #{classifier_forward.1} parent=1 // loop_header_branch
      %21 = sbr.rel (%p19) target = $region8
    $region5: #{classifier_forward.1} parent=1 // loop_body
      %s23 = ssub.s32 %s18, 1
      %s24 = ssub.s32 %s18, 2
      %s25 = sadd.s32 %s18, 1
      %s26 = ssub.s32 %s18, %s25
      %p27 = scmp.eq.s32.totalorder %s26, 0
      %s29 = sadd.s32 %s28, 1
      %s30 = scalar_select %p27, %s28, %s29
      %p33 = pneg %p27
      %p34 = scmp.eq.s32.totalorder %s18, 3
      %p35 = por %p33, %p34
      %p36 = scmp.ne.s32.totalorder %s28, %s31
      %p37 = scmp.eq.s32.totalorder %s18, 0
      %p38 = por %p36, %p37
      %p39 = scmp.ne.s32.totalorder %s28, %s31
      %p40 = scmp.eq.s32.totalorder %s23, 3
      %p41 = por %p39, %p40
      %p42 = scmp.ne.s32.totalorder %s31, %s32
      %p43 = scmp.eq.s32.totalorder %s23, 0
      %p44 = por %p42, %p43
      %p45 = scmp.ne.s32.totalorder %s31, %s32
      %p46 = scmp.eq.s32.totalorder %s24, 3
      %p47 = por %p45, %p46
      %p49 = scmp.ne.s32.totalorder %s32, %s48
      %p50 = scmp.eq.s32.totalorder %s24, 0
      %p51 = por %p49, %p50
      %s53 = sadd.s32 %s52, 1
      %p56 = scmp.eq.s32.totalorder %s18, 3
      %p57 = scmp.ne.s32.totalorder %s52, %s54
      %p58 = scmp.eq.s32.totalorder %s18, 0
      %p59 = por %p57, %p58
      %p60 = scmp.ne.s32.totalorder %s52, %s54
      %p61 = scmp.eq.s32.totalorder %s23, 3
      %p62 = por %p60, %p61
      %p63 = scmp.ne.s32.totalorder %s54, %s55
      %p64 = scmp.eq.s32.totalorder %s23, 0
      %p65 = por %p63, %p64
      %p66 = scmp.ne.s32.totalorder %s54, %s55
      %p67 = scmp.eq.s32.totalorder %s24, 3
      %p68 = por %p66, %p67
      %p70 = scmp.ne.s32.totalorder %s55, %s69
      %p71 = scmp.eq.s32.totalorder %s24, 0
      %p72 = por %p70, %p71
      %s74 = sadd.s32 %s73, 1
      %p77 = scmp.eq.s32.totalorder %s18, 3
      %p78 = scmp.ne.s32.totalorder %s73, %s75
      %p79 = scmp.eq.s32.totalorder %s18, 0
      %p80 = por %p78, %p79
      %p81 = scmp.ne.s32.totalorder %s73, %s75
      %p82 = scmp.eq.s32.totalorder %s23, 3
      %p83 = por %p81, %p82
      %p84 = scmp.ne.s32.totalorder %s75, %s76
      %p85 = scmp.eq.s32.totalorder %s23, 0
      %p86 = por %p84, %p85
      %p87 = scmp.ne.s32.totalorder %s75, %s76
      %p88 = scmp.eq.s32.totalorder %s24, 3
      %p89 = por %p87, %p88
      %p91 = scmp.ne.s32.totalorder %s76, %s90
      %p92 = scmp.eq.s32.totalorder %s24, 0
      %p93 = por %p91, %p92
      %s95 = sadd.s32 %s94, 1
      %p98 = scmp.eq.s32.totalorder %s18, 3
      %p99 = scmp.ne.s32.totalorder %s94, %s96
      %p100 = scmp.eq.s32.totalorder %s18, 0
      %p101 = por %p99, %p100
      %p102 = scmp.ne.s32.totalorder %s94, %s96
      %p103 = scmp.eq.s32.totalorder %s23, 3
      %p104 = por %p102, %p103
      %p105 = scmp.ne.s32.totalorder %s96, %s97
      %p106 = scmp.eq.s32.totalorder %s23, 0
      %p107 = por %p105, %p106
      %p108 = scmp.ne.s32.totalorder %s96, %s97
      %p109 = scmp.eq.s32.totalorder %s24, 3
      %p110 = por %p108, %p109
      %p112 = scmp.ne.s32.totalorder %s97, %s111
      %p113 = scmp.eq.s32.totalorder %s24, 0
      %p114 = por %p112, %p113
      %s116 = sadd.s32 %s115, 1
      %p119 = scmp.eq.s32.totalorder %s18, 3
      %p120 = scmp.ne.s32.totalorder %s115, %s117
      %p121 = scmp.eq.s32.totalorder %s18, 0
      %p122 = por %p120, %p121
      %p123 = scmp.ne.s32.totalorder %s115, %s117
      %p124 = scmp.eq.s32.totalorder %s23, 3
      %p125 = por %p123, %p124
      %p126 = scmp.ne.s32.totalorder %s117, %s118
      %p127 = scmp.eq.s32.totalorder %s23, 0
      %p128 = por %p126, %p127
      %p129 = scmp.ne.s32.totalorder %s117, %s118
      %p130 = scmp.eq.s32.totalorder %s24, 3
      %p131 = por %p129, %p130
      %p133 = scmp.ne.s32.totalorder %s118, %s132
      %p134 = scmp.eq.s32.totalorder %s24, 0
      %p135 = por %p133, %p134
      %s137 = sadd.s32 %s136, 1
      %p140 = scmp.eq.s32.totalorder %s18, 3
      %p141 = scmp.ne.s32.totalorder %s136, %s138
      %p142 = scmp.eq.s32.totalorder %s18, 0
      %p143 = por %p141, %p142
      %p144 = scmp.ne.s32.totalorder %s136, %s138
      %p145 = scmp.eq.s32.totalorder %s23, 3
      %p146 = por %p144, %p145
      %p147 = scmp.ne.s32.totalorder %s138, %s139
      %p148 = scmp.eq.s32.totalorder %s23, 0
      %p149 = por %p147, %p148
      %p150 = scmp.ne.s32.totalorder %s138, %s139
      %p151 = scmp.eq.s32.totalorder %s24, 3
      %p152 = por %p150, %p151
      %p154 = scmp.ne.s32.totalorder %s139, %s153
      %p155 = scmp.eq.s32.totalorder %s24, 0
      %p156 = por %p154, %p155
      %s158 = sadd.s32 %s157, 1
      %p161 = scmp.eq.s32.totalorder %s18, 3
      %p162 = scmp.ne.s32.totalorder %s157, %s159
      %p163 = scmp.eq.s32.totalorder %s18, 0
      %p164 = por %p162, %p163
      %p165 = scmp.ne.s32.totalorder %s157, %s159
      %p166 = scmp.eq.s32.totalorder %s23, 3
      %p167 = por %p165, %p166
      %p168 = scmp.ne.s32.totalorder %s159, %s160
      %p169 = scmp.eq.s32.totalorder %s23, 0
      %p170 = por %p168, %p169
      %p171 = scmp.ne.s32.totalorder %s159, %s160
      %p172 = scmp.eq.s32.totalorder %s24, 3
      %p173 = por %p171, %p172
      %p175 = scmp.ne.s32.totalorder %s160, %s174
      %p176 = scmp.eq.s32.totalorder %s24, 0
      %p177 = por %p175, %p176
      %s179 = sadd.s32 %s178, 1
      %p182 = scmp.eq.s32.totalorder %s18, 3
      %p183 = scmp.ne.s32.totalorder %s178, %s180
      %p184 = scmp.eq.s32.totalorder %s18, 0
      %p185 = por %p183, %p184
      %p186 = scmp.ne.s32.totalorder %s178, %s180
      %p187 = scmp.eq.s32.totalorder %s23, 3
      %p188 = por %p186, %p187
      %p189 = scmp.ne.s32.totalorder %s180, %s181
      %p190 = scmp.eq.s32.totalorder %s23, 0
      %p191 = por %p189, %p190
      %p192 = scmp.ne.s32.totalorder %s180, %s181
      %p193 = scmp.eq.s32.totalorder %s24, 3
      %p194 = por %p192, %p193
      %p196 = scmp.ne.s32.totalorder %s181, %s195
      %p197 = scmp.eq.s32.totalorder %s24, 0
      %p198 = por %p196, %p197
      %s200 = sadd.s32 %s199, 1
      %p203 = scmp.eq.s32.totalorder %s18, 3
      %p204 = scmp.ne.s32.totalorder %s199, %s201
      %p205 = scmp.eq.s32.totalorder %s18, 0
      %p206 = por %p204, %p205
      %p207 = scmp.ne.s32.totalorder %s199, %s201
      %p208 = scmp.eq.s32.totalorder %s23, 3
      %p209 = por %p207, %p208
      %p210 = scmp.ne.s32.totalorder %s201, %s202
      %p211 = scmp.eq.s32.totalorder %s23, 0
      %p212 = por %p210, %p211
      %p213 = scmp.ne.s32.totalorder %s201, %s202
      %p214 = scmp.eq.s32.totalorder %s24, 3
      %p215 = por %p213, %p214
      %p217 = scmp.ne.s32.totalorder %s202, %s216
      %p218 = scmp.eq.s32.totalorder %s24, 0
      %p219 = por %p217, %p218
      %s220 = ssub.s32 %s18, %s25
      %p221 = scmp.eq.s32.totalorder %s220, 0
      %s223 = sadd.s32 %s222, 1
      %s224 = scalar_select %p221, %s222, %s223
      %p227 = pneg %p221
      %p228 = scmp.eq.s32.totalorder %s18, 3
      %p229 = por %p227, %p228
      %p230 = scmp.ne.s32.totalorder %s222, %s225
      %p231 = scmp.eq.s32.totalorder %s18, 0
      %p232 = por %p230, %p231
      %p233 = scmp.ne.s32.totalorder %s222, %s225
      %p234 = scmp.eq.s32.totalorder %s23, 3
      %p235 = por %p233, %p234
      %p236 = scmp.ne.s32.totalorder %s225, %s226
      %p237 = scmp.eq.s32.totalorder %s23, 0
      %p238 = por %p236, %p237
      %p239 = scmp.ne.s32.totalorder %s225, %s226
      %p240 = scmp.eq.s32.totalorder %s24, 3
      %p241 = por %p239, %p240
      %p243 = scmp.ne.s32.totalorder %s226, %s242
      %p244 = scmp.eq.s32.totalorder %s24, 0
      %p245 = por %p243, %p244
      %p246 = scmp.le.s32.totalorder 1, %s18
      %p247 = scmp.lt.s32.totalorder %s18, 5
      %p248 = pnand %p246, %p247
      %p249 = pneg %p248
      // Predicated region
      $region9: #{classifier_forward.1} parent=5 // pred_check
        _
      $region10: #{classifier_forward.1} parent=5 // pred_check_branch
        %251 = sbr.rel (%p248) target = $region12
      $region11: #{classifier_forward.1} parent=5 // pred_region
        %s252 = ssub.s32 %s18, 1
        // Predicated region
        $region13: #{classifier_forward.1} parent=11 // pred_check
          %p253 = pneg %p65
        $region14: #{classifier_forward.1} parent=11 // pred_check_branch
          %255 = sbr.rel (%p253) target = $region16
        $region15: #{classifier_forward.1} parent=11 // pred_region
          _
        $region16: #{classifier_forward.1} parent=11 // pred_fallthru
          _
        // Predicated region
        $region17: #{classifier_forward.1} parent=11 // pred_check
          %p256 = pneg %p86
        $region18: #{classifier_forward.1} parent=11 // pred_check_branch
          %258 = sbr.rel (%p256) target = $region20
        $region19: #{classifier_forward.1} parent=11 // pred_region
          _
        $region20: #{classifier_forward.1} parent=11 // pred_fallthru
          _
        // Predicated region
        $region21: #{classifier_forward.1} parent=11 // pred_check
          %p259 = pneg %p107
        $region22: #{classifier_forward.1} parent=11 // pred_check_branch
          %261 = sbr.rel (%p259) target = $region24
        $region23: #{classifier_forward.1} parent=11 // pred_region
          _
        $region24: #{classifier_forward.1} parent=11 // pred_fallthru
          _
        // Predicated region
        $region25: #{classifier_forward.1} parent=11 // pred_check
          %p262 = pneg %p128
        $region26: #{classifier_forward.1} parent=11 // pred_check_branch
          %264 = sbr.rel (%p262) target = $region28
        $region27: #{classifier_forward.1} parent=11 // pred_region
          _
        $region28: #{classifier_forward.1} parent=11 // pred_fallthru
          _
        // Predicated region
        $region29: #{classifier_forward.1} parent=11 // pred_check
          %p265 = pneg %p149
        $region30: #{classifier_forward.1} parent=11 // pred_check_branch
          %267 = sbr.rel (%p265) target = $region32
        $region31: #{classifier_forward.1} parent=11 // pred_region
          _
        $region32: #{classifier_forward.1} parent=11 // pred_fallthru
          _
        // Predicated region
        $region33: #{classifier_forward.1} parent=11 // pred_check
          %p268 = pneg %p170
        $region34: #{classifier_forward.1} parent=11 // pred_check_branch
          %270 = sbr.rel (%p268) target = $region36
        $region35: #{classifier_forward.1} parent=11 // pred_region
          _
        $region36: #{classifier_forward.1} parent=11 // pred_fallthru
          _
        // Predicated region
        $region37: #{classifier_forward.1} parent=11 // pred_check
          %p271 = pneg %p191
        $region38: #{classifier_forward.1} parent=11 // pred_check_branch
          %273 = sbr.rel (%p271) target = $region40
        $region39: #{classifier_forward.1} parent=11 // pred_region
          _
        $region40: #{classifier_forward.1} parent=11 // pred_fallthru
          _
        // Predicated region
        $region41: #{classifier_forward.1} parent=11 // pred_check
          %p274 = pneg %p212
        $region42: #{classifier_forward.1} parent=11 // pred_check_branch
          %276 = sbr.rel (%p274) target = $region44
        $region43: #{classifier_forward.1} parent=11 // pred_region
          _
        $region44: #{classifier_forward.1} parent=11 // pred_fallthru
          _
      $region12: #{classifier_forward.1} parent=5 // pred_fallthru
        _
      %p277 = scmp.lt.s32.totalorder %s18, 4
      // Predicated region
      $region45: #{classifier_forward.1} parent=5 // pred_check
        %p278 = pneg %p277
      $region46: #{classifier_forward.1} parent=5 // pred_check_branch
        %280 = sbr.rel (%p278) target = $region48
      $region47: #{classifier_forward.1} parent=5 // pred_region
        // Predicated region
        $region49: #{classifier_forward.1} parent=47 // pred_check
          %p281 = pneg %p38
        $region50: #{classifier_forward.1} parent=47 // pred_check_branch
          %283 = sbr.rel (%p281) target = $region52
        $region51: #{classifier_forward.1} parent=47 // pred_region
          %p284 = scmp.lt.s32.totalorder %s18, 3
          %s285 = scalar_select %p284, %s18, 3
          %s286 = smul.addr %s285, 128
          %s287 = smul.addr %s286, 8
          %s288 = scalar_lea.vmem %s0, %s287
        $region52: #{classifier_forward.1} parent=47 // pred_fallthru
          _
      $region48: #{classifier_forward.1} parent=5 // pred_fallthru
        _
      %p289 = scmp.le.s32.totalorder 1, %s18
      %p290 = scmp.lt.s32.totalorder %s18, 5
      %p291 = pnand %p289, %p290
      %p292 = pneg %p291
      // Predicated region
      $region53: #{classifier_forward.1} parent=5 // pred_check
        _
      $region54: #{classifier_forward.1} parent=5 // pred_check_branch
        %294 = sbr.rel (%p291) target = $region56
      $region55: #{classifier_forward.1} parent=5 // pred_region
        %s295 = ssub.s32 %s18, 1
        %p296 = scmp.lt.s32.totalorder %s23, 3
        %s297 = scalar_select %p296, %s23, 3
        %s298 = smul.addr %s297, 128
        %s299 = smul.addr %s298, 8
        %s300 = scalar_lea.vmem %s0, %s299
        %p301 = pneg %p44
        %p302 = pneg %p41
        %p303 = pneg %p65
        %p304 = pneg %p62
        %p305 = pneg %p86
        %p306 = pneg %p83
        %p307 = pneg %p107
        %p308 = pneg %p104
        %p309 = pneg %p128
        %p310 = pneg %p125
        %p311 = pneg %p149
        %p312 = pneg %p146
        %p313 = pneg %p170
        %p314 = pneg %p167
        %p315 = pneg %p191
        %p316 = pneg %p188
        %p317 = pneg %p212
        %p318 = pneg %p209
        %p319 = pneg %p238
        %p320 = pneg %p235
        %s321 = sand.u32 %s225, 1
        %s322 = scalar_lea.sflag [#allocation10], %s321
        %s323 = sand.u32 %s225, 1
        %s324 = scalar_lea.vmem [#allocation9], %s323
        %p325 = scmp.lt.s32.totalorder %s23, 3
        %s326 = scalar_select %p325, %s23, 3
        %s327 = smul.addr %s326, 128
        %s328 = smul.addr %s327, 8
        %s329 = scalar_lea.vmem %s0, %s328
        loop: start=0, step=1, limit=28
        $region57: #{classifier_forward.1} parent=55 // loop_pre_header
          _
        $region58: #{classifier_forward.1} parent=55 // loop_header
          %s331 = sphi 0, %s335
          %p332 = scmp.ge.s32.totalorder %s331, 28
        $region59: #{classifier_forward.1} parent=55 // loop_header_branch
          %334 = sbr.rel (%p332) target = $region63
        $region60: #{classifier_forward.1} parent=55 // loop_body
          %s336 = smul.u32 %s331, 32
          %s337 = scalar_lea.vmem %s329, %s336
          %v338 = vld [vmem:[%s337] sm:$0xff]
          %v339 = vld [vmem:[%s337 + $0x8] sm:$0xff]
          %v340 = vld [vmem:[%s337 + $0x10] sm:$0xff]
          %v341 = vld [vmem:[%s337 + $0x18] sm:$0xf]
          %vm342 = vcmask 23552
          %343 = vst.msk [vmem:[#allocation2] sm:$0xff] %vm342, %v338
          %344 = vst.msk [vmem:[#allocation2 + $0x8] sm:$0xff] %vm342, %v339
          %345 = vst.msk [vmem:[#allocation2 + $0x10] sm:$0xff] %vm342, %v340
          %vm346 = vcmask 19456
          %347 = vst.msk [vmem:[#allocation2 + $0x18] sm:$0xf] %vm346, %v341
          %v348 = vld [vmem:[%s337 + $0x1] sm:$0xff]
          %v349 = vld [vmem:[%s337 + $0x9] sm:$0xff]
          %v350 = vld [vmem:[%s337 + $0x11] sm:$0xff]
          %v351 = vld [vmem:[%s337 + $0x19] sm:$0xf]
          %356 = vrot.lane.b32.xlu0 %v348, 3
          %v357 = vpop.permute.xlu0 %356
          %358 = vrot.lane.b32.xlu0 %v349, 3
          %v359 = vpop.permute.xlu0 %358
          %360 = vrot.lane.b32.xlu0 %v350, 3
          %v361 = vpop.permute.xlu0 %360
          %362 = vrot.lane.b32.xlu0 %v351, 3
          %v363 = vpop.permute.xlu0 %362
          %vm368 = vcmask 48152
          %369 = vst.msk [vmem:[#allocation2] sm:$0xff] %vm368, %v357
          %370 = vst.msk [vmem:[#allocation2 + $0x8] sm:$0xff] %vm368, %v359
          %371 = vst.msk [vmem:[#allocation2 + $0x10] sm:$0xff] %vm368, %v361
          %vm372 = vcmask 44056
          %373 = vst.msk [vmem:[#allocation2 + $0x18] sm:$0xf] %vm372, %v363
          %v374 = vld [vmem:[%s337 + $0x2] sm:$0xff]
          %v375 = vld [vmem:[%s337 + $0xa] sm:$0xff]
          %v376 = vld [vmem:[%s337 + $0x12] sm:$0xff]
          %v377 = vld [vmem:[%s337 + $0x1a] sm:$0xf]
          %382 = vrot.lane.b32.xlu0 %v374, 6
          %v383 = vpop.permute.xlu0 %382
          %384 = vrot.lane.b32.xlu0 %v375, 6
          %v385 = vpop.permute.xlu0 %384
          %386 = vrot.lane.b32.xlu0 %v376, 6
          %v387 = vpop.permute.xlu0 %386
          %388 = vrot.lane.b32.xlu0 %v377, 6
          %v389 = vpop.permute.xlu0 %388
          %vm394 = vcmask 72752
          %395 = vst.msk [vmem:[#allocation2] sm:$0xff] %vm394, %v383
          %396 = vst.msk [vmem:[#allocation2 + $0x8] sm:$0xff] %vm394, %v385
          %397 = vst.msk [vmem:[#allocation2 + $0x10] sm:$0xff] %vm394, %v387
          %vm398 = vcmask 68656
          %399 = vst.msk [vmem:[#allocation2 + $0x18] sm:$0xf] %vm398, %v389
          %v400 = vld [vmem:[%s337 + $0x3] sm:$0xff]
          %v401 = vld [vmem:[%s337 + $0xb] sm:$0xff]
          %v402 = vld [vmem:[%s337 + $0x13] sm:$0xff]
          %v403 = vld [vmem:[%s337 + $0x1b] sm:$0xf]
          %408 = vrot.lane.b32.xlu0 %v400, 9
          %v409 = vpop.permute.xlu0 %408
          %410 = vrot.lane.b32.xlu0 %v401, 9
          %v411 = vpop.permute.xlu0 %410
          %412 = vrot.lane.b32.xlu0 %v402, 9
          %v413 = vpop.permute.xlu0 %412
          %414 = vrot.lane.b32.xlu0 %v403, 9
          %v415 = vpop.permute.xlu0 %414
          %vm420 = vcmask 97352
          %421 = vst.msk [vmem:[#allocation2] sm:$0xff] %vm420, %v409
          %422 = vst.msk [vmem:[#allocation2 + $0x8] sm:$0xff] %vm420, %v411
          %423 = vst.msk [vmem:[#allocation2 + $0x10] sm:$0xff] %vm420, %v413
          %vm424 = vcmask 93256
          %425 = vst.msk [vmem:[#allocation2 + $0x18] sm:$0xf] %vm424, %v415
          %v426 = vld [vmem:[%s337 + $0x4] sm:$0xff]
          %v427 = vld [vmem:[%s337 + $0xc] sm:$0xff]
          %v428 = vld [vmem:[%s337 + $0x14] sm:$0xff]
          %v429 = vld [vmem:[%s337 + $0x1c] sm:$0xf]
          %434 = vrot.lane.b32.xlu0 %v426, 12
          %v435 = vpop.permute.xlu0 %434
          %436 = vrot.lane.b32.xlu0 %v427, 12
          %v437 = vpop.permute.xlu0 %436
          %438 = vrot.lane.b32.xlu0 %v428, 12
          %v439 = vpop.permute.xlu0 %438
          %440 = vrot.lane.b32.xlu0 %v429, 12
          %v441 = vpop.permute.xlu0 %440
          %vm446 = vcmask 121952
          %447 = vst.msk [vmem:[#allocation2] sm:$0xff] %vm446, %v435
          %448 = vst.msk [vmem:[#allocation2 + $0x8] sm:$0xff] %vm446, %v437
          %449 = vst.msk [vmem:[#allocation2 + $0x10] sm:$0xff] %vm446, %v439
          %vm450 = vcmask 117856
          %451 = vst.msk [vmem:[#allocation2 + $0x18] sm:$0xf] %vm450, %v441
          %s452 = sadd.s32 %s331, 1
          %s453 = smul.u32 %s452, 32
          %s454 = scalar_lea.vmem %s329, %s453
          %v455 = vld [vmem:[%s454] sm:$0xff]
          %v456 = vld [vmem:[%s454 + $0x8] sm:$0xff]
          %v457 = vld [vmem:[%s454 + $0x10] sm:$0xff]
          %v458 = vld [vmem:[%s454 + $0x18] sm:$0xf]
          %463 = vrot.lane.b32.xlu0 %v455, 15
          %v464 = vpop.permute.xlu0 %463
          %465 = vrot.lane.b32.xlu0 %v456, 15
          %v466 = vpop.permute.xlu0 %465
          %467 = vrot.lane.b32.xlu0 %v457, 15
          %v468 = vpop.permute.xlu0 %467
          %469 = vrot.lane.b32.xlu0 %v458, 15
          %v470 = vpop.permute.xlu0 %469
          %vm475 = vcmask 146552
          %476 = vst.msk [vmem:[#allocation2] sm:$0xff] %vm475, %v464
          %477 = vst.msk [vmem:[#allocation2 + $0x8] sm:$0xff] %vm475, %v466
          %478 = vst.msk [vmem:[#allocation2 + $0x10] sm:$0xff] %vm475, %v468
          %vm479 = vcmask 142456
          %480 = vst.msk [vmem:[#allocation2 + $0x18] sm:$0xf] %vm479, %v470
          %v481 = vld [vmem:[%s454 + $0x1] sm:$0xff]
          %v482 = vld [vmem:[%s454 + $0x9] sm:$0xff]
          %v483 = vld [vmem:[%s454 + $0x11] sm:$0xff]
          %v484 = vld [vmem:[%s454 + $0x19] sm:$0xf]
          %489 = vrot.lane.b32.xlu0 %v481, 18
          %v490 = vpop.permute.xlu0 %489
          %491 = vrot.lane.b32.xlu0 %v482, 18
          %v492 = vpop.permute.xlu0 %491
          %493 = vrot.lane.b32.xlu0 %v483, 18
          %v494 = vpop.permute.xlu0 %493
          %495 = vrot.lane.b32.xlu0 %v484, 18
          %v496 = vpop.permute.xlu0 %495
          %vm501 = vcmask 171152
          %502 = vst.msk [vmem:[#allocation2] sm:$0xff] %vm501, %v490
          %503 = vst.msk [vmem:[#allocation2 + $0x8] sm:$0xff] %vm501, %v492
          %504 = vst.msk [vmem:[#allocation2 + $0x10] sm:$0xff] %vm501, %v494
          %vm505 = vcmask 167056
          %506 = vst.msk [vmem:[#allocation2 + $0x18] sm:$0xf] %vm505, %v496
          %v507 = vld [vmem:[%s454 + $0x2] sm:$0xff]
          %v508 = vld [vmem:[%s454 + $0xa] sm:$0xff]
          %v509 = vld [vmem:[%s454 + $0x12] sm:$0xff]
          %v510 = vld [vmem:[%s454 + $0x1a] sm:$0xf]
          %515 = vrot.lane.b32.xlu0 %v507, 21
          %v516 = vpop.permute.xlu0 %515
          %517 = vrot.lane.b32.xlu0 %v508, 21
          %v518 = vpop.permute.xlu0 %517
          %519 = vrot.lane.b32.xlu0 %v509, 21
          %v520 = vpop.permute.xlu0 %519
          %521 = vrot.lane.b32.xlu0 %v510, 21
          %v522 = vpop.permute.xlu0 %521
          %vm527 = vcmask 195752
          %528 = vst.msk [vmem:[#allocation2] sm:$0xff] %vm527, %v516
          %529 = vst.msk [vmem:[#allocation2 + $0x8] sm:$0xff] %vm527, %v518
          %530 = vst.msk [vmem:[#allocation2 + $0x10] sm:$0xff] %vm527, %v520
          %vm531 = vcmask 191656
          %532 = vst.msk [vmem:[#allocation2 + $0x18] sm:$0xf] %vm531, %v522
          %v533 = vld [vmem:[%s454 + $0x3] sm:$0xff]
          %v534 = vld [vmem:[%s454 + $0xb] sm:$0xff]
          %v535 = vld [vmem:[%s454 + $0x13] sm:$0xff]
          %v536 = vld [vmem:[%s454 + $0x1b] sm:$0xf]
          %541 = vrot.lane.b32.xlu0 %v533, 24
          %v542 = vpop.permute.xlu0 %541
          %543 = vrot.lane.b32.xlu0 %v534, 24
          %v544 = vpop.permute.xlu0 %543
          %545 = vrot.lane.b32.xlu0 %v535, 24
          %v546 = vpop.permute.xlu0 %545
          %547 = vrot.lane.b32.xlu0 %v536, 24
          %v548 = vpop.permute.xlu0 %547
          %vm553 = vcmask 220352
          %554 = vst.msk [vmem:[#allocation2] sm:$0xff] %vm553, %v542
          %555 = vst.msk [vmem:[#allocation2 + $0x8] sm:$0xff] %vm553, %v544
          %556 = vst.msk [vmem:[#allocation2 + $0x10] sm:$0xff] %vm553, %v546
          %vm557 = vcmask 216256
          %558 = vst.msk [vmem:[#allocation2 + $0x18] sm:$0xf] %vm557, %v548
          %v559 = vld [vmem:[%s454 + $0x4] sm:$0xff]
          %v560 = vld [vmem:[%s454 + $0xc] sm:$0xff]
          %v561 = vld [vmem:[%s454 + $0x14] sm:$0xff]
          %v562 = vld [vmem:[%s454 + $0x1c] sm:$0xf]
          %567 = vrot.lane.b32.xlu0 %v559, 27
          %v568 = vpop.permute.xlu0 %567
          %569 = vrot.lane.b32.xlu0 %v560, 27
          %v570 = vpop.permute.xlu0 %569
          %571 = vrot.lane.b32.xlu0 %v561, 27
          %v572 = vpop.permute.xlu0 %571
          %573 = vrot.lane.b32.xlu0 %v562, 27
          %v574 = vpop.permute.xlu0 %573
          %vm579 = vcmask 244952
          %580 = vst.msk [vmem:[#allocation2] sm:$0xff] %vm579, %v568
          %581 = vst.msk [vmem:[#allocation2 + $0x8] sm:$0xff] %vm579, %v570
          %582 = vst.msk [vmem:[#allocation2 + $0x10] sm:$0xff] %vm579, %v572
          %vm583 = vcmask 240856
          %584 = vst.msk [vmem:[#allocation2 + $0x18] sm:$0xf] %vm583, %v574
          %s585 = sadd.s32 %s331, 2
          %s586 = smul.u32 %s585, 32
          %s587 = scalar_lea.vmem %s329, %s586
          %v588 = vld [vmem:[%s587] sm:$0xff]
          %v589 = vld [vmem:[%s587 + $0x8] sm:$0xff]
          %v590 = vld [vmem:[%s587 + $0x10] sm:$0xff]
          %v591 = vld [vmem:[%s587 + $0x18] sm:$0xf]
          %596 = vrot.lane.b32.xlu0 %v588, 30
          %v597 = vpop.permute.xlu0 %596
          %598 = vrot.lane.b32.xlu0 %v589, 30
          %v599 = vpop.permute.xlu0 %598
          %600 = vrot.lane.b32.xlu0 %v590, 30
          %v601 = vpop.permute.xlu0 %600
          %602 = vrot.lane.b32.xlu0 %v591, 30
          %v603 = vpop.permute.xlu0 %602
          %vm608 = vcmask 269552
          %609 = vst.msk [vmem:[#allocation2] sm:$0xff] %vm608, %v597
          %610 = vst.msk [vmem:[#allocation2 + $0x8] sm:$0xff] %vm608, %v599
          %611 = vst.msk [vmem:[#allocation2 + $0x10] sm:$0xff] %vm608, %v601
          %vm612 = vcmask 265456
          %613 = vst.msk [vmem:[#allocation2 + $0x18] sm:$0xf] %vm612, %v603
          %v614 = vld [vmem:[%s587 + $0x1] sm:$0xff]
          %v615 = vld [vmem:[%s587 + $0x9] sm:$0xff]
          %v616 = vld [vmem:[%s587 + $0x11] sm:$0xff]
          %v617 = vld [vmem:[%s587 + $0x19] sm:$0xf]
          %622 = vrot.lane.b32.xlu0 %v614, 33
          %v623 = vpop.permute.xlu0 %622
          %624 = vrot.lane.b32.xlu0 %v615, 33
          %v625 = vpop.permute.xlu0 %624
          %626 = vrot.lane.b32.xlu0 %v616, 33
          %v627 = vpop.permute.xlu0 %626
          %628 = vrot.lane.b32.xlu0 %v617, 33
          %v629 = vpop.permute.xlu0 %628
          %vm634 = vcmask 294152
          %635 = vst.msk [vmem:[#allocation2] sm:$0xff] %vm634, %v623
          %636 = vst.msk [vmem:[#allocation2 + $0x8] sm:$0xff] %vm634, %v625
          %637 = vst.msk [vmem:[#allocation2 + $0x10] sm:$0xff] %vm634, %v627
          %vm638 = vcmask 290056
          %639 = vst.msk [vmem:[#allocation2 + $0x18] sm:$0xf] %vm638, %v629
          %v640 = vld [vmem:[%s587 + $0x2] sm:$0xff]
          %v641 = vld [vmem:[%s587 + $0xa] sm:$0xff]
          %v642 = vld [vmem:[%s587 + $0x12] sm:$0xff]
          %v643 = vld [vmem:[%s587 + $0x1a] sm:$0xf]
          %648 = vrot.lane.b32.xlu0 %v640, 36
          %v649 = vpop.permute.xlu0 %648
          %650 = vrot.lane.b32.xlu0 %v641, 36
          %v651 = vpop.permute.xlu0 %650
          %652 = vrot.lane.b32.xlu0 %v642, 36
          %v653 = vpop.permute.xlu0 %652
          %654 = vrot.lane.b32.xlu0 %v643, 36
          %v655 = vpop.permute.xlu0 %654
          %vm660 = vcmask 318752
          %661 = vst.msk [vmem:[#allocation2] sm:$0xff] %vm660, %v649
          %662 = vst.msk [vmem:[#allocation2 + $0x8] sm:$0xff] %vm660, %v651
          %663 = vst.msk [vmem:[#allocation2 + $0x10] sm:$0xff] %vm660, %v653
          %vm664 = vcmask 314656
          %665 = vst.msk [vmem:[#allocation2 + $0x18] sm:$0xf] %vm664, %v655
          %v666 = vld [vmem:[%s587 + $0x3] sm:$0xff]
          %v667 = vld [vmem:[%s587 + $0xb] sm:$0xff]
          %v668 = vld [vmem:[%s587 + $0x13] sm:$0xff]
          %v669 = vld [vmem:[%s587 + $0x1b] sm:$0xf]
          %674 = vrot.lane.b32.xlu0 %v666, 39
          %v675 = vpop.permute.xlu0 %674
          %676 = vrot.lane.b32.xlu0 %v667, 39
          %v677 = vpop.permute.xlu0 %676
          %678 = vrot.lane.b32.xlu0 %v668, 39
          %v679 = vpop.permute.xlu0 %678
          %680 = vrot.lane.b32.xlu0 %v669, 39
          %v681 = vpop.permute.xlu0 %680
          %vm686 = vcmask 343352
          %687 = vst.msk [vmem:[#allocation2] sm:$0xff] %vm686, %v675
          %688 = vst.msk [vmem:[#allocation2 + $0x8] sm:$0xff] %vm686, %v677
          %689 = vst.msk [vmem:[#allocation2 + $0x10] sm:$0xff] %vm686, %v679
          %vm690 = vcmask 339256
          %691 = vst.msk [vmem:[#allocation2 + $0x18] sm:$0xf] %vm690, %v681
          %v692 = vld [vmem:[%s587 + $0x4] sm:$0xff]
          %v693 = vld [vmem:[%s587 + $0xc] sm:$0xff]
          %v694 = vld [vmem:[%s587 + $0x14] sm:$0xff]
          %v695 = vld [vmem:[%s587 + $0x1c] sm:$0xf]
          %700 = vrot.lane.b32.xlu0 %v692, 42
          %v701 = vpop.permute.xlu0 %700
          %702 = vrot.lane.b32.xlu0 %v693, 42
          %v703 = vpop.permute.xlu0 %702
          %704 = vrot.lane.b32.xlu0 %v694, 42
          %v705 = vpop.permute.xlu0 %704
          %706 = vrot.lane.b32.xlu0 %v695, 42
          %v707 = vpop.permute.xlu0 %706
          %vm712 = vcmask 367952
          %713 = vst.msk [vmem:[#allocation2] sm:$0xff] %vm712, %v701
          %714 = vst.msk [vmem:[#allocation2 + $0x8] sm:$0xff] %vm712, %v703
          %715 = vst.msk [vmem:[#allocation2 + $0x10] sm:$0xff] %vm712, %v705
          %vm716 = vcmask 363856
          %717 = vst.msk [vmem:[#allocation2 + $0x18] sm:$0xf] %vm716, %v707
          %s718 = sadd.s32 %s331, 3
          %s719 = smul.u32 %s718, 32
          %s720 = scalar_lea.vmem %s329, %s719
          %v721 = vld [vmem:[%s720] sm:$0xff]
          %v722 = vld [vmem:[%s720 + $0x8] sm:$0xff]
          %v723 = vld [vmem:[%s720 + $0x10] sm:$0xff]
          %v724 = vld [vmem:[%s720 + $0x18] sm:$0xf]
          %729 = vrot.lane.b32.xlu0 %v721, 45
          %v730 = vpop.permute.xlu0 %729
          %731 = vrot.lane.b32.xlu0 %v722, 45
          %v732 = vpop.permute.xlu0 %731
          %733 = vrot.lane.b32.xlu0 %v723, 45
          %v734 = vpop.permute.xlu0 %733
          %735 = vrot.lane.b32.xlu0 %v724, 45
          %v736 = vpop.permute.xlu0 %735
          %vm741 = vcmask 392552
          %742 = vst.msk [vmem:[#allocation2] sm:$0xff] %vm741, %v730
          %743 = vst.msk [vmem:[#allocation2 + $0x8] sm:$0xff] %vm741, %v732
          %744 = vst.msk [vmem:[#allocation2 + $0x10] sm:$0xff] %vm741, %v734
          %vm745 = vcmask 388456
          %746 = vst.msk [vmem:[#allocation2 + $0x18] sm:$0xf] %vm745, %v736
          %v747 = vld [vmem:[%s720 + $0x1] sm:$0xff]
          %v748 = vld [vmem:[%s720 + $0x9] sm:$0xff]
          %v749 = vld [vmem:[%s720 + $0x11] sm:$0xff]
          %v750 = vld [vmem:[%s720 + $0x19] sm:$0xf]
          %755 = vrot.lane.b32.xlu0 %v747, 48
          %v756 = vpop.permute.xlu0 %755
          %757 = vrot.lane.b32.xlu0 %v748, 48
          %v758 = vpop.permute.xlu0 %757
          %759 = vrot.lane.b32.xlu0 %v749, 48
          %v760 = vpop.permute.xlu0 %759
          %761 = vrot.lane.b32.xlu0 %v750, 48
          %v762 = vpop.permute.xlu0 %761
          %vm767 = vcmask 417152
          %768 = vst.msk [vmem:[#allocation2] sm:$0xff] %vm767, %v756
          %769 = vst.msk [vmem:[#allocation2 + $0x8] sm:$0xff] %vm767, %v758
          %770 = vst.msk [vmem:[#allocation2 + $0x10] sm:$0xff] %vm767, %v760
          %vm771 = vcmask 413056
          %772 = vst.msk [vmem:[#allocation2 + $0x18] sm:$0xf] %vm771, %v762
          %v773 = vld [vmem:[%s720 + $0x2] sm:$0xff]
          %v774 = vld [vmem:[%s720 + $0xa] sm:$0xff]
          %v775 = vld [vmem:[%s720 + $0x12] sm:$0xff]
          %v776 = vld [vmem:[%s720 + $0x1a] sm:$0xf]
          %781 = vrot.lane.b32.xlu0 %v773, 51
          %v782 = vpop.permute.xlu0 %781
          %783 = vrot.lane.b32.xlu0 %v774, 51
          %v784 = vpop.permute.xlu0 %783
          %785 = vrot.lane.b32.xlu0 %v775, 51
          %v786 = vpop.permute.xlu0 %785
          %787 = vrot.lane.b32.xlu0 %v776, 51
          %v788 = vpop.permute.xlu0 %787
          %vm793 = vcmask 441752
          %794 = vst.msk [vmem:[#allocation2] sm:$0xff] %vm793, %v782
          %795 = vst.msk [vmem:[#allocation2 + $0x8] sm:$0xff] %vm793, %v784
          %796 = vst.msk [vmem:[#allocation2 + $0x10] sm:$0xff] %vm793, %v786
          %vm797 = vcmask 437656
          %798 = vst.msk [vmem:[#allocation2 + $0x18] sm:$0xf] %vm797, %v788
          %v799 = vld [vmem:[%s720 + $0x3] sm:$0xff]
          %v800 = vld [vmem:[%s720 + $0xb] sm:$0xff]
          %v801 = vld [vmem:[%s720 + $0x13] sm:$0xff]
          %v802 = vld [vmem:[%s720 + $0x1b] sm:$0xf]
          %807 = vrot.lane.b32.xlu0 %v799, 54
          %v808 = vpop.permute.xlu0 %807
          %809 = vrot.lane.b32.xlu0 %v800, 54
          %v810 = vpop.permute.xlu0 %809
          %811 = vrot.lane.b32.xlu0 %v801, 54
          %v812 = vpop.permute.xlu0 %811
          %813 = vrot.lane.b32.xlu0 %v802, 54
          %v814 = vpop.permute.xlu0 %813
          %vm819 = vcmask 466352
          %820 = vst.msk [vmem:[#allocation2] sm:$0xff] %vm819, %v808
          %821 = vst.msk [vmem:[#allocation2 + $0x8] sm:$0xff] %vm819, %v810
          %822 = vst.msk [vmem:[#allocation2 + $0x10] sm:$0xff] %vm819, %v812
          %vm823 = vcmask 462256
          %824 = vst.msk [vmem:[#allocation2 + $0x18] sm:$0xf] %vm823, %v814
          %v825 = vld [vmem:[%s720 + $0x4] sm:$0xff]
          %v826 = vld [vmem:[%s720 + $0xc] sm:$0xff]
          %v827 = vld [vmem:[%s720 + $0x14] sm:$0xff]
          %v828 = vld [vmem:[%s720 + $0x1c] sm:$0xf]
          %833 = vrot.lane.b32.xlu0 %v825, 57
          %v834 = vpop.permute.xlu0 %833
          %835 = vrot.lane.b32.xlu0 %v826, 57
          %v836 = vpop.permute.xlu0 %835
          %837 = vrot.lane.b32.xlu0 %v827, 57
          %v838 = vpop.permute.xlu0 %837
          %839 = vrot.lane.b32.xlu0 %v828, 57
          %v840 = vpop.permute.xlu0 %839
          %vm845 = vcmask 490952
          %846 = vst.msk [vmem:[#allocation2] sm:$0xff] %vm845, %v834
          %847 = vst.msk [vmem:[#allocation2 + $0x8] sm:$0xff] %vm845, %v836
          %848 = vst.msk [vmem:[#allocation2 + $0x10] sm:$0xff] %vm845, %v838
          %vm849 = vcmask 486856
          %850 = vst.msk [vmem:[#allocation2 + $0x18] sm:$0xf] %vm849, %v840
          %s851 = sadd.s32 %s331, 4
          %s852 = smul.u32 %s851, 32
          %s853 = scalar_lea.vmem %s329, %s852
          %v854 = vld [vmem:[%s853] sm:$0xff]
          %v855 = vld [vmem:[%s853 + $0x8] sm:$0xff]
          %v856 = vld [vmem:[%s853 + $0x10] sm:$0xff]
          %v857 = vld [vmem:[%s853 + $0x18] sm:$0xf]
          %862 = vrot.lane.b32.xlu0 %v854, 60
          %v863 = vpop.permute.xlu0 %862
          %864 = vrot.lane.b32.xlu0 %v855, 60
          %v865 = vpop.permute.xlu0 %864
          %866 = vrot.lane.b32.xlu0 %v856, 60
          %v867 = vpop.permute.xlu0 %866
          %868 = vrot.lane.b32.xlu0 %v857, 60
          %v869 = vpop.permute.xlu0 %868
          %vm874 = vcmask 515552
          %875 = vst.msk [vmem:[#allocation2] sm:$0xff] %vm874, %v863
          %876 = vst.msk [vmem:[#allocation2 + $0x8] sm:$0xff] %vm874, %v865
          %877 = vst.msk [vmem:[#allocation2 + $0x10] sm:$0xff] %vm874, %v867
          %vm878 = vcmask 511456
          %879 = vst.msk [vmem:[#allocation2 + $0x18] sm:$0xf] %vm878, %v869
          %v880 = vld [vmem:[%s853 + $0x1] sm:$0xff]
          %v881 = vld [vmem:[%s853 + $0x9] sm:$0xff]
          %v882 = vld [vmem:[%s853 + $0x11] sm:$0xff]
          %v883 = vld [vmem:[%s853 + $0x19] sm:$0xf]
          %888 = vrot.lane.b32.xlu0 %v880, 63
          %v889 = vpop.permute.xlu0 %888
          %890 = vrot.lane.b32.xlu0 %v881, 63
          %v891 = vpop.permute.xlu0 %890
          %892 = vrot.lane.b32.xlu0 %v882, 63
          %v893 = vpop.permute.xlu0 %892
          %894 = vrot.lane.b32.xlu0 %v883, 63
          %v895 = vpop.permute.xlu0 %894
          %vm900 = vcmask 540152
          %901 = vst.msk [vmem:[#allocation2] sm:$0xff] %vm900, %v889
          %902 = vst.msk [vmem:[#allocation2 + $0x8] sm:$0xff] %vm900, %v891
          %903 = vst.msk [vmem:[#allocation2 + $0x10] sm:$0xff] %vm900, %v893
          %vm904 = vcmask 536056
          %905 = vst.msk [vmem:[#allocation2 + $0x18] sm:$0xf] %vm904, %v895
          %v906 = vld [vmem:[%s853 + $0x2] sm:$0xff]
          %v907 = vld [vmem:[%s853 + $0xa] sm:$0xff]
          %v908 = vld [vmem:[%s853 + $0x12] sm:$0xff]
          %v909 = vld [vmem:[%s853 + $0x1a] sm:$0xf]
          %914 = vrot.lane.b32.xlu0 %v906, 66
          %v915 = vpop.permute.xlu0 %914
          %916 = vrot.lane.b32.xlu0 %v907, 66
          %v917 = vpop.permute.xlu0 %916
          %918 = vrot.lane.b32.xlu0 %v908, 66
          %v919 = vpop.permute.xlu0 %918
          %920 = vrot.lane.b32.xlu0 %v909, 66
          %v921 = vpop.permute.xlu0 %920
          %vm926 = vcmask 564752
          %927 = vst.msk [vmem:[#allocation2] sm:$0xff] %vm926, %v915
          %928 = vst.msk [vmem:[#allocation2 + $0x8] sm:$0xff] %vm926, %v917
          %929 = vst.msk [vmem:[#allocation2 + $0x10] sm:$0xff] %vm926, %v919
          %vm930 = vcmask 560656
          %931 = vst.msk [vmem:[#allocation2 + $0x18] sm:$0xf] %vm930, %v921
          %v932 = vld [vmem:[%s853 + $0x3] sm:$0xff]
          %v933 = vld [vmem:[%s853 + $0xb] sm:$0xff]
          %v934 = vld [vmem:[%s853 + $0x13] sm:$0xff]
          %v935 = vld [vmem:[%s853 + $0x1b] sm:$0xf]
          %940 = vrot.lane.b32.xlu0 %v932, 69
          %v941 = vpop.permute.xlu0 %940
          %942 = vrot.lane.b32.xlu0 %v933, 69
          %v943 = vpop.permute.xlu0 %942
          %944 = vrot.lane.b32.xlu0 %v934, 69
          %v945 = vpop.permute.xlu0 %944
          %946 = vrot.lane.b32.xlu0 %v935, 69
          %v947 = vpop.permute.xlu0 %946
          %vm952 = vcmask 589352
          %953 = vst.msk [vmem:[#allocation2] sm:$0xff] %vm952, %v941
          %954 = vst.msk [vmem:[#allocation2 + $0x8] sm:$0xff] %vm952, %v943
          %955 = vst.msk [vmem:[#allocation2 + $0x10] sm:$0xff] %vm952, %v945
          %vm956 = vcmask 585256
          %957 = vst.msk [vmem:[#allocation2 + $0x18] sm:$0xf] %vm956, %v947
          %v958 = vld [vmem:[%s853 + $0x4] sm:$0xff]
          %v959 = vld [vmem:[%s853 + $0xc] sm:$0xff]
          %v960 = vld [vmem:[%s853 + $0x14] sm:$0xff]
          %v961 = vld [vmem:[%s853 + $0x1c] sm:$0xf]
          %966 = vrot.lane.b32.xlu0 %v958, 72
          %v967 = vpop.permute.xlu0 %966
          %968 = vrot.lane.b32.xlu0 %v959, 72
          %v969 = vpop.permute.xlu0 %968
          %970 = vrot.lane.b32.xlu0 %v960, 72
          %v971 = vpop.permute.xlu0 %970
          %972 = vrot.lane.b32.xlu0 %v961, 72
          %v973 = vpop.permute.xlu0 %972
          %vm978 = vcmask 613952
          %979 = vst.msk [vmem:[#allocation2] sm:$0xff] %vm978, %v967
          %980 = vst.msk [vmem:[#allocation2 + $0x8] sm:$0xff] %vm978, %v969
          %981 = vst.msk [vmem:[#allocation2 + $0x10] sm:$0xff] %vm978, %v971
          %vm982 = vcmask 609856
          %983 = vst.msk [vmem:[#allocation2 + $0x18] sm:$0xf] %vm982, %v973
          %v984 = vld [vmem:[#allocation2] sm:$0xff]
          %v985 = vld [vmem:[#allocation2 + $0x8] sm:$0xff]
          %v986 = vld [vmem:[#allocation2 + $0x10] sm:$0xff]
          %v987 = vld [vmem:[#allocation2 + $0x18] sm:$0xf]
          %v988 = vld [vmem:[%s1] sm:$0xff]
          %v989 = vld [vmem:[%s1 + $0x8] sm:$0xff]
          %v990 = vld [vmem:[%s1 + $0x10] sm:$0xff]
          %v991 = vld [vmem:[%s1 + $0x18] sm:$0xff]
          %v992 = vld [vmem:[%s1 + $0x20] sm:$0xff]
          %v993 = vld [vmem:[%s1 + $0x28] sm:$0xff]
          %v994 = vld [vmem:[%s1 + $0x30] sm:$0xff]
          %v995 = vld [vmem:[%s1 + $0x38] sm:$0xff]
          %v996 = vld [vmem:[%s1 + $0x40] sm:$0xff]
          %v997 = vld [vmem:[%s1 + $0x48] sm:$0x7]
          %v998 = vld [vmem:[%s2] sm:$0x1]
          %v1000 = vlaneseq
          %v1001 = vshrl.u32 %v1000, 7
          %v1002 = vsub.s32 0, %v1001
          %v1003 = vrot.slane %v998, %v1002
          %vm1005 = vcmask 613376
          %v1007 = vsel %vm1005, %v984, 0
          %v1010 = vsel %vm1005, %v985, 0
          %v1013 = vsel %vm1005, %v986, 0
          %v1016 = vsel %vm1005, %v987, 0
          %vm1018 = vcmask 1042432
          %v1020 = vsel %vm1018, %v997, 0
          %1022 = vmatprep.subr.mxu0 0.0
          %1023 = vmatpush1.msra.mxu0 %v988
          %1024 = vmatprep.subr.mxu0 0.0
          %1025 = vmatpush1.msra.mxu0 %v989
          %1026 = vmatprep.subr.mxu0 0.0
          %1027 = vmatpush1.msra.mxu0 %v990
          %1028 = vmatprep.subr.mxu0 0.0
          %1029 = vmatpush1.msra.mxu0 %v991
          %1030 = vmatprep.subr.mxu0 0.0
          %1031 = vmatpush1.msra.mxu0 %v992
          %1032 = vmatprep.subr.mxu0 0.0
          %1033 = vmatpush1.msra.mxu0 %v993
          %1034 = vmatprep.subr.mxu0 0.0
          %1035 = vmatpush1.msra.mxu0 %v994
          %1036 = vmatprep.subr.mxu0 0.0
          %1037 = vmatpush1.msra.mxu0 %v995
          %1038 = vmatprep.subr.mxu0 0.0
          %1039 = vmatpush1.msra.mxu0 %v996
          %1040 = vmatprep.subr.mxu0 0.0
          %1041 = vmatpush1.msra.mxu0 %v1020
          %1042 = vmatprep.subr.mxu0 0.0
          %1043 = vmatpush1.msra.mxu0 0.0
          %1044 = vmatprep.subr.mxu0 0.0
          %1045 = vmatpush1.msra.mxu0 0.0
          %1046 = vmatprep.subr.mxu0 0.0
          %1047 = vmatpush1.msra.mxu0 0.0
          %1048 = vmatprep.subr.mxu0 0.0
          %1049 = vmatpush1.msra.mxu0 0.0
          %1050 = vmatprep.subr.mxu0 0.0
          %1051 = vmatpush1.msra.mxu0 0.0
          %1052 = vmatprep.subr.mxu0 0.0
          %1053 = vmatpush1.msra.mxu0 0.0
          %1054 = vmatprep.subr.mxu0 0.0
          %1055 = vmatpush1.msra.mxu0 0.0
          %1056 = vmatprep.subr.mxu0 0.0
          %1057 = vmatpush1.msra.mxu0 0.0
          %1058 = vmatprep.subr.mxu0 0.0
          %1059 = vmatpush1.msra.mxu0 0.0
          %1060 = vmatprep.subr.mxu0 0.0
          %1061 = vmatpush1.msra.mxu0 0.0
          %1062 = vmatprep.subr.mxu0 0.0
          %1063 = vmatpush1.msra.mxu0 0.0
          %1064 = vmatprep.subr.mxu0 0.0
          %1065 = vmatpush1.msra.mxu0 0.0
          %1066 = vmatprep.subr.mxu0 0.0
          %1067 = vmatpush1.msra.mxu0 0.0
          %1068 = vmatprep.subr.mxu0 0.0
          %1069 = vmatpush1.msra.mxu0 0.0
          %1070 = vmatprep.subr.mxu0 0.0
          %1071 = vmatpush1.msra.mxu0 0.0
          %1072 = vmatprep.subr.mxu0 0.0
          %1073 = vmatpush1.msra.mxu0 0.0
          %1074 = vmatprep.subr.mxu0 0.0
          %1075 = vmatpush1.msra.mxu0 0.0
          %1076 = vmatprep.subr.mxu0 0.0
          %1077 = vmatpush1.msra.mxu0 0.0
          %1078 = vmatprep.subr.mxu0 0.0
          %1079 = vmatpush1.msra.mxu0 0.0
          %1080 = vmatprep.subr.mxu0 0.0
          %1081 = vmatpush1.msra.mxu0 0.0
          %1082 = vmatprep.subr.mxu0 0.0
          %1083 = vmatpush1.msra.mxu0 0.0
          %1084 = vmatprep.subr.mxu0 0.0
          %1085 = vmatpush1.msra.mxu0 0.0
          %1086 = vmatprep.mubr.f32.mxu0 0.0
          %1087 = vmatmul.mubr.f32.gmra.mrb[0].mxu0 %v1007
          %v1088 = vpop.f32.mrb[0].mxu0
          %v1089 = vadd.f32 %v1003, %v1088
          %v1090 = vpop.f32.mrb[0].mxu0
          %1091 = vmatprep.mubr.f32.mxu0 0.0
          %1092 = vmatmul.mubr.f32.gmra.mrb[0].mxu0 %v1010
          %v1093 = vpop.f32.mrb[0].mxu0
          %v1094 = vadd.f32 %v1003, %v1093
          %v1095 = vpop.f32.mrb[0].mxu0
          %1096 = vmatprep.mubr.f32.mxu0 0.0
          %1097 = vmatmul.mubr.f32.gmra.mrb[0].mxu0 %v1013
          %v1098 = vpop.f32.mrb[0].mxu0
          %v1099 = vadd.f32 %v1003, %v1098
          %v1100 = vpop.f32.mrb[0].mxu0
          %1101 = vmatprep.mubr.f32.mxu0 0.0
          %1102 = vmatmul.mubr.f32.gmra.mrb[0].mxu0 %v1016
          %v1103 = vpop.f32.mrb[0].mxu0
          %v1104 = vadd.f32 %v1003, %v1103
          %v1105 = vpop.f32.mrb[0].mxu0
          %1106 = vdwg.mxu0
          %v1107 = vmax.f32 %v1089, 0.0
          %v1108 = vmax.f32 %v1094, 0.0
          %v1109 = vmax.f32 %v1099, 0.0
          %v1110 = vmax.f32 %v1104, 0.0
          %s1111 = scalar_lea.vmem [#allocation3], %s336
          %vm1112 = vcmask 48128
          %1113 = vst.msk [vmem:[%s1111] sm:$0xff] %vm1112, %v1107
          %1114 = vst.msk [vmem:[%s1111 + $0x8] sm:$0xff] %vm1112, %v1108
          %1115 = vst.msk [vmem:[%s1111 + $0x10] sm:$0xff] %vm1112, %v1109
          %vm1116 = vcmask 44032
          %1117 = vst.msk [vmem:[%s1111 + $0x18] sm:$0xf] %vm1116, %v1110
        $region61: #{classifier_forward.1} parent=55 // loop_footer
          %s335 = sadd.s32 1, %s331
        $region62: #{classifier_forward.1} parent=55 // loop_footer_branch
          %330 = sbr.rel target = $region58
        $region63: #{classifier_forward.1} parent=55 // loop_exit
          _
        loop: start=0, step=1, limit=14
        $region64: #{classifier_forward.1} parent=55 // loop_pre_header
          _
        $region65: #{classifier_forward.1} parent=55 // loop_header
          %s1119 = sphi 0, %s1123
          %p1120 = scmp.ge.s32.totalorder %s1119, 14
        $region66: #{classifier_forward.1} parent=55 // loop_header_branch
          %1122 = sbr.rel (%p1120) target = $region70
        $region67: #{classifier_forward.1} parent=55 // loop_body
          %s1124 = smul.u32 %s1119, 2
          %s1125 = smul.u32 %s1124, 32
          %s1126 = scalar_lea.vmem [#allocation3], %s1125
          %v1127 = vld [vmem:[%s1126] ss:$2 sm:$0xff]
          %s1128 = scalar_lea.vmem %s1126, 16 [#allocation3]
          %v1129 = vld [vmem:[%s1128] ss:$2 sm:$0x3f]
          %s1130 = scalar_lea.vmem %s1126, 1 [#allocation3]
          %v1131 = vld [vmem:[%s1130] ss:$2 sm:$0xff]
          %s1132 = scalar_lea.vmem %s1126, 17 [#allocation3]
          %v1133 = vld [vmem:[%s1132] ss:$2 sm:$0x3f]
          %v1134 = vmax.f32 %v1127, %v1131
          %v1135 = vmax.f32 %v1129, %v1133
          %s1136 = sadd.s32 %s1124, 1
          %s1137 = smul.u32 %s1136, 32
          %s1138 = scalar_lea.vmem [#allocation3], %s1137
          %v1139 = vld [vmem:[%s1138] ss:$2 sm:$0xff]
          %s1140 = scalar_lea.vmem %s1138, 16 [#allocation3]
          %v1141 = vld [vmem:[%s1140] ss:$2 sm:$0x3f]
          %s1142 = scalar_lea.vmem %s1138, 1 [#allocation3]
          %v1143 = vld [vmem:[%s1142] ss:$2 sm:$0xff]
          %s1144 = scalar_lea.vmem %s1138, 17 [#allocation3]
          %v1145 = vld [vmem:[%s1144] ss:$2 sm:$0x3f]
          %v1146 = vmax.f32 %v1139, %v1143
          %v1147 = vmax.f32 %v1141, %v1145
          %v1148 = vmax.f32 %v1134, %v1146
          %v1149 = vmax.f32 %v1135, %v1147
          %s1150 = smul.u32 %s1119, 16
          %s1151 = scalar_lea.vmem [#allocation4], %s1150
          %vm1152 = vcmask 48128
          %1153 = vst.msk [vmem:[%s1151] sm:$0xff] %vm1152, %v1148
          %vm1154 = vcmask 46080
          %1155 = vst.msk [vmem:[%s1151 + $0x8] sm:$0x3f] %vm1154, %v1149
        $region68: #{classifier_forward.1} parent=55 // loop_footer
          %s1123 = sadd.s32 1, %s1119
        $region69: #{classifier_forward.1} parent=55 // loop_footer_branch
          %1118 = sbr.rel target = $region65
        $region70: #{classifier_forward.1} parent=55 // loop_exit
          _
        loop: start=0, step=1, limit=10
        $region71: #{classifier_forward.1} parent=55 // loop_pre_header
          _
        $region72: #{classifier_forward.1} parent=55 // loop_header
          %s1157 = sphi 0, %s1161
          %p1158 = scmp.ge.s32.totalorder %s1157, 10
        $region73: #{classifier_forward.1} parent=55 // loop_header_branch
          %1160 = sbr.rel (%p1158) target = $region77
        $region74: #{classifier_forward.1} parent=55 // loop_body
          %s1162 = smul.u32 %s1157, 16
          %s1163 = scalar_lea.vmem [#allocation4], %s1162
          %v1164 = vld [vmem:[%s1163] sm:$0xff]
          %v1165 = vld [vmem:[%s1163 + $0x8] sm:$0x3]
          %vm1166 = vcmask 48128
          %1167 = vst.msk [vmem:[#allocation5] sm:$0xff] %vm1166, %v1164
          %vm1168 = vcmask 41984
          %1169 = vst.msk [vmem:[#allocation5 + $0x10] sm:$0x3] %vm1168, %v1165
          %v1170 = vld [vmem:[%s1163 + $0x1] sm:$0xff]
          %v1171 = vld [vmem:[%s1163 + $0x9] sm:$0x3]
          %1174 = vrot.lane.b32.xlu0 %v1170, 6
          %v1175 = vpop.permute.xlu0 %1174
          %1176 = vrot.lane.b32.xlu0 %v1171, 6
          %v1177 = vpop.permute.xlu0 %1176
          %vm1180 = vcmask 97328
          %1181 = vst.msk [vmem:[#allocation5] sm:$0xff] %vm1180, %v1175
          %vm1182 = vcmask 91184
          %1183 = vst.msk [vmem:[#allocation5 + $0x10] sm:$0x3] %vm1182, %v1177
          %v1184 = vld [vmem:[%s1163 + $0x2] sm:$0xff]
          %v1185 = vld [vmem:[%s1163 + $0xa] sm:$0x3]
          %1188 = vrot.lane.b32.xlu0 %v1184, 12
          %v1189 = vpop.permute.xlu0 %1188
          %1190 = vrot.lane.b32.xlu0 %v1185, 12
          %v1191 = vpop.permute.xlu0 %1190
          %vm1194 = vcmask 146528
          %1195 = vst.msk [vmem:[#allocation5] sm:$0xff] %vm1194, %v1189
          %vm1196 = vcmask 140384
          %1197 = vst.msk [vmem:[#allocation5 + $0x10] sm:$0x3] %vm1196, %v1191
          %v1198 = vld [vmem:[%s1163 + $0x3] sm:$0xff]
          %v1199 = vld [vmem:[%s1163 + $0xb] sm:$0x3]
          %1202 = vrot.lane.b32.xlu0 %v1198, 18
          %v1203 = vpop.permute.xlu0 %1202
          %1204 = vrot.lane.b32.xlu0 %v1199, 18
          %v1205 = vpop.permute.xlu0 %1204
          %vm1208 = vcmask 195728
          %1209 = vst.msk [vmem:[#allocation5] sm:$0xff] %vm1208, %v1203
          %vm1210 = vcmask 189584
          %1211 = vst.msk [vmem:[#allocation5 + $0x10] sm:$0x3] %vm1210, %v1205
          %v1212 = vld [vmem:[%s1163 + $0x4] sm:$0xff]
          %v1213 = vld [vmem:[%s1163 + $0xc] sm:$0x3]
          %1216 = vrot.lane.b32.xlu0 %v1212, 24
          %v1217 = vpop.permute.xlu0 %1216
          %1218 = vrot.lane.b32.xlu0 %v1213, 24
          %v1219 = vpop.permute.xlu0 %1218
          %vm1222 = vcmask 244928
          %1223 = vst.msk [vmem:[#allocation5] sm:$0xff] %vm1222, %v1217
          %vm1224 = vcmask 238784
          %1225 = vst.msk [vmem:[#allocation5 + $0x10] sm:$0x3] %vm1224, %v1219
          %s1226 = sadd.s32 %s1157, 1
          %s1227 = smul.u32 %s1226, 16
          %s1228 = scalar_lea.vmem [#allocation4], %s1227
          %v1229 = vld [vmem:[%s1228] sm:$0xff]
          %v1230 = vld [vmem:[%s1228 + $0x8] sm:$0x3]
          %1233 = vrot.lane.b32.xlu0 %v1229, 30
          %v1234 = vpop.permute.xlu0 %1233
          %1235 = vrot.lane.b32.xlu0 %v1230, 30
          %v1236 = vpop.permute.xlu0 %1235
          %vm1239 = vcmask 294128
          %1240 = vst.msk [vmem:[#allocation5] sm:$0xff] %vm1239, %v1234
          %vm1241 = vcmask 287984
          %1242 = vst.msk [vmem:[#allocation5 + $0x10] sm:$0x3] %vm1241, %v1236
          %v1243 = vld [vmem:[%s1228 + $0x1] sm:$0xff]
          %v1244 = vld [vmem:[%s1228 + $0x9] sm:$0x3]
          %1247 = vrot.lane.b32.xlu0 %v1243, 36
          %v1248 = vpop.permute.xlu0 %1247
          %1249 = vrot.lane.b32.xlu0 %v1244, 36
          %v1250 = vpop.permute.xlu0 %1249
          %vm1253 = vcmask 343328
          %1254 = vst.msk [vmem:[#allocation5] sm:$0xff] %vm1253, %v1248
          %vm1255 = vcmask 337184
          %1256 = vst.msk [vmem:[#allocation5 + $0x10] sm:$0x3] %vm1255, %v1250
          %v1257 = vld [vmem:[%s1228 + $0x2] sm:$0xff]
          %v1258 = vld [vmem:[%s1228 + $0xa] sm:$0x3]
          %1261 = vrot.lane.b32.xlu0 %v1257, 42
          %v1262 = vpop.permute.xlu0 %1261
          %1263 = vrot.lane.b32.xlu0 %v1258, 42
          %v1264 = vpop.permute.xlu0 %1263
          %vm1267 = vcmask 392528
          %1268 = vst.msk [vmem:[#allocation5] sm:$0xff] %vm1267, %v1262
          %vm1269 = vcmask 386384
          %1270 = vst.msk [vmem:[#allocation5 + $0x10] sm:$0x3] %vm1269, %v1264
          %v1271 = vld [vmem:[%s1228 + $0x3] sm:$0xff]
          %v1272 = vld [vmem:[%s1228 + $0xb] sm:$0x3]
          %1275 = vrot.lane.b32.xlu0 %v1271, 48
          %v1276 = vpop.permute.xlu0 %1275
          %1277 = vrot.lane.b32.xlu0 %v1272, 48
          %v1278 = vpop.permute.xlu0 %1277
          %vm1281 = vcmask 441728
          %1282 = vst.msk [vmem:[#allocation5] sm:$0xff] %vm1281, %v1276
          %vm1283 = vcmask 435584
          %1284 = vst.msk [vmem:[#allocation5 + $0x10] sm:$0x3] %vm1283, %v1278
          %v1285 = vld [vmem:[%s1228 + $0x4] sm:$0xff]
          %v1286 = vld [vmem:[%s1228 + $0xc] sm:$0x3]
          %1289 = vrot.lane.b32.xlu0 %v1285, 54
          %v1290 = vpop.permute.xlu0 %1289
          %1291 = vrot.lane.b32.xlu0 %v1286, 54
          %v1292 = vpop.permute.xlu0 %1291
          %vm1295 = vcmask 490928
          %1296 = vst.msk [vmem:[#allocation5] sm:$0xff] %vm1295, %v1290
          %vm1297 = vcmask 484784
          %1298 = vst.msk [vmem:[#allocation5 + $0x10] sm:$0x3] %vm1297, %v1292
          %s1299 = sadd.s32 %s1157, 2
          %s1300 = smul.u32 %s1299, 16
          %s1301 = scalar_lea.vmem [#allocation4], %s1300
          %v1302 = vld [vmem:[%s1301] sm:$0xff]
          %v1303 = vld [vmem:[%s1301 + $0x8] sm:$0x3]
          %1306 = vrot.lane.b32.xlu0 %v1302, 60
          %v1307 = vpop.permute.xlu0 %1306
          %1308 = vrot.lane.b32.xlu0 %v1303, 60
          %v1309 = vpop.permute.xlu0 %1308
          %vm1312 = vcmask 540128
          %1313 = vst.msk [vmem:[#allocation5] sm:$0xff] %vm1312, %v1307
          %vm1314 = vcmask 533984
          %1315 = vst.msk [vmem:[#allocation5 + $0x10] sm:$0x3] %vm1314, %v1309
          %v1316 = vld [vmem:[%s1301 + $0x1] sm:$0xff]
          %v1317 = vld [vmem:[%s1301 + $0x9] sm:$0x3]
          %1320 = vrot.lane.b32.xlu0 %v1316, 66
          %v1321 = vpop.permute.xlu0 %1320
          %1322 = vrot.lane.b32.xlu0 %v1317, 66
          %v1323 = vpop.permute.xlu0 %1322
          %vm1326 = vcmask 589328
          %1327 = vst.msk [vmem:[#allocation5] sm:$0xff] %vm1326, %v1321
          %vm1328 = vcmask 583184
          %1329 = vst.msk [vmem:[#allocation5 + $0x10] sm:$0x3] %vm1328, %v1323
          %v1330 = vld [vmem:[%s1301 + $0x2] sm:$0xff]
          %v1331 = vld [vmem:[%s1301 + $0xa] sm:$0x3]
          %1334 = vrot.lane.b32.xlu0 %v1330, 72
          %v1335 = vpop.permute.xlu0 %1334
          %1336 = vrot.lane.b32.xlu0 %v1331, 72
          %v1337 = vpop.permute.xlu0 %1336
          %vm1340 = vcmask 638528
          %1341 = vst.msk [vmem:[#allocation5] sm:$0xff] %vm1340, %v1335
          %vm1342 = vcmask 632384
          %1343 = vst.msk [vmem:[#allocation5 + $0x10] sm:$0x3] %vm1342, %v1337
          %v1344 = vld [vmem:[%s1301 + $0x3] sm:$0xff]
          %v1345 = vld [vmem:[%s1301 + $0xb] sm:$0x3]
          %1348 = vrot.lane.b32.xlu0 %v1344, 78
          %v1349 = vpop.permute.xlu0 %1348
          %1350 = vrot.lane.b32.xlu0 %v1345, 78
          %v1351 = vpop.permute.xlu0 %1350
          %vm1354 = vcmask 687728
          %1355 = vst.msk [vmem:[#allocation5] sm:$0xff] %vm1354, %v1349
          %vm1356 = vcmask 681584
          %1357 = vst.msk [vmem:[#allocation5 + $0x10] sm:$0x3] %vm1356, %v1351
          %v1358 = vld [vmem:[%s1301 + $0x4] sm:$0xff]
          %v1359 = vld [vmem:[%s1301 + $0xc] sm:$0x3]
          %1362 = vrot.lane.b32.xlu0 %v1358, 84
          %v1363 = vpop.permute.xlu0 %1362
          %1364 = vrot.lane.b32.xlu0 %v1359, 84
          %v1365 = vpop.permute.xlu0 %1364
          %vm1368 = vcmask 736928
          %1369 = vst.msk [vmem:[#allocation5] sm:$0xff] %vm1368, %v1363
          %vm1370 = vcmask 730784
          %1371 = vst.msk [vmem:[#allocation5 + $0x10] sm:$0x3] %vm1370, %v1365
          %s1372 = sadd.s32 %s1157, 3
          %s1373 = smul.u32 %s1372, 16
          %s1374 = scalar_lea.vmem [#allocation4], %s1373
          %v1375 = vld [vmem:[%s1374] sm:$0xff]
          %v1376 = vld [vmem:[%s1374 + $0x8] sm:$0x3]
          %1379 = vrot.lane.b32.xlu0 %v1375, 90
          %v1380 = vpop.permute.xlu0 %1379
          %1381 = vrot.lane.b32.xlu0 %v1376, 90
          %v1382 = vpop.permute.xlu0 %1381
          %vm1385 = vcmask 786128
          %1386 = vst.msk [vmem:[#allocation5] sm:$0xff] %vm1385, %v1380
          %vm1387 = vcmask 779984
          %1388 = vst.msk [vmem:[#allocation5 + $0x10] sm:$0x3] %vm1387, %v1382
          %v1389 = vld [vmem:[%s1374 + $0x1] sm:$0xff]
          %v1390 = vld [vmem:[%s1374 + $0x9] sm:$0x3]
          %1393 = vrot.lane.b32.xlu0 %v1389, 96
          %v1394 = vpop.permute.xlu0 %1393
          %1395 = vrot.lane.b32.xlu0 %v1390, 96
          %v1396 = vpop.permute.xlu0 %1395
          %vm1399 = vcmask 835328
          %1400 = vst.msk [vmem:[#allocation5] sm:$0xff] %vm1399, %v1394
          %vm1401 = vcmask 829184
          %1402 = vst.msk [vmem:[#allocation5 + $0x10] sm:$0x3] %vm1401, %v1396
          %v1403 = vld [vmem:[%s1374 + $0x2] sm:$0xff]
          %v1404 = vld [vmem:[%s1374 + $0xa] sm:$0x3]
          %1407 = vrot.lane.b32.xlu0 %v1403, 102
          %v1408 = vpop.permute.xlu0 %1407
          %1409 = vrot.lane.b32.xlu0 %v1404, 102
          %v1410 = vpop.permute.xlu0 %1409
          %vm1413 = vcmask 884528
          %1414 = vst.msk [vmem:[#allocation5] sm:$0xff] %vm1413, %v1408
          %vm1415 = vcmask 878384
          %1416 = vst.msk [vmem:[#allocation5 + $0x10] sm:$0x3] %vm1415, %v1410
          %v1417 = vld [vmem:[%s1374 + $0x3] sm:$0xff]
          %v1418 = vld [vmem:[%s1374 + $0xb] sm:$0x3]
          %1421 = vrot.lane.b32.xlu0 %v1417, 108
          %v1422 = vpop.permute.xlu0 %1421
          %1423 = vrot.lane.b32.xlu0 %v1418, 108
          %v1424 = vpop.permute.xlu0 %1423
          %vm1427 = vcmask 933728
          %1428 = vst.msk [vmem:[#allocation5] sm:$0xff] %vm1427, %v1422
          %vm1429 = vcmask 927584
          %1430 = vst.msk [vmem:[#allocation5 + $0x10] sm:$0x3] %vm1429, %v1424
          %v1431 = vld [vmem:[%s1374 + $0x4] sm:$0xff]
          %v1432 = vld [vmem:[%s1374 + $0xc] sm:$0x3]
          %1435 = vrot.lane.b32.xlu0 %v1431, 114
          %v1436 = vpop.permute.xlu0 %1435
          %1437 = vrot.lane.b32.xlu0 %v1432, 114
          %v1438 = vpop.permute.xlu0 %1437
          %vm1441 = vcmask 982928
          %1442 = vst.msk [vmem:[#allocation5] sm:$0xff] %vm1441, %v1436
          %vm1443 = vcmask 976784
          %1444 = vst.msk [vmem:[#allocation5 + $0x10] sm:$0x3] %vm1443, %v1438
          %s1445 = sadd.s32 %s1157, 4
          %s1446 = smul.u32 %s1445, 16
          %s1447 = scalar_lea.vmem [#allocation4], %s1446
          %v1448 = vld [vmem:[%s1447] sm:$0xff]
          %v1449 = vld [vmem:[%s1447 + $0x8] sm:$0x3]
          %1452 = vrot.lane.b32.xlu0 %v1448, 120
          %v1453 = vpop.permute.xlu0 %1452
          %1454 = vrot.lane.b32.xlu0 %v1449, 120
          %v1455 = vpop.permute.xlu0 %1454
          %vm1458 = vcmask 1032128
          %1459 = vst.msk [vmem:[#allocation5] sm:$0xff] %vm1458, %v1453
          %vm1460 = vcmask 1025984
          %1461 = vst.msk [vmem:[#allocation5 + $0x10] sm:$0x3] %vm1460, %v1455
          %v1462 = vld [vmem:[%s1447 + $0x1] sm:$0xff]
          %v1463 = vld [vmem:[%s1447 + $0x9] sm:$0x3]
          %1466 = vrot.lane.b32.xlu0 %v1462, 126
          %v1467 = vpop.permute.xlu0 %1466
          %1468 = vrot.lane.b32.xlu0 %v1463, 126
          %v1469 = vpop.permute.xlu0 %1468
          %vm1472 = vcmask 1048560
          %1473 = vst.msk [vmem:[#allocation5] sm:$0xff] %vm1472, %v1467
          %vm1474 = vcmask 31744
          %1475 = vst.msk [vmem:[#allocation5 + $0x8] sm:$0xff] %vm1474, %v1467
          %vm1476 = vcmask 1042416
          %1477 = vst.msk [vmem:[#allocation5 + $0x10] sm:$0x3] %vm1476, %v1469
          %vm1478 = vcmask 25600
          %1479 = vst.msk [vmem:[#allocation5 + $0x18] sm:$0x3] %vm1478, %v1469
          %v1480 = vld [vmem:[%s1447 + $0x2] sm:$0xff]
          %v1481 = vld [vmem:[%s1447 + $0xa] sm:$0x3]
          %1484 = vrot.lane.b32.xlu0 %v1480, 4
          %v1485 = vpop.permute.xlu0 %1484
          %1486 = vrot.lane.b32.xlu0 %v1481, 4
          %v1487 = vpop.permute.xlu0 %1486
          %vm1490 = vcmask 80928
          %1491 = vst.msk [vmem:[#allocation5 + $0x8] sm:$0xff] %vm1490, %v1485
          %vm1492 = vcmask 74784
          %1493 = vst.msk [vmem:[#allocation5 + $0x18] sm:$0x3] %vm1492, %v1487
          %v1494 = vld [vmem:[%s1447 + $0x3] sm:$0xff]
          %v1495 = vld [vmem:[%s1447 + $0xb] sm:$0x3]
          %1498 = vrot.lane.b32.xlu0 %v1494, 10
          %v1499 = vpop.permute.xlu0 %1498
          %1500 = vrot.lane.b32.xlu0 %v1495, 10
          %v1501 = vpop.permute.xlu0 %1500
          %vm1504 = vcmask 130128
          %1505 = vst.msk [vmem:[#allocation5 + $0x8] sm:$0xff] %vm1504, %v1499
          %vm1506 = vcmask 123984
          %1507 = vst.msk [vmem:[#allocation5 + $0x18] sm:$0x3] %vm1506, %v1501
          %v1508 = vld [vmem:[%s1447 + $0x4] sm:$0xff]
          %v1509 = vld [vmem:[%s1447 + $0xc] sm:$0x3]
          %1512 = vrot.lane.b32.xlu0 %v1508, 16
          %v1513 = vpop.permute.xlu0 %1512
          %1514 = vrot.lane.b32.xlu0 %v1509, 16
          %v1515 = vpop.permute.xlu0 %1514
          %vm1518 = vcmask 179328
          %1519 = vst.msk [vmem:[#allocation5 + $0x8] sm:$0xff] %vm1518, %v1513
          %vm1520 = vcmask 173184
          %1521 = vst.msk [vmem:[#allocation5 + $0x18] sm:$0x3] %vm1520, %v1515
          %v1522 = vld [vmem:[#allocation5] sm:$0xff]
          %v1523 = vld [vmem:[#allocation5 + $0x8] sm:$0xff]
          %v1524 = vld [vmem:[#allocation5 + $0x10] sm:$0x3]
          %v1525 = vld [vmem:[#allocation5 + $0x18] sm:$0x3]
          %v1526 = vld [vmem:[%s3] sm:$0xff]
          %v1527 = vld [vmem:[%s3 + $0x8] sm:$0xff]
          %v1528 = vld [vmem:[%s3 + $0x10] sm:$0xff]
          %v1529 = vld [vmem:[%s3 + $0x18] sm:$0xff]
          %v1530 = vld [vmem:[%s3 + $0x20] sm:$0xff]
          %v1531 = vld [vmem:[%s3 + $0x28] sm:$0xff]
          %v1532 = vld [vmem:[%s3 + $0x30] sm:$0xff]
          %v1533 = vld [vmem:[%s3 + $0x38] sm:$0xff]
          %v1534 = vld [vmem:[%s3 + $0x40] sm:$0xff]
          %v1535 = vld [vmem:[%s3 + $0x48] sm:$0xff]
          %v1536 = vld [vmem:[%s3 + $0x50] sm:$0xff]
          %v1537 = vld [vmem:[%s3 + $0x58] sm:$0xff]
          %v1538 = vld [vmem:[%s3 + $0x60] sm:$0xff]
          %v1539 = vld [vmem:[%s3 + $0x68] sm:$0xff]
          %v1540 = vld [vmem:[%s3 + $0x70] sm:$0xff]
          %v1541 = vld [vmem:[%s3 + $0x78] sm:$0xff]
          %v1542 = vld [vmem:[%s3 + $0x80] sm:$0xff]
          %v1543 = vld [vmem:[%s3 + $0x88] sm:$0xff]
          %v1544 = vld [vmem:[%s3 + $0x90] sm:$0x3f]
          %v1545 = vld [vmem:[%s4] sm:$0x1]
          %v1547 = vlaneseq
          %v1548 = vshrl.u32 %v1547, 7
          %v1549 = vsub.s32 0, %v1548
          %v1550 = vrot.slane %v1545, %v1549
          %vm1552 = vcmask 179200
          %v1554 = vsel %vm1552, %v1523, 0
          %v1557 = vsel %vm1552, %v1525, 0
          %vm1559 = vcmask 1045504
          %v1561 = vsel %vm1559, %v1544, 0
          %1563 = vmatprep.subr.mxu0 0.0
          %1564 = vmatpush1.msra.mxu0 %v1526
          %1565 = vmatprep.subr.mxu0 0.0
          %1566 = vmatpush1.msra.mxu0 %v1527
          %1567 = vmatprep.subr.mxu0 0.0
          %1568 = vmatpush1.msra.mxu0 %v1528
          %1569 = vmatprep.subr.mxu0 0.0
          %1570 = vmatpush1.msra.mxu0 %v1529
          %1571 = vmatprep.subr.mxu0 0.0
          %1572 = vmatpush1.msra.mxu0 %v1530
          %1573 = vmatprep.subr.mxu0 0.0
          %1574 = vmatpush1.msra.mxu0 %v1531
          %1575 = vmatprep.subr.mxu0 0.0
          %1576 = vmatpush1.msra.mxu0 %v1532
          %1577 = vmatprep.subr.mxu0 0.0
          %1578 = vmatpush1.msra.mxu0 %v1533
          %1579 = vmatprep.subr.mxu0 0.0
          %1580 = vmatpush1.msra.mxu0 %v1534
          %1581 = vmatprep.subr.mxu0 0.0
          %1582 = vmatpush1.msra.mxu0 %v1535
          %1583 = vmatprep.subr.mxu0 0.0
          %1584 = vmatpush1.msra.mxu0 %v1536
          %1585 = vmatprep.subr.mxu0 0.0
          %1586 = vmatpush1.msra.mxu0 %v1537
          %1587 = vmatprep.subr.mxu0 0.0
          %1588 = vmatpush1.msra.mxu0 %v1538
          %1589 = vmatprep.subr.mxu0 0.0
          %1590 = vmatpush1.msra.mxu0 %v1539
          %1591 = vmatprep.subr.mxu0 0.0
          %1592 = vmatpush1.msra.mxu0 %v1540
          %1593 = vmatprep.subr.mxu0 0.0
          %1594 = vmatpush1.msra.mxu0 %v1541
          %1595 = vmatprep.subr.mxu0 0.0
          %1596 = vmatpush1.msra.mxu0 %v1542
          %1597 = vmatprep.subr.mxu0 0.0
          %1598 = vmatpush1.msra.mxu0 %v1543
          %1599 = vmatprep.subr.mxu0 0.0
          %1600 = vmatpush1.msra.mxu0 %v1561
          %1601 = vmatprep.subr.mxu0 0.0
          %1602 = vmatpush1.msra.mxu0 0.0
          %1603 = vmatprep.subr.mxu0 0.0
          %1604 = vmatpush1.msra.mxu0 0.0
          %1605 = vmatprep.subr.mxu0 0.0
          %1606 = vmatpush1.msra.mxu0 0.0
          %1607 = vmatprep.subr.mxu0 0.0
          %1608 = vmatpush1.msra.mxu0 0.0
          %1609 = vmatprep.subr.mxu0 0.0
          %1610 = vmatpush1.msra.mxu0 0.0
          %1611 = vmatprep.subr.mxu0 0.0
          %1612 = vmatpush1.msra.mxu0 0.0
          %1613 = vmatprep.subr.mxu0 0.0
          %1614 = vmatpush1.msra.mxu0 0.0
          %1615 = vmatprep.subr.mxu0 0.0
          %1616 = vmatpush1.msra.mxu0 0.0
          %1617 = vmatprep.subr.mxu0 0.0
          %1618 = vmatpush1.msra.mxu0 0.0
          %1619 = vmatprep.subr.mxu0 0.0
          %1620 = vmatpush1.msra.mxu0 0.0
          %1621 = vmatprep.subr.mxu0 0.0
          %1622 = vmatpush1.msra.mxu0 0.0
          %1623 = vmatprep.subr.mxu0 0.0
          %1624 = vmatpush1.msra.mxu0 0.0
          %1625 = vmatprep.subr.mxu0 0.0
          %1626 = vmatpush1.msra.mxu0 0.0
          %1627 = vmatprep.mubr.f32.mxu0 %v1554
          %1628 = vmatmul.mubr.f32.gmra.mrb[0].mxu0 %v1522
          %v1629 = vpop.f32.mrb[0].mxu0
          %v1630 = vadd.f32 %v1550, %v1629
          %v1631 = vpop.f32.mrb[0].mxu0
          %1632 = vmatprep.mubr.f32.mxu0 %v1557
          %1633 = vmatmul.mubr.f32.gmra.mrb[0].mxu0 %v1524
          %v1634 = vpop.f32.mrb[0].mxu0
          %v1635 = vadd.f32 %v1550, %v1634
          %v1636 = vpop.f32.mrb[0].mxu0
          %1637 = vdwg.mxu0
          %v1638 = vmax.f32 %v1630, 0.0
          %v1639 = vmax.f32 %v1635, 0.0
          %s1640 = scalar_lea.vmem [#allocation6], %s1162
          %vm1641 = vcmask 130048
          %1642 = vst.msk [vmem:[%s1640] sm:$0xff] %vm1641, %v1638
          %vm1643 = vcmask 123904
          %1644 = vst.msk [vmem:[%s1640 + $0x8] sm:$0x3] %vm1643, %v1639
        $region75: #{classifier_forward.1} parent=55 // loop_footer
          %s1161 = sadd.s32 1, %s1157
        $region76: #{classifier_forward.1} parent=55 // loop_footer_branch
          %1156 = sbr.rel target = $region72
        $region77: #{classifier_forward.1} parent=55 // loop_exit
          _
        loop: start=0, step=1, limit=5
        $region78: #{classifier_forward.1} parent=55 // loop_pre_header
          _
        $region79: #{classifier_forward.1} parent=55 // loop_header
          %s1646 = sphi 0, %s1650
          %p1647 = scmp.ge.s32.totalorder %s1646, 5
        $region80: #{classifier_forward.1} parent=55 // loop_header_branch
          %1649 = sbr.rel (%p1647) target = $region84
        $region81: #{classifier_forward.1} parent=55 // loop_body
          %s1651 = smul.u32 %s1646, 2
          %s1652 = smul.u32 %s1651, 16
          %s1653 = scalar_lea.vmem [#allocation6], %s1652
          %v1654 = vld [vmem:[%s1653] ss:$2 sm:$0x1f]
          %s1655 = scalar_lea.vmem %s1653, 1 [#allocation6]
          %v1656 = vld [vmem:[%s1655] ss:$2 sm:$0x1f]
          %v1657 = vmax.f32 %v1654, %v1656
          %s1658 = sadd.s32 %s1651, 1
          %s1659 = smul.u32 %s1658, 16
          %s1660 = scalar_lea.vmem [#allocation6], %s1659
          %v1661 = vld [vmem:[%s1660] ss:$2 sm:$0x1f]
          %s1662 = scalar_lea.vmem %s1660, 1 [#allocation6]
          %v1663 = vld [vmem:[%s1662] ss:$2 sm:$0x1f]
          %v1664 = vmax.f32 %v1661, %v1663
          %v1665 = vmax.f32 %v1657, %v1664
          %s1666 = smul.u32 %s1646, 8
          %s1667 = scalar_lea.vmem [#allocation7], %s1666
          %vm1668 = vcmask 126976
          %1669 = vst.msk [vmem:[%s1667] sm:$0x1f] %vm1668, %v1665
        $region82: #{classifier_forward.1} parent=55 // loop_footer
          %s1650 = sadd.s32 1, %s1646
        $region83: #{classifier_forward.1} parent=55 // loop_footer_branch
          %1645 = sbr.rel target = $region79
        $region84: #{classifier_forward.1} parent=55 // loop_exit
          _
        %v1670 = vld [vmem:[#allocation7] sm:$0x1]
        %v1671 = vlaneseq
        %vm1672 = vcmp.ge.s32.totalorder %v1671, 0
        %vm1673 = vcmp.lt.s32.totalorder %v1671, 16
        %vm1674 = vmand %vm1672, %vm1673
        %1675 = vst.msk [vmem:[#allocation8] sm:$0x1] %vm1674, %v1670
        %v1676 = vld [vmem:[#allocation7 + $0x1] sm:$0x1]
        %v1679 = vunpack.c.l.s4 1966171168
        %v1680 = vunpack.c.0.s8 %v1679
        %v1681 = vlaneseq
        %v1682 = vshrl.u32 %v1681, 7
        %v1683 = vsub.s32 %v1680, %v1682
        %v1684 = vrot.slane %v1676, %v1683
        %v1686 = vunpack.c.l.s4 1966171168
        %v1687 = vunpack.c.0.s8 %v1686
        %v1688 = vlaneseq
        %v1689 = vshrl.u32 %v1688, 7
        %v1690 = vsub.s32 %v1687, %v1689
        %v1691 = vrot.slane %v1684, %v1690
        %1692 = vrot.lane.b32.xlu0 %v1691, 16
        %v1693 = vpop.permute.xlu0 %1692
        %vm1695 = vcmp.ge.s32.totalorder %v1671, 16
        %vm1696 = vcmp.lt.s32.totalorder %v1671, 32
        %vm1697 = vmand %vm1695, %vm1696
        %1698 = vst.msk [vmem:[#allocation8] sm:$0x1] %vm1697, %v1693
        %v1699 = vld [vmem:[#allocation7 + $0x2] sm:$0x1]
        %v1702 = vunpack.c.l.s4 1966171168
        %v1703 = vunpack.c.0.s8 %v1702
        %v1704 = vlaneseq
        %v1705 = vshrl.u32 %v1704, 7
        %v1706 = vsub.s32 %v1703, %v1705
        %v1707 = vrot.slane %v1699, %v1706
        %v1709 = vunpack.c.l.s4 1966171168
        %v1710 = vunpack.c.0.s8 %v1709
        %v1711 = vlaneseq
        %v1712 = vshrl.u32 %v1711, 7
        %v1713 = vsub.s32 %v1710, %v1712
        %v1714 = vrot.slane %v1707, %v1713
        %1715 = vrot.lane.b32.xlu0 %v1714, 32
        %v1716 = vpop.permute.xlu0 %1715
        %vm1718 = vcmp.ge.s32.totalorder %v1671, 32
        %vm1719 = vcmp.lt.s32.totalorder %v1671, 48
        %vm1720 = vmand %vm1718, %vm1719
        %1721 = vst.msk [vmem:[#allocation8] sm:$0x1] %vm1720, %v1716
        %v1722 = vld [vmem:[#allocation7 + $0x3] sm:$0x1]
        %v1725 = vunpack.c.l.s4 1966171168
        %v1726 = vunpack.c.0.s8 %v1725
        %v1727 = vlaneseq
        %v1728 = vshrl.u32 %v1727, 7
        %v1729 = vsub.s32 %v1726, %v1728
        %v1730 = vrot.slane %v1722, %v1729
        %v1732 = vunpack.c.l.s4 1966171168
        %v1733 = vunpack.c.0.s8 %v1732
        %v1734 = vlaneseq
        %v1735 = vshrl.u32 %v1734, 7
        %v1736 = vsub.s32 %v1733, %v1735
        %v1737 = vrot.slane %v1730, %v1736
        %1738 = vrot.lane.b32.xlu0 %v1737, 48
        %v1739 = vpop.permute.xlu0 %1738
        %vm1741 = vcmp.ge.s32.totalorder %v1671, 48
        %vm1742 = vcmp.lt.s32.totalorder %v1671, 64
        %vm1743 = vmand %vm1741, %vm1742
        %1744 = vst.msk [vmem:[#allocation8] sm:$0x1] %vm1743, %v1739
        %v1745 = vld [vmem:[#allocation7 + $0x4] sm:$0x1]
        %v1748 = vunpack.c.l.s4 1966171168
        %v1749 = vunpack.c.0.s8 %v1748
        %v1750 = vlaneseq
        %v1751 = vshrl.u32 %v1750, 7
        %v1752 = vsub.s32 %v1749, %v1751
        %v1753 = vrot.slane %v1745, %v1752
        %v1755 = vunpack.c.l.s4 1966171168
        %v1756 = vunpack.c.0.s8 %v1755
        %v1757 = vlaneseq
        %v1758 = vshrl.u32 %v1757, 7
        %v1759 = vsub.s32 %v1756, %v1758
        %v1760 = vrot.slane %v1753, %v1759
        %1761 = vrot.lane.b32.xlu0 %v1760, 64
        %v1762 = vpop.permute.xlu0 %1761
        %vm1764 = vcmp.ge.s32.totalorder %v1671, 64
        %vm1765 = vcmp.lt.s32.totalorder %v1671, 80
        %vm1766 = vmand %vm1764, %vm1765
        %1767 = vst.msk [vmem:[#allocation8] sm:$0x1] %vm1766, %v1762
        %s1768 = scalar_lea.vmem [#allocation7], 8
        %v1769 = vld [vmem:[%s1768] sm:$0x1]
        %v1772 = vunpack.c.l.s4 1966171168
        %v1773 = vunpack.c.0.s8 %v1772
        %v1774 = vlaneseq
        %v1775 = vshrl.u32 %v1774, 7
        %v1776 = vsub.s32 %v1773, %v1775
        %v1777 = vrot.slane %v1769, %v1776
        %v1779 = vunpack.c.l.s4 1966171168
        %v1780 = vunpack.c.0.s8 %v1779
        %v1781 = vlaneseq
        %v1782 = vshrl.u32 %v1781, 7
        %v1783 = vsub.s32 %v1780, %v1782
        %v1784 = vrot.slane %v1777, %v1783
        %1785 = vrot.lane.b32.xlu0 %v1784, 80
        %v1786 = vpop.permute.xlu0 %1785
        %vm1788 = vcmp.ge.s32.totalorder %v1671, 80
        %vm1789 = vcmp.lt.s32.totalorder %v1671, 96
        %vm1790 = vmand %vm1788, %vm1789
        %1791 = vst.msk [vmem:[#allocation8] sm:$0x1] %vm1790, %v1786
        %v1792 = vld [vmem:[%s1768 + $0x1] sm:$0x1]
        %v1795 = vunpack.c.l.s4 1966171168
        %v1796 = vunpack.c.0.s8 %v1795
        %v1797 = vlaneseq
        %v1798 = vshrl.u32 %v1797, 7
        %v1799 = vsub.s32 %v1796, %v1798
        %v1800 = vrot.slane %v1792, %v1799
        %v1802 = vunpack.c.l.s4 1966171168
        %v1803 = vunpack.c.0.s8 %v1802
        %v1804 = vlaneseq
        %v1805 = vshrl.u32 %v1804, 7
        %v1806 = vsub.s32 %v1803, %v1805
        %v1807 = vrot.slane %v1800, %v1806
        %1808 = vrot.lane.b32.xlu0 %v1807, 96
        %v1809 = vpop.permute.xlu0 %1808
        %vm1811 = vcmp.ge.s32.totalorder %v1671, 96
        %vm1812 = vcmp.lt.s32.totalorder %v1671, 112
        %vm1813 = vmand %vm1811, %vm1812
        %1814 = vst.msk [vmem:[#allocation8] sm:$0x1] %vm1813, %v1809
        %v1815 = vld [vmem:[%s1768 + $0x2] sm:$0x1]
        %v1818 = vunpack.c.l.s4 1966171168
        %v1819 = vunpack.c.0.s8 %v1818
        %v1820 = vlaneseq
        %v1821 = vshrl.u32 %v1820, 7
        %v1822 = vsub.s32 %v1819, %v1821
        %v1823 = vrot.slane %v1815, %v1822
        %v1825 = vunpack.c.l.s4 1966171168
        %v1826 = vunpack.c.0.s8 %v1825
        %v1827 = vlaneseq
        %v1828 = vshrl.u32 %v1827, 7
        %v1829 = vsub.s32 %v1826, %v1828
        %v1830 = vrot.slane %v1823, %v1829
        %1831 = vrot.lane.b32.xlu0 %v1830, 112
        %v1832 = vpop.permute.xlu0 %1831
        %vm1834 = vcmp.ge.s32.totalorder %v1671, 112
        %vm1835 = vcmp.lt.s32.totalorder %v1671, 128
        %vm1836 = vmand %vm1834, %vm1835
        %1837 = vst.msk [vmem:[#allocation8] sm:$0x1] %vm1836, %v1832
        %v1838 = vld [vmem:[%s1768 + $0x3] sm:$0x1]
        %1839 = vst.msk [vmem:[#allocation8 + $0x1] sm:$0x1] %vm1674, %v1838
        %v1840 = vld [vmem:[%s1768 + $0x4] sm:$0x1]
        %v1843 = vunpack.c.l.s4 1966171168
        %v1844 = vunpack.c.0.s8 %v1843
        %v1845 = vlaneseq
        %v1846 = vshrl.u32 %v1845, 7
        %v1847 = vsub.s32 %v1844, %v1846
        %v1848 = vrot.slane %v1840, %v1847
        %v1850 = vunpack.c.l.s4 1966171168
        %v1851 = vunpack.c.0.s8 %v1850
        %v1852 = vlaneseq
        %v1853 = vshrl.u32 %v1852, 7
        %v1854 = vsub.s32 %v1851, %v1853
        %v1855 = vrot.slane %v1848, %v1854
        %1856 = vrot.lane.b32.xlu0 %v1855, 16
        %v1857 = vpop.permute.xlu0 %1856
        %1859 = vst.msk [vmem:[#allocation8 + $0x1] sm:$0x1] %vm1697, %v1857
        %s1860 = scalar_lea.vmem [#allocation7], 16
        %v1861 = vld [vmem:[%s1860] sm:$0x1]
        %v1864 = vunpack.c.l.s4 1966171168
        %v1865 = vunpack.c.0.s8 %v1864
        %v1866 = vlaneseq
        %v1867 = vshrl.u32 %v1866, 7
        %v1868 = vsub.s32 %v1865, %v1867
        %v1869 = vrot.slane %v1861, %v1868
        %v1871 = vunpack.c.l.s4 1966171168
        %v1872 = vunpack.c.0.s8 %v1871
        %v1873 = vlaneseq
        %v1874 = vshrl.u32 %v1873, 7
        %v1875 = vsub.s32 %v1872, %v1874
        %v1876 = vrot.slane %v1869, %v1875
        %1877 = vrot.lane.b32.xlu0 %v1876, 32
        %v1878 = vpop.permute.xlu0 %1877
        %1880 = vst.msk [vmem:[#allocation8 + $0x1] sm:$0x1] %vm1720, %v1878
        %v1881 = vld [vmem:[%s1860 + $0x1] sm:$0x1]
        %v1884 = vunpack.c.l.s4 1966171168
        %v1885 = vunpack.c.0.s8 %v1884
        %v1886 = vlaneseq
        %v1887 = vshrl.u32 %v1886, 7
        %v1888 = vsub.s32 %v1885, %v1887
        %v1889 = vrot.slane %v1881, %v1888
        %v1891 = vunpack.c.l.s4 1966171168
        %v1892 = vunpack.c.0.s8 %v1891
        %v1893 = vlaneseq
        %v1894 = vshrl.u32 %v1893, 7
        %v1895 = vsub.s32 %v1892, %v1894
        %v1896 = vrot.slane %v1889, %v1895
        %1897 = vrot.lane.b32.xlu0 %v1896, 48
        %v1898 = vpop.permute.xlu0 %1897
        %1900 = vst.msk [vmem:[#allocation8 + $0x1] sm:$0x1] %vm1743, %v1898
        %v1901 = vld [vmem:[%s1860 + $0x2] sm:$0x1]
        %v1904 = vunpack.c.l.s4 1966171168
        %v1905 = vunpack.c.0.s8 %v1904
        %v1906 = vlaneseq
        %v1907 = vshrl.u32 %v1906, 7
        %v1908 = vsub.s32 %v1905, %v1907
        %v1909 = vrot.slane %v1901, %v1908
        %v1911 = vunpack.c.l.s4 1966171168
        %v1912 = vunpack.c.0.s8 %v1911
        %v1913 = vlaneseq
        %v1914 = vshrl.u32 %v1913, 7
        %v1915 = vsub.s32 %v1912, %v1914
        %v1916 = vrot.slane %v1909, %v1915
        %1917 = vrot.lane.b32.xlu0 %v1916, 64
        %v1918 = vpop.permute.xlu0 %1917
        %1920 = vst.msk [vmem:[#allocation8 + $0x1] sm:$0x1] %vm1766, %v1918
        %v1921 = vld [vmem:[%s1860 + $0x3] sm:$0x1]
        %v1924 = vunpack.c.l.s4 1966171168
        %v1925 = vunpack.c.0.s8 %v1924
        %v1926 = vlaneseq
        %v1927 = vshrl.u32 %v1926, 7
        %v1928 = vsub.s32 %v1925, %v1927
        %v1929 = vrot.slane %v1921, %v1928
        %v1931 = vunpack.c.l.s4 1966171168
        %v1932 = vunpack.c.0.s8 %v1931
        %v1933 = vlaneseq
        %v1934 = vshrl.u32 %v1933, 7
        %v1935 = vsub.s32 %v1932, %v1934
        %v1936 = vrot.slane %v1929, %v1935
        %1937 = vrot.lane.b32.xlu0 %v1936, 80
        %v1938 = vpop.permute.xlu0 %1937
        %1940 = vst.msk [vmem:[#allocation8 + $0x1] sm:$0x1] %vm1790, %v1938
        %v1941 = vld [vmem:[%s1860 + $0x4] sm:$0x1]
        %v1944 = vunpack.c.l.s4 1966171168
        %v1945 = vunpack.c.0.s8 %v1944
        %v1946 = vlaneseq
        %v1947 = vshrl.u32 %v1946, 7
        %v1948 = vsub.s32 %v1945, %v1947
        %v1949 = vrot.slane %v1941, %v1948
        %v1951 = vunpack.c.l.s4 1966171168
        %v1952 = vunpack.c.0.s8 %v1951
        %v1953 = vlaneseq
        %v1954 = vshrl.u32 %v1953, 7
        %v1955 = vsub.s32 %v1952, %v1954
        %v1956 = vrot.slane %v1949, %v1955
        %1957 = vrot.lane.b32.xlu0 %v1956, 96
        %v1958 = vpop.permute.xlu0 %1957
        %1960 = vst.msk [vmem:[#allocation8 + $0x1] sm:$0x1] %vm1813, %v1958
        %s1961 = scalar_lea.vmem [#allocation7], 24
        %v1962 = vld [vmem:[%s1961] sm:$0x1]
        %v1965 = vunpack.c.l.s4 1966171168
        %v1966 = vunpack.c.0.s8 %v1965
        %v1967 = vlaneseq
        %v1968 = vshrl.u32 %v1967, 7
        %v1969 = vsub.s32 %v1966, %v1968
        %v1970 = vrot.slane %v1962, %v1969
        %v1972 = vunpack.c.l.s4 1966171168
        %v1973 = vunpack.c.0.s8 %v1972
        %v1974 = vlaneseq
        %v1975 = vshrl.u32 %v1974, 7
        %v1976 = vsub.s32 %v1973, %v1975
        %v1977 = vrot.slane %v1970, %v1976
        %1978 = vrot.lane.b32.xlu0 %v1977, 112
        %v1979 = vpop.permute.xlu0 %1978
        %1981 = vst.msk [vmem:[#allocation8 + $0x1] sm:$0x1] %vm1836, %v1979
        %v1982 = vld [vmem:[%s1961 + $0x1] sm:$0x1]
        %1983 = vst.msk [vmem:[#allocation8 + $0x2] sm:$0x1] %vm1674, %v1982
        %v1984 = vld [vmem:[%s1961 + $0x2] sm:$0x1]
        %v1987 = vunpack.c.l.s4 1966171168
        %v1988 = vunpack.c.0.s8 %v1987
        %v1989 = vlaneseq
        %v1990 = vshrl.u32 %v1989, 7
        %v1991 = vsub.s32 %v1988, %v1990
        %v1992 = vrot.slane %v1984, %v1991
        %v1994 = vunpack.c.l.s4 1966171168
        %v1995 = vunpack.c.0.s8 %v1994
        %v1996 = vlaneseq
        %v1997 = vshrl.u32 %v1996, 7
        %v1998 = vsub.s32 %v1995, %v1997
        %v1999 = vrot.slane %v1992, %v1998
        %2000 = vrot.lane.b32.xlu0 %v1999, 16
        %v2001 = vpop.permute.xlu0 %2000
        %2003 = vst.msk [vmem:[#allocation8 + $0x2] sm:$0x1] %vm1697, %v2001
        %v2004 = vld [vmem:[%s1961 + $0x3] sm:$0x1]
        %v2007 = vunpack.c.l.s4 1966171168
        %v2008 = vunpack.c.0.s8 %v2007
        %v2009 = vlaneseq
        %v2010 = vshrl.u32 %v2009, 7
        %v2011 = vsub.s32 %v2008, %v2010
        %v2012 = vrot.slane %v2004, %v2011
        %v2014 = vunpack.c.l.s4 1966171168
        %v2015 = vunpack.c.0.s8 %v2014
        %v2016 = vlaneseq
        %v2017 = vshrl.u32 %v2016, 7
        %v2018 = vsub.s32 %v2015, %v2017
        %v2019 = vrot.slane %v2012, %v2018
        %2020 = vrot.lane.b32.xlu0 %v2019, 32
        %v2021 = vpop.permute.xlu0 %2020
        %2023 = vst.msk [vmem:[#allocation8 + $0x2] sm:$0x1] %vm1720, %v2021
        %v2024 = vld [vmem:[%s1961 + $0x4] sm:$0x1]
        %v2027 = vunpack.c.l.s4 1966171168
        %v2028 = vunpack.c.0.s8 %v2027
        %v2029 = vlaneseq
        %v2030 = vshrl.u32 %v2029, 7
        %v2031 = vsub.s32 %v2028, %v2030
        %v2032 = vrot.slane %v2024, %v2031
        %v2034 = vunpack.c.l.s4 1966171168
        %v2035 = vunpack.c.0.s8 %v2034
        %v2036 = vlaneseq
        %v2037 = vshrl.u32 %v2036, 7
        %v2038 = vsub.s32 %v2035, %v2037
        %v2039 = vrot.slane %v2032, %v2038
        %2040 = vrot.lane.b32.xlu0 %v2039, 48
        %v2041 = vpop.permute.xlu0 %2040
        %2043 = vst.msk [vmem:[#allocation8 + $0x2] sm:$0x1] %vm1743, %v2041
        %s2044 = scalar_lea.vmem [#allocation7], 32
        %v2045 = vld [vmem:[%s2044] sm:$0x1]
        %v2048 = vunpack.c.l.s4 1966171168
        %v2049 = vunpack.c.0.s8 %v2048
        %v2050 = vlaneseq
        %v2051 = vshrl.u32 %v2050, 7
        %v2052 = vsub.s32 %v2049, %v2051
        %v2053 = vrot.slane %v2045, %v2052
        %v2055 = vunpack.c.l.s4 1966171168
        %v2056 = vunpack.c.0.s8 %v2055
        %v2057 = vlaneseq
        %v2058 = vshrl.u32 %v2057, 7
        %v2059 = vsub.s32 %v2056, %v2058
        %v2060 = vrot.slane %v2053, %v2059
        %2061 = vrot.lane.b32.xlu0 %v2060, 64
        %v2062 = vpop.permute.xlu0 %2061
        %2064 = vst.msk [vmem:[#allocation8 + $0x2] sm:$0x1] %vm1766, %v2062
        %v2065 = vld [vmem:[%s2044 + $0x1] sm:$0x1]
        %v2068 = vunpack.c.l.s4 1966171168
        %v2069 = vunpack.c.0.s8 %v2068
        %v2070 = vlaneseq
        %v2071 = vshrl.u32 %v2070, 7
        %v2072 = vsub.s32 %v2069, %v2071
        %v2073 = vrot.slane %v2065, %v2072
        %v2075 = vunpack.c.l.s4 1966171168
        %v2076 = vunpack.c.0.s8 %v2075
        %v2077 = vlaneseq
        %v2078 = vshrl.u32 %v2077, 7
        %v2079 = vsub.s32 %v2076, %v2078
        %v2080 = vrot.slane %v2073, %v2079
        %2081 = vrot.lane.b32.xlu0 %v2080, 80
        %v2082 = vpop.permute.xlu0 %2081
        %2084 = vst.msk [vmem:[#allocation8 + $0x2] sm:$0x1] %vm1790, %v2082
        %v2085 = vld [vmem:[%s2044 + $0x2] sm:$0x1]
        %v2088 = vunpack.c.l.s4 1966171168
        %v2089 = vunpack.c.0.s8 %v2088
        %v2090 = vlaneseq
        %v2091 = vshrl.u32 %v2090, 7
        %v2092 = vsub.s32 %v2089, %v2091
        %v2093 = vrot.slane %v2085, %v2092
        %v2095 = vunpack.c.l.s4 1966171168
        %v2096 = vunpack.c.0.s8 %v2095
        %v2097 = vlaneseq
        %v2098 = vshrl.u32 %v2097, 7
        %v2099 = vsub.s32 %v2096, %v2098
        %v2100 = vrot.slane %v2093, %v2099
        %2101 = vrot.lane.b32.xlu0 %v2100, 96
        %v2102 = vpop.permute.xlu0 %2101
        %2104 = vst.msk [vmem:[#allocation8 + $0x2] sm:$0x1] %vm1813, %v2102
        %v2105 = vld [vmem:[%s2044 + $0x3] sm:$0x1]
        %v2108 = vunpack.c.l.s4 1966171168
        %v2109 = vunpack.c.0.s8 %v2108
        %v2110 = vlaneseq
        %v2111 = vshrl.u32 %v2110, 7
        %v2112 = vsub.s32 %v2109, %v2111
        %v2113 = vrot.slane %v2105, %v2112
        %v2115 = vunpack.c.l.s4 1966171168
        %v2116 = vunpack.c.0.s8 %v2115
        %v2117 = vlaneseq
        %v2118 = vshrl.u32 %v2117, 7
        %v2119 = vsub.s32 %v2116, %v2118
        %v2120 = vrot.slane %v2113, %v2119
        %2121 = vrot.lane.b32.xlu0 %v2120, 112
        %v2122 = vpop.permute.xlu0 %2121
        %2124 = vst.msk [vmem:[#allocation8 + $0x2] sm:$0x1] %vm1836, %v2122
        %v2125 = vld [vmem:[%s2044 + $0x4] sm:$0x1]
        %2126 = vst.msk [vmem:[#allocation8 + $0x3] sm:$0x1] %vm1674, %v2125
        %v2127 = vld [vmem:[#allocation8] sm:$0xf]
        %v2128 = vld [vmem:[%s5] sm:$0xff]
        %v2129 = vld [vmem:[%s5 + $0x8] sm:$0xff]
        %v2130 = vld [vmem:[%s5 + $0x10] sm:$0xff]
        %v2131 = vld [vmem:[%s5 + $0x18] sm:$0xff]
        %v2132 = vld [vmem:[%s5 + $0x20] sm:$0xff]
        %v2133 = vld [vmem:[%s5 + $0x28] sm:$0xff]
        %v2134 = vld [vmem:[%s5 + $0x30] sm:$0xff]
        %v2135 = vld [vmem:[%s5 + $0x38] sm:$0xff]
        %v2136 = vld [vmem:[%s5 + $0x40] sm:$0xff]
        %v2137 = vld [vmem:[%s5 + $0x48] sm:$0xff]
        %v2138 = vld [vmem:[%s5 + $0x50] sm:$0xff]
        %v2139 = vld [vmem:[%s5 + $0x58] sm:$0xff]
        %v2140 = vld [vmem:[%s5 + $0x60] sm:$0xff]
        %v2141 = vld [vmem:[%s5 + $0x68] sm:$0xff]
        %v2142 = vld [vmem:[%s5 + $0x70] sm:$0xff]
        %v2143 = vld [vmem:[%s5 + $0x78] sm:$0xff]
        %v2144 = vld [vmem:[%s5 + $0x80] sm:$0xff]
        %v2145 = vld [vmem:[%s5 + $0x88] sm:$0xff]
        %v2146 = vld [vmem:[%s5 + $0x90] sm:$0xff]
        %v2147 = vld [vmem:[%s5 + $0x98] sm:$0xff]
        %v2148 = vld [vmem:[%s5 + $0xa0] sm:$0xff]
        %v2149 = vld [vmem:[%s5 + $0xa8] sm:$0xff]
        %v2150 = vld [vmem:[%s5 + $0xb0] sm:$0xff]
        %v2151 = vld [vmem:[%s5 + $0xb8] sm:$0xff]
        %v2152 = vld [vmem:[%s5 + $0xc0] sm:$0xff]
        %v2153 = vld [vmem:[%s5 + $0xc8] sm:$0xff]
        %v2154 = vld [vmem:[%s5 + $0xd0] sm:$0xff]
        %v2155 = vld [vmem:[%s5 + $0xd8] sm:$0xff]
        %v2156 = vld [vmem:[%s5 + $0xe0] sm:$0xff]
        %v2157 = vld [vmem:[%s5 + $0xe8] sm:$0xff]
        %v2158 = vld [vmem:[%s5 + $0xf0] sm:$0xff]
        %v2159 = vld [vmem:[%s5 + $0xf8] sm:$0xff]
        %v2160 = vld [vmem:[%s5 + $0x100] sm:$0xff]
        %v2161 = vld [vmem:[%s5 + $0x108] sm:$0xff]
        %v2162 = vld [vmem:[%s5 + $0x110] sm:$0xff]
        %v2163 = vld [vmem:[%s5 + $0x118] sm:$0xff]
        %v2164 = vld [vmem:[%s5 + $0x120] sm:$0xff]
        %v2165 = vld [vmem:[%s5 + $0x128] sm:$0xff]
        %v2166 = vld [vmem:[%s5 + $0x130] sm:$0xff]
        %v2167 = vld [vmem:[%s5 + $0x138] sm:$0xff]
        %v2168 = vld [vmem:[%s5 + $0x140] sm:$0xff]
        %v2169 = vld [vmem:[%s5 + $0x148] sm:$0xff]
        %v2170 = vld [vmem:[%s5 + $0x150] sm:$0xff]
        %v2171 = vld [vmem:[%s5 + $0x158] sm:$0xff]
        %v2172 = vld [vmem:[%s5 + $0x160] sm:$0xff]
        %v2173 = vld [vmem:[%s5 + $0x168] sm:$0xff]
        %v2174 = vld [vmem:[%s5 + $0x170] sm:$0xff]
        %v2175 = vld [vmem:[%s5 + $0x178] sm:$0xff]
        %v2176 = vld [vmem:[%s5 + $0x180] sm:$0xff]
        %v2177 = vld [vmem:[%s5 + $0x188] sm:$0xff]
        %v2178 = vld [vmem:[%s6] sm:$0x1]
        %v2180 = vlaneseq
        %v2181 = vshrl.u32 %v2180, 7
        %v2182 = vsub.s32 0, %v2181
        %v2183 = vrot.slane %v2127, %v2182
        %v2184 = vlaneseq
        %v2185 = vshrl.u32 %v2184, 7
        %v2186 = vsub.s32 1, %v2185
        %v2187 = vrot.slane %v2127, %v2186
        %v2188 = vlaneseq
        %v2189 = vshrl.u32 %v2188, 7
        %v2190 = vsub.s32 2, %v2189
        %v2191 = vrot.slane %v2127, %v2190
        %v2192 = vlaneseq
        %v2193 = vshrl.u32 %v2192, 7
        %v2194 = vsub.s32 3, %v2193
        %v2195 = vrot.slane %v2127, %v2194
        %vm2199 = vcmask 130048
        %v2200 = vsel %vm2199, %v2195, 0
        %2202 = vmatprep.subr.mxu0 0.0
        %2203 = vmatpush1.msra.mxu0 %v2128
        %2204 = vmatprep.subr.mxu0 0.0
        %2205 = vmatpush1.msra.mxu0 %v2129
        %2206 = vmatprep.subr.mxu0 0.0
        %2207 = vmatpush1.msra.mxu0 %v2130
        %2208 = vmatprep.subr.mxu0 0.0
        %2209 = vmatpush1.msra.mxu0 %v2131
        %2210 = vmatprep.subr.mxu0 0.0
        %2211 = vmatpush1.msra.mxu0 %v2132
        %2212 = vmatprep.subr.mxu0 0.0
        %2213 = vmatpush1.msra.mxu0 %v2133
        %2214 = vmatprep.subr.mxu0 0.0
        %2215 = vmatpush1.msra.mxu0 %v2134
        %2216 = vmatprep.subr.mxu0 0.0
        %2217 = vmatpush1.msra.mxu0 %v2135
        %2218 = vmatprep.subr.mxu0 0.0
        %2219 = vmatpush1.msra.mxu0 %v2136
        %2220 = vmatprep.subr.mxu0 0.0
        %2221 = vmatpush1.msra.mxu0 %v2137
        %2222 = vmatprep.subr.mxu0 0.0
        %2223 = vmatpush1.msra.mxu0 %v2138
        %2224 = vmatprep.subr.mxu0 0.0
        %2225 = vmatpush1.msra.mxu0 %v2139
        %2226 = vmatprep.subr.mxu0 0.0
        %2227 = vmatpush1.msra.mxu0 %v2140
        %2228 = vmatprep.subr.mxu0 0.0
        %2229 = vmatpush1.msra.mxu0 %v2141
        %2230 = vmatprep.subr.mxu0 0.0
        %2231 = vmatpush1.msra.mxu0 %v2142
        %2232 = vmatprep.subr.mxu0 0.0
        %2233 = vmatpush1.msra.mxu0 %v2143
        %2234 = vmatprep.subr.mxu0 0.0
        %2235 = vmatpush1.msra.mxu0 %v2144
        %2236 = vmatprep.subr.mxu0 0.0
        %2237 = vmatpush1.msra.mxu0 %v2145
        %2238 = vmatprep.subr.mxu0 0.0
        %2239 = vmatpush1.msra.mxu0 %v2146
        %2240 = vmatprep.subr.mxu0 0.0
        %2241 = vmatpush1.msra.mxu0 %v2147
        %2242 = vmatprep.subr.mxu0 0.0
        %2243 = vmatpush1.msra.mxu0 %v2148
        %2244 = vmatprep.subr.mxu0 0.0
        %2245 = vmatpush1.msra.mxu0 %v2149
        %2246 = vmatprep.subr.mxu0 0.0
        %2247 = vmatpush1.msra.mxu0 %v2150
        %2248 = vmatprep.subr.mxu0 0.0
        %2249 = vmatpush1.msra.mxu0 %v2151
        %2250 = vmatprep.subr.mxu0 0.0
        %2251 = vmatpush1.msra.mxu0 %v2152
        %2252 = vmatprep.subr.mxu0 0.0
        %2253 = vmatpush1.msra.mxu0 %v2153
        %2254 = vmatprep.subr.mxu0 0.0
        %2255 = vmatpush1.msra.mxu0 %v2154
        %2256 = vmatprep.subr.mxu0 0.0
        %2257 = vmatpush1.msra.mxu0 %v2155
        %2258 = vmatprep.subr.mxu0 0.0
        %2259 = vmatpush1.msra.mxu0 %v2156
        %2260 = vmatprep.subr.mxu0 0.0
        %2261 = vmatpush1.msra.mxu0 %v2157
        %2262 = vmatprep.subr.mxu0 0.0
        %2263 = vmatpush1.msra.mxu0 %v2158
        %2264 = vmatprep.subr.mxu0 0.0
        %2265 = vmatpush1.msra.mxu0 %v2159
        %2266 = vmatprep.mubr.f32.mxu0 %v2187
        %2267 = vmatmul.mubr.f32.gmra.mrb[0].mxu0 %v2183
        %v2268 = vpop.f32.mrb[0].mxu0
        %v2269 = vadd.f32 %v2178, %v2268
        %v2270 = vpop.f32.mrb[0].mxu0
        %2271 = vdwg.mxu0
        %2272 = vmatprep.subr.mxu0 0.0
        %2273 = vmatpush1.msra.mxu0 %v2160
        %2274 = vmatprep.subr.mxu0 0.0
        %2275 = vmatpush1.msra.mxu0 %v2161
        %2276 = vmatprep.subr.mxu0 0.0
        %2277 = vmatpush1.msra.mxu0 %v2162
        %2278 = vmatprep.subr.mxu0 0.0
        %2279 = vmatpush1.msra.mxu0 %v2163
        %2280 = vmatprep.subr.mxu0 0.0
        %2281 = vmatpush1.msra.mxu0 %v2164
        %2282 = vmatprep.subr.mxu0 0.0
        %2283 = vmatpush1.msra.mxu0 %v2165
        %2284 = vmatprep.subr.mxu0 0.0
        %2285 = vmatpush1.msra.mxu0 %v2166
        %2286 = vmatprep.subr.mxu0 0.0
        %2287 = vmatpush1.msra.mxu0 %v2167
        %2288 = vmatprep.subr.mxu0 0.0
        %2289 = vmatpush1.msra.mxu0 %v2168
        %2290 = vmatprep.subr.mxu0 0.0
        %2291 = vmatpush1.msra.mxu0 %v2169
        %2292 = vmatprep.subr.mxu0 0.0
        %2293 = vmatpush1.msra.mxu0 %v2170
        %2294 = vmatprep.subr.mxu0 0.0
        %2295 = vmatpush1.msra.mxu0 %v2171
        %2296 = vmatprep.subr.mxu0 0.0
        %2297 = vmatpush1.msra.mxu0 %v2172
        %2298 = vmatprep.subr.mxu0 0.0
        %2299 = vmatpush1.msra.mxu0 %v2173
        %2300 = vmatprep.subr.mxu0 0.0
        %2301 = vmatpush1.msra.mxu0 %v2174
        %2302 = vmatprep.subr.mxu0 0.0
        %2303 = vmatpush1.msra.mxu0 %v2175
        %2304 = vmatprep.subr.mxu0 0.0
        %2305 = vmatpush1.msra.mxu0 %v2176
        %2306 = vmatprep.subr.mxu0 0.0
        %2307 = vmatpush1.msra.mxu0 %v2177
        %2308 = vmatprep.subr.mxu0 0.0
        %2309 = vmatpush1.msra.mxu0 0.0
        %2310 = vmatprep.subr.mxu0 0.0
        %2311 = vmatpush1.msra.mxu0 0.0
        %2312 = vmatprep.subr.mxu0 0.0
        %2313 = vmatpush1.msra.mxu0 0.0
        %2314 = vmatprep.subr.mxu0 0.0
        %2315 = vmatpush1.msra.mxu0 0.0
        %2316 = vmatprep.subr.mxu0 0.0
        %2317 = vmatpush1.msra.mxu0 0.0
        %2318 = vmatprep.subr.mxu0 0.0
        %2319 = vmatpush1.msra.mxu0 0.0
        %2320 = vmatprep.subr.mxu0 0.0
        %2321 = vmatpush1.msra.mxu0 0.0
        %2322 = vmatprep.subr.mxu0 0.0
        %2323 = vmatpush1.msra.mxu0 0.0
        %2324 = vmatprep.subr.mxu0 0.0
        %2325 = vmatpush1.msra.mxu0 0.0
        %2326 = vmatprep.subr.mxu0 0.0
        %2327 = vmatpush1.msra.mxu0 0.0
        %2328 = vmatprep.subr.mxu0 0.0
        %2329 = vmatpush1.msra.mxu0 0.0
        %2330 = vmatprep.subr.mxu0 0.0
        %2331 = vmatpush1.msra.mxu0 0.0
        %2332 = vmatprep.subr.mxu0 0.0
        %2333 = vmatpush1.msra.mxu0 0.0
        %2334 = vmatprep.subr.mxu0 0.0
        %2335 = vmatpush1.msra.mxu0 0.0
        %2336 = vmatprep.mubr.f32.mxu0 %v2200
        %2337 = vmatmul.mubr.f32.gmra.mrb[0].mxu0 %v2191
        %v2338 = vpop.f32.mrb[0].mxu0
        %v2339 = vadd.f32 %v2269, %v2338
        %v2340 = vpop.f32.mrb[0].mxu0
        %2341 = vdwg.mxu0
        %v2342 = vmax.f32 %v2339, 0.0
        %v2343 = vld [vmem:[%s7] sm:$0xff]
        %v2344 = vld [vmem:[%s7 + $0x8] sm:$0xff]
        %v2345 = vld [vmem:[%s7 + $0x10] sm:$0xff]
        %v2346 = vld [vmem:[%s7 + $0x18] sm:$0xff]
        %v2347 = vld [vmem:[%s7 + $0x20] sm:$0xff]
        %v2348 = vld [vmem:[%s7 + $0x28] sm:$0xff]
        %v2349 = vld [vmem:[%s7 + $0x30] sm:$0xff]
        %v2350 = vld [vmem:[%s7 + $0x38] sm:$0xff]
        %v2351 = vld [vmem:[%s7 + $0x40] sm:$0xff]
        %v2352 = vld [vmem:[%s7 + $0x48] sm:$0xff]
        %v2353 = vld [vmem:[%s7 + $0x50] sm:$0xff]
        %v2354 = vld [vmem:[%s7 + $0x58] sm:$0xff]
        %v2355 = vld [vmem:[%s7 + $0x60] sm:$0xff]
        %v2356 = vld [vmem:[%s7 + $0x68] sm:$0xff]
        %v2357 = vld [vmem:[%s7 + $0x70] sm:$0xff]
        %v2358 = vld [vmem:[%s7 + $0x78] sm:$0xff]
        %v2359 = vld [vmem:[%s8] sm:$0x1]
        %2360 = vmatprep.subr.mxu0 0.0
        %2361 = vmatpush1.msra.mxu0 %v2343
        %2362 = vmatprep.subr.mxu0 0.0
        %2363 = vmatpush1.msra.mxu0 %v2344
        %2364 = vmatprep.subr.mxu0 0.0
        %2365 = vmatpush1.msra.mxu0 %v2345
        %2366 = vmatprep.subr.mxu0 0.0
        %2367 = vmatpush1.msra.mxu0 %v2346
        %2368 = vmatprep.subr.mxu0 0.0
        %2369 = vmatpush1.msra.mxu0 %v2347
        %2370 = vmatprep.subr.mxu0 0.0
        %2371 = vmatpush1.msra.mxu0 %v2348
        %2372 = vmatprep.subr.mxu0 0.0
        %2373 = vmatpush1.msra.mxu0 %v2349
        %2374 = vmatprep.subr.mxu0 0.0
        %2375 = vmatpush1.msra.mxu0 %v2350
        %2376 = vmatprep.subr.mxu0 0.0
        %2377 = vmatpush1.msra.mxu0 %v2351
        %2378 = vmatprep.subr.mxu0 0.0
        %2379 = vmatpush1.msra.mxu0 %v2352
        %2380 = vmatprep.subr.mxu0 0.0
        %2381 = vmatpush1.msra.mxu0 %v2353
        %2382 = vmatprep.subr.mxu0 0.0
        %2383 = vmatpush1.msra.mxu0 %v2354
        %2384 = vmatprep.subr.mxu0 0.0
        %2385 = vmatpush1.msra.mxu0 %v2355
        %2386 = vmatprep.subr.mxu0 0.0
        %2387 = vmatpush1.msra.mxu0 %v2356
        %2388 = vmatprep.subr.mxu0 0.0
        %2389 = vmatpush1.msra.mxu0 %v2357
        %2390 = vmatprep.subr.mxu0 0.0
        %2391 = vmatpush1.msra.mxu0 %v2358
        %2392 = vmatprep.subr.mxu0 0.0
        %2393 = vmatpush1.msra.mxu0 0.0
        %2394 = vmatprep.subr.mxu0 0.0
        %2395 = vmatpush1.msra.mxu0 0.0
        %2396 = vmatprep.subr.mxu0 0.0
        %2397 = vmatpush1.msra.mxu0 0.0
        %2398 = vmatprep.subr.mxu0 0.0
        %2399 = vmatpush1.msra.mxu0 0.0
        %2400 = vmatprep.subr.mxu0 0.0
        %2401 = vmatpush1.msra.mxu0 0.0
        %2402 = vmatprep.subr.mxu0 0.0
        %2403 = vmatpush1.msra.mxu0 0.0
        %2404 = vmatprep.subr.mxu0 0.0
        %2405 = vmatpush1.msra.mxu0 0.0
        %2406 = vmatprep.subr.mxu0 0.0
        %2407 = vmatpush1.msra.mxu0 0.0
        %2408 = vmatprep.subr.mxu0 0.0
        %2409 = vmatpush1.msra.mxu0 0.0
        %2410 = vmatprep.subr.mxu0 0.0
        %2411 = vmatpush1.msra.mxu0 0.0
        %2412 = vmatprep.subr.mxu0 0.0
        %2413 = vmatpush1.msra.mxu0 0.0
        %2414 = vmatprep.subr.mxu0 0.0
        %2415 = vmatpush1.msra.mxu0 0.0
        %2416 = vmatprep.subr.mxu0 0.0
        %2417 = vmatpush1.msra.mxu0 0.0
        %2418 = vmatprep.subr.mxu0 0.0
        %2419 = vmatpush1.msra.mxu0 0.0
        %2420 = vmatprep.subr.mxu0 0.0
        %2421 = vmatpush1.msra.mxu0 0.0
        %2422 = vmatprep.subr.mxu0 0.0
        %2423 = vmatpush1.msra.mxu0 0.0
        %2424 = vmatprep.mubr.f32.mxu0 0.0
        %2425 = vmatmul.mubr.f32.gmra.mrb[0].mxu0 %v2342
        %v2426 = vpop.f32.mrb[0].mxu0
        %v2427 = vadd.f32 %v2359, %v2426
        %v2428 = vpop.f32.mrb[0].mxu0
        %2429 = vdwg.mxu0
        %v2430 = vmax.f32 %v2427, 0.0
        %2431 = vst [vmem:[%s324] sm:$0x1] %v2430
        %s2432 = sand.u32 %s225, 1
        %s2433 = scalar_lea.sflag [#allocation10], %s2432
        %s2434 = sand.u32 %s225, 1
        %s2435 = scalar_lea.vmem [#allocation9], %s2434
        // Predicated region
        $region85: #{classifier_forward.1} parent=55 // pred_check
          %p2436 = pneg %p235
        $region86: #{classifier_forward.1} parent=55 // pred_check_branch
          %2438 = sbr.rel (%p2436) target = $region88
        $region87: #{classifier_forward.1} parent=55 // pred_region
          %s2440 = ssub.s32 16, 16
          %2441 = vsyncadd %s2433, %s2440
          %s2442 = smul.addr %s23, 16
          %s2443 = scalar_lea.hbm %s9, %s2442
          %s2445 = sshll.u32 %s2435, 4
          %s2446 = int_to_ptr.vmem [resolvable:$true] %s2445
          %2448 = dma.vmem_to_hbm [thread:$0]  %s2446, 16, %s2443, %s2433
        $region88: #{classifier_forward.1} parent=55 // pred_fallthru
          _
      $region56: #{classifier_forward.1} parent=5 // pred_fallthru
        _
      %p2449 = scmp.le.s32.totalorder 2, %s18
      // Predicated region
      $region89: #{classifier_forward.1} parent=5 // pred_check
        %p2450 = pneg %p2449
      $region90: #{classifier_forward.1} parent=5 // pred_check_branch
        %2452 = sbr.rel (%p2450) target = $region92
      $region91: #{classifier_forward.1} parent=5 // pred_region
        %s2453 = ssub.s32 %s18, 2
        // Predicated region
        $region93: #{classifier_forward.1} parent=91 // pred_check
          %p2454 = pneg %p241
        $region94: #{classifier_forward.1} parent=91 // pred_check_branch
          %2456 = sbr.rel (%p2454) target = $region96
        $region95: #{classifier_forward.1} parent=91 // pred_region
          %s2457 = sand.u32 %s226, 1
          %s2458 = scalar_lea.sflag [#allocation10], %s2457
          %s2459 = sand.u32 %s226, 1
          %s2460 = scalar_lea.vmem [#allocation9], %s2459
          %2461 = dma.done %s2458, 16
        $region96: #{classifier_forward.1} parent=91 // pred_fallthru
          _
      $region92: #{classifier_forward.1} parent=5 // pred_fallthru
        _
    $region6: #{classifier_forward.1} parent=1 // loop_footer
      %s22 = sadd.s32 1, %s18
    $region7: #{classifier_forward.1} parent=1 // loop_footer_branch
      %17 = sbr.rel target = $region3
    $region8: #{classifier_forward.1} parent=1 // loop_exit
      _
    %2462 = vsyncpa [#allocation10], 1
    %s2463 = scalar_lea.sflag [#allocation10], 1
    %2464 = vsyncpa %s2463, 1

</llo_original>
